<compile_context>
chip_gen: v5e
topology: v5e:2x2
jax: 0.10.0
libtpu: 0.0.40
codegen_flags: <defaults>
</compile_context>

<pallas_src>
import functools

import jax
import jax.numpy as jnp
from jax.experimental import pallas as pl
from jax.experimental.pallas import tpu as pltpu


# Plain Python float (NOT a jnp scalar -> would be a captured f32[] constant).
NEG_MASK = -1e30


def _bahdanau_kernel(lens_ref,            # scalar-prefetch: (B,) int32 in SMEM
                     q_ref,               # (Bb*T, Hp)   flattened query block
                     e_ref,               # (Bb*Sp, Hp)  flattened encoder block
                     whT_ref,             # (Hp, Hp)     W_h^T
                     wsT_ref,             # (Hp, Hp)     W_s^T
                     v_ref,               # (1, Hp)      v
                     wcT_ref,             # (Hp, Hp)     linear_out ctx half ^T
                     wqT_ref,             # (Hp, Hp)     linear_out query half ^T
                     out_ref,             # (Bb*T, Hp)
                     attn_ref,            # (Bb*T, Sp)
                     scores_sc,           # VMEM (T, Sp) f32 scratch
                     ctx_sc,              # VMEM (Bb*T, Hp) f32 scratch
                     qw_sc,               # VMEM (Bb*T, Hp) f32 scratch
                     *, block_b, s_tiles, tanh_dtype, use_mxu_score_reduce):
    rows_q, H = q_ref.shape
    T = rows_q // block_b
    S = e_ref.shape[0] // block_b
    gb = pl.program_id(0)

    # Hoisted loads / broadcasts (constant across the per-batch loop; JAX does not
    # CSE broadcasts, so do these exactly once).
    whT = whT_ref[...]
    v_row = v_ref[0].astype(tanh_dtype)                              # (Hp,)
    v_col = v_ref[...].astype(tanh_dtype).T if use_mxu_score_reduce else None
    pos = jax.lax.broadcasted_iota(jnp.int32, (T, S), 1)

    # q-side projection for the whole batch block in one MXU matmul (Bb*T rows),
    # kept in VMEM scratch so per-batch slices are cheap ref reads.
    qw_sc[...] = jnp.dot(q_ref[...], wsT_ref[...],
                         preferred_element_type=jnp.float32)

    def per_batch(bi):
        row_q = bi * T
        row_e = bi * S
        if not isinstance(bi, int):          # dynamic loop index: alignment hints
            row_q = pl.multiple_of(row_q, T)
            row_e = pl.multiple_of(row_e, S)
        length = lens_ref[gb * block_b + bi]

        # Cast the small (T, H) projection once, BEFORE the broadcast add, so the
        # (T, sz, H) slab is built directly in tanh_dtype (bf16 on v6e/v7x).
        qW_b = qw_sc[pl.ds(row_q, T), :].astype(tanh_dtype)          # (T, H)

        # ---- scores, tiled over S so only a (T, sz, H) slab is ever live ----
        for off, sz in s_tiles:
            e_slab = e_ref[pl.ds(row_e + off, sz), :]                # (sz, H)
            eW_t = jnp.dot(e_slab, whT,
                           preferred_element_type=jnp.float32).astype(tanh_dtype)
            pre = qW_b[:, None, :] + eW_t[None, :, :]                # (T, sz, H)
            u = jnp.tanh(pre)                                        # EUP-bound
            if use_mxu_score_reduce:
                # v-contraction on the (otherwise idle) MXU.  The (T*sz, 1) column
                # needs a sublane->lane relayout to become a (T, sz) tile.
                sc = jnp.dot(u.reshape(T * sz, H), v_col,
                             preferred_element_type=jnp.float32)     # (T*sz, 1)
                scores_sc[:, off:off + sz] = sc.reshape(T, sz)
            else:
                # Default: VPU multiply + XLU lane-reduce.  While the EUP tanh is
                # the binding slot this overlaps underneath it; the MXU variant
                # above is gated behind a flag because its column->tile relayout
                # is not guaranteed to lower on all Mosaic toolchains.
                # TODO(synk): flip use_mxu_score_reduce default once the
                # (T*sz,1)->(T,sz) reshape is verified on the target toolchain.
                scores_sc[:, off:off + sz] = jnp.sum(
                    u * v_row, axis=-1).astype(jnp.float32)

        # ---- masked softmax over source positions (padding masked too) ----
        scores = jnp.where(pos < length, scores_sc[...], NEG_MASK)
        m = jnp.max(scores, axis=-1, keepdims=True)
        p = jnp.exp(scores - m)
        w = p * pl.reciprocal(jnp.sum(p, axis=-1, keepdims=True), approx=False)
        attn_ref[pl.ds(row_q, T), :] = w.astype(attn_ref.dtype)      # lane-dense vst

        # ---- context vectors (MXU); padded encoder rows carry zero weight ----
        e_b = e_ref[pl.ds(row_e, S), :]                              # (S, H)
        ctx_sc[pl.ds(row_q, T), :] = jnp.dot(
            w, e_b.astype(jnp.float32), preferred_element_type=jnp.float32)

    if block_b <= 4:
        for bi in range(block_b):            # tiny trip count: static unroll
            per_batch(bi)
    else:
        def body(bi, carry):                  # bounded live ranges for big blocks
            per_batch(bi)
            return carry
        jax.lax.fori_loop(0, block_b, body, 0)

    # ---- output projection, fused over all Bb*T rows:
    #      tanh([ctx ; q] @ W_out^T) == tanh(ctx @ WcT + q @ WqT) ----
    out2d = jnp.tanh(
        jnp.dot(ctx_sc[...], wcT_ref[...].astype(jnp.float32),
                preferred_element_type=jnp.float32)
        + jnp.dot(q_ref[...].astype(jnp.float32), wqT_ref[...].astype(jnp.float32),
                  preferred_element_type=jnp.float32))
    out_ref[...] = out2d.astype(out_ref.dtype)


def _pad_axis(x, axis, mult):
    size = x.shape[axis]
    pad = (-size) % mult
    if pad == 0:
        return x
    widths = [(0, 0)] * x.ndim
    widths[axis] = (0, pad)
    return jnp.pad(x, widths)


def _vmem_budgets():
    """Generation-aware budgets (v7x: 64 MiB VMEM; v5e/v6e: 128 MiB)."""
    try:
        cap = int(getattr(pltpu.get_tpu_info(), "vmem_capacity_bytes",
                          64 * 1024 * 1024))
    except Exception:
        cap = 64 * 1024 * 1024               # conservative (v7x-sized) fallback
    vmem_limit = max(16 * 1024 * 1024,
                     min((cap * 5) // 8, cap - 8 * 1024 * 1024))
    block_budget = cap // 16                 # 8 MiB on 128 MiB parts, 4 MiB on v7x
    slab_budget = cap // 64                  # 2 MiB on 128 MiB parts, 1 MiB on v7x
    return int(vmem_limit), int(block_budget), int(slab_budget)


def _pick_s_tiles(S, T, H, budget_bytes, tanh_itemsize):
    """Static S tiles; ~2 (T, s_tile, H) slabs (pre + tanh) are live at once."""
    live = 2
    max_tile = budget_bytes // max(1, live * tanh_itemsize * T * H)
    max_tile = int(max(8, min(S, max_tile)))
    if max_tile >= 128:
        max_tile -= max_tile % 128           # keep score tiles lane-aligned
    else:
        max_tile = max(8, max_tile - max_tile % 8)
    tiles = []
    off = 0
    while off < S:
        sz = min(max_tile, S - off)
        tiles.append((off, sz))
        off += sz
    return tuple(tiles)


def _pick_batch_block(B, T, S, H, itemsize, block_budget, sublane):
    """Batch elements per grid step: keep >=2 grid steps (both v7x TCs busy),
    fill ~256 MXU rows, respect the per-block VMEM budget, stay sublane-aligned."""
    def aligned(bb):
        return bb == B or ((bb * T) % sublane == 0 and (bb * S) % sublane == 0)

    def block_bytes(bb):                      # double-buffered q/out, enc, attn
        return 2 * itemsize * bb * (2 * T * H + S * H + T * S)

    divisors = [bb for bb in range(1, B + 1) if B % bb == 0 and aligned(bb)]
    if not divisors:
        return B
    multi = [bb for bb in divisors if bb < B] or divisors
    fits = [bb for bb in multi if block_bytes(bb) <= block_budget] or [min(multi)]
    target_rows = max(256, T)
    fill = [bb for bb in fits if bb * T <= target_rows]
    return max(fill) if fill else min(fits)


def bahdanau_attention(query, encoder_outputs, src_lengths, w_h, w_s, v, w_out,
                       *, tanh_dtype=jnp.float32, attn_dtype=jnp.float32,
                       use_mxu_score_reduce=False):
    """Forward pass of BahdanauAttention as one Pallas TPU kernel.

    tanh_dtype: jnp.bfloat16 gives ~2x EUP tanh throughput on v6e/v7x (bf16 EUP/VALU)
        and halves the score-slab footprint; keep float32 on v5e and for exactness.
    attn_dtype: dtype of the returned attention weights (bf16 halves the largest HBM
        writeback when S >> H).
    use_mxu_score_reduce: run the v-contraction on the MXU (perf-review suggestion);
        off by default because the column->tile relayout it needs is toolchain-
        dependent, and the VPU/XLU reduce overlaps under the EUP-bound tanh anyway.
    Note: rows with src_length == 0 yield uniform attention weights (the reference
        softmax over an all -inf row would give NaN).
    """
    B, T, H = query.shape
    S = encoder_outputs.shape[1]
    assert w_h.shape == (H, H) and w_s.shape == (H, H)
    assert v.shape == (1, H) and w_out.shape == (H, 2 * H)

    in_dtype = query.dtype
    encoder_outputs = encoder_outputs.astype(in_dtype)
    lengths = src_lengths.astype(jnp.int32)

    # Lane-dense padding: round S and H up to multiples of 128 so attn/out stores
    # are unmasked vst.  Zero padding is masked out of the softmax, and zero-padded
    # weights keep every matmul exact; results are sliced back below.
    H_pad = ((H + 127) // 128) * 128
    S_pad = ((S + 127) // 128) * 128
    query_p = _pad_axis(query, 2, 128)
    enc_p = _pad_axis(_pad_axis(encoder_outputs, 1, 128), 2, 128)

    def pad_w(w):                              # (H, H) weight -> (H_pad, H_pad)
        return _pad_axis(_pad_axis(w.astype(in_dtype), 0, 128), 1, 128)

    # One-time weight prep: pre-transpose and split linear_out into ctx/query halves
    # so the kernel never transposes or column-slices weights.
    whT = pad_w(w_h).T
    wsT = pad_w(w_s).T
    wcT = pad_w(w_out[:, :H]).T
    wqT = pad_w(w_out[:, H:]).T
    v_p = _pad_axis(v.astype(in_dtype), 1, 128)             # (1, H_pad)

    # Lane-dense, flattened (rows, H) layout for the fused MXU matmuls.
    q2 = query_p.reshape(B * T, H_pad)
    e2 = enc_p.reshape(B * S_pad, H_pad)

    vmem_limit, block_budget, slab_budget = _vmem_budgets()
    itemsize = jnp.dtype(in_dtype).itemsize
    sublane = {4: 8, 2: 16, 1: 32}.get(itemsize, 8)
    Bb = _pick_batch_block(B, T, S_pad, H_pad, itemsize, block_budget, sublane)
    s_tiles = _pick_s_tiles(S_pad, T, H_pad, slab_budget,
                            jnp.dtype(tanh_dtype).itemsize)

    kernel = functools.partial(_bahdanau_kernel, block_b=Bb, s_tiles=s_tiles,
                               tanh_dtype=tanh_dtype,
                               use_mxu_score_reduce=use_mxu_score_reduce)

    def weight_spec(shape, single_buffer):
        index_map = lambda i, lens: (0,) * len(shape)
        if single_buffer:
            # Constant blocks: no double buffering -> halves weight VMEM footprint.
            return pl.BlockSpec(shape, index_map, pipeline_mode=pl.Buffered(1))
        return pl.BlockSpec(shape, index_map)

    def build_and_run(single_buffer_weights):
        def batch_spec(rows, cols):
            return pl.BlockSpec((rows, cols), lambda i, lens: (i, 0))

        grid_spec = pltpu.PrefetchScalarGridSpec(
            num_scalar_prefetch=1,
            grid=(B // Bb,),
            in_specs=[
                batch_spec(Bb * T, H_pad),                           # query
                batch_spec(Bb * S_pad, H_pad),                       # encoder
                weight_spec((H_pad, H_pad), single_buffer_weights),  # W_h^T
                weight_spec((H_pad, H_pad), single_buffer_weights),  # W_s^T
                weight_spec((1, H_pad), single_buffer_weights),      # v
                weight_spec((H_pad, H_pad), single_buffer_weights),  # W_out ctx ^T
                weight_spec((H_pad, H_pad), single_buffer_weights),  # W_out qry ^T
            ],
            out_specs=[
                batch_spec(Bb * T, H_pad),                           # attn_out
                batch_spec(Bb * T, S_pad),                           # attn_weights
            ],
            scratch_shapes=[
                pltpu.VMEM((T, S_pad), jnp.float32),                 # per-b scores
                pltpu.VMEM((Bb * T, H_pad), jnp.float32),            # contexts
                pltpu.VMEM((Bb * T, H_pad), jnp.float32),            # q projections
            ],
        )
        return pl.pallas_call(
            kernel,
            grid_spec=grid_spec,
            out_shape=(
                jax.ShapeDtypeStruct((B * T, H_pad), in_dtype),
                jax.ShapeDtypeStruct((B * T, S_pad), attn_dtype),
            ),
            compiler_params=pltpu.CompilerParams(
                dimension_semantics=("parallel",),       # spans both TCs on v7x
                vmem_limit_bytes=vmem_limit),
        )(lengths, q2, e2, whT, wsT, v_p, wcT, wqT)

    try:
        out2, attn2 = build_and_run(True)
    except Exception as e:
        # Narrow fallback: only retry with default double buffering when the failure
        # is about the pl.Buffered pipeline mode; everything else surfaces as-is.
        msg = str(e).lower()
        if not any(k in msg for k in ("buffered", "pipeline", "buffer_count")):
            raise
        out2, attn2 = build_and_run(False)

    attn_out = out2.reshape(B, T, H_pad)[:, :, :H]
    attn_weights = attn2.reshape(B, T, S_pad)[:, :, :S]
    return attn_out, attn_weights


def bahdanau_reference(query, encoder_outputs, src_lengths, w_h, w_s, v, w_out):
    """Pure-JAX reference mirroring the PyTorch forward (high-precision matmuls)."""
    P = jax.lax.Precision.HIGHEST
    S = encoder_outputs.shape[1]
    eW = jnp.einsum("bsh,oh->bso", encoder_outputs, w_h, precision=P)
    qW = jnp.einsum("bth,oh->bto", query, w_s, precision=P)
    u = jnp.tanh(qW[:, :, None, :] + eW[:, None, :, :])
    scores = jnp.einsum("btsh,h->bts", u, v[0], precision=P)
    mask = jnp.arange(S)[None, :] < src_lengths[:, None]
    scores = jnp.where(mask[:, None, :], scores, -jnp.inf)
    w = jax.nn.softmax(scores, axis=-1)
    ctx = jnp.einsum("bts,bsh->bth", w, encoder_outputs, precision=P)
    combined = jnp.concatenate([ctx, query], axis=-1)
    out = jnp.tanh(jnp.einsum("btk,ok->bto", combined, w_out, precision=P))
    return out, w


if __name__ == "__main__":
    B, T, S, H = 4, 8, 16, 32
    key = jax.random.PRNGKey(0)
    k_q, k_e, k_wh, k_ws, k_v, k_wo = jax.random.split(key, 6)

    query = jax.random.normal(k_q, (B, T, H), dtype=jnp.float32)
    encoder_outputs = jax.random.normal(k_e, (B, S, H), dtype=jnp.float32)
    src_lengths = jnp.array([S, S - 5, S - 9, S], dtype=jnp.int32)

    scale = float(1.0 / (H ** 0.5))
    w_h = jax.random.uniform(k_wh, (H, H), jnp.float32, -scale, scale)
    w_s = jax.random.uniform(k_ws, (H, H), jnp.float32, -scale, scale)
    v = jax.random.uniform(k_v, (1, H), jnp.float32, -scale, scale)
    s2 = float(1.0 / ((2 * H) ** 0.5))
    w_out = jax.random.uniform(k_wo, (H, 2 * H), jnp.float32, -s2, s2)

    attn_out, attn_weights = bahdanau_attention(
        query, encoder_outputs, src_lengths, w_h, w_s, v, w_out)
    jax.block_until_ready((attn_out, attn_weights))

    ref_out, ref_w = bahdanau_reference(
        query, encoder_outputs, src_lengths, w_h, w_s, v, w_out)
    assert attn_out.shape == (B, T, H) and attn_weights.shape == (B, T, S)

    # Tolerance covers differences between the MXU f32 decomposition used inside the
    # kernel and XLA's HIGHEST-precision reference; real semantic bugs are O(0.1+).
    tol = 2e-3
    assert jnp.allclose(attn_out, ref_out, atol=tol, rtol=tol), \
        float(jnp.max(jnp.abs(attn_out - ref_out)))
    assert jnp.allclose(attn_weights, ref_w, atol=tol, rtol=tol), \
        float(jnp.max(jnp.abs(attn_weights - ref_w)))

    print("KERNEL_OK")
</pallas_src>

<mosaic_0001>
module attributes {stable_mosaic.version = 11 : i64} {
  func.func @_bahdanau_kernel(%arg0: i32, %arg1: memref<4xi32, #tpu.memory_space<smem>>, %arg2: memref<16x128xf32, #tpu.memory_space<vmem>>, %arg3: memref<256x128xf32, #tpu.memory_space<vmem>>, %arg4: memref<128x128xf32, #tpu.memory_space<vmem>>, %arg5: memref<128x128xf32, #tpu.memory_space<vmem>>, %arg6: memref<1x128xf32, #tpu.memory_space<vmem>>, %arg7: memref<128x128xf32, #tpu.memory_space<vmem>>, %arg8: memref<128x128xf32, #tpu.memory_space<vmem>>, %arg9: memref<16x128xf32, #tpu.memory_space<vmem>>, %arg10: memref<16x128xf32, #tpu.memory_space<vmem>>, %arg11: memref<8x128xf32, #tpu.memory_space<vmem>>, %arg12: memref<16x128xf32, #tpu.memory_space<vmem>>, %arg13: memref<16x128xf32, #tpu.memory_space<vmem>>) attributes {dimension_semantics = [#tpu.dimension_semantics<parallel>], iteration_bounds = array<i64: 2>, scalar_prefetch = 1 : i64, scratch_operands = 3 : i64, tpu.core_type = #tpu.core_type<tc>, window_params = [{transform_indices = @transform_0, window_bounds = array<i64: 16, 128>}, {transform_indices = @transform_1, window_bounds = array<i64: 256, 128>}, {pipeline_mode = #tpu.pipeline_mode<synchronous>, transform_indices = @transform_2, window_bounds = array<i64: 128, 128>}, {pipeline_mode = #tpu.pipeline_mode<synchronous>, transform_indices = @transform_3, window_bounds = array<i64: 128, 128>}, {pipeline_mode = #tpu.pipeline_mode<synchronous>, transform_indices = @transform_4, window_bounds = array<i64: 1, 128>}, {pipeline_mode = #tpu.pipeline_mode<synchronous>, transform_indices = @transform_5, window_bounds = array<i64: 128, 128>}, {pipeline_mode = #tpu.pipeline_mode<synchronous>, transform_indices = @transform_6, window_bounds = array<i64: 128, 128>}, {transform_indices = @transform_7, window_bounds = array<i64: 16, 128>}, {transform_indices = @transform_8, window_bounds = array<i64: 16, 128>}]} {
    %c0 = arith.constant 0 : index
    %c0_0 = arith.constant 0 : index
    %0 = vector.load %arg4[%c0, %c0_0] : memref<128x128xf32, #tpu.memory_space<vmem>>, vector<128x128xf32>
    %c0_1 = arith.constant 0 : index
    %c0_2 = arith.constant 0 : index
    %1 = vector.load %arg6[%c0_1, %c0_2] : memref<1x128xf32, #tpu.memory_space<vmem>>, vector<1x128xf32>
    %2 = vector.shape_cast %1 : vector<1x128xf32> to vector<128xf32>
    %3 = tpu.iota {dimensions = array<i32: 1>} : vector<8x128xi32>
    %c0_3 = arith.constant 0 : index
    %c0_4 = arith.constant 0 : index
    %4 = vector.load %arg2[%c0_3, %c0_4] : memref<16x128xf32, #tpu.memory_space<vmem>>, vector<16x128xf32>
    %c0_5 = arith.constant 0 : index
    %c0_6 = arith.constant 0 : index
    %5 = vector.load %arg5[%c0_5, %c0_6] : memref<128x128xf32, #tpu.memory_space<vmem>>, vector<128x128xf32>
    %cst = arith.constant dense<0.000000e+00> : vector<16x128xf32>
    %6 = tpu.matmul %4, %5, %cst {dimension_numbers = #tpu.dot_dimension_numbers<[1], [0], [0], [1], [0, 0, 1, 1], [], []>} : vector<16x128xf32>, vector<128x128xf32>, vector<16x128xf32> -> vector<16x128xf32>
    %c0_7 = arith.constant 0 : index
    %c0_8 = arith.constant 0 : index
    %7 = vector.load %arg13[%c0_7, %c0_8] : memref<16x128xf32, #tpu.memory_space<vmem>>, vector<16x128xf32>
    tpu.vector_store %arg13[%c0_7, %c0_8], %6 {strides = array<i32>} : memref<16x128xf32, #tpu.memory_space<vmem>>, vector<16x128xf32>,
    %c2_i32 = arith.constant 2 : i32
    %8 = arith.muli %arg0, %c2_i32 : i32
    %c0_i32 = arith.constant 0 : i32
    %9 = arith.addi %8, %c0_i32 : i32
    %10 = arith.index_cast %9 : i32 to index
    %11 = memref.load %arg1[%10] : memref<4xi32, #tpu.memory_space<smem>>
    %c0_9 = arith.constant 0 : index
    %c0_10 = arith.constant 0 : index
    %12 = vector.load %arg13[%c0_9, %c0_10] : memref<16x128xf32, #tpu.memory_space<vmem>>, vector<8x128xf32>
    %c0_11 = arith.constant 0 : index
    %c0_12 = arith.constant 0 : index
    %13 = vector.load %arg3[%c0_11, %c0_12] : memref<256x128xf32, #tpu.memory_space<vmem>>, vector<128x128xf32>
    %cst_13 = arith.constant dense<0.000000e+00> : vector<128x128xf32>
    %14 = tpu.matmul %13, %0, %cst_13 {dimension_numbers = #tpu.dot_dimension_numbers<[1], [0], [0], [1], [0, 0, 1, 1], [], []>} : vector<128x128xf32>, vector<128x128xf32>, vector<128x128xf32> -> vector<128x128xf32>
    %15 = vector.shape_cast %12 : vector<8x128xf32> to vector<8x1x128xf32>
    %16 = vector.shape_cast %14 : vector<128x128xf32> to vector<1x128x128xf32>
    %17 = vector.broadcast %15 : vector<8x1x128xf32> to vector<8x128x128xf32>
    %18 = vector.broadcast %16 : vector<1x128x128xf32> to vector<8x128x128xf32>
    %19 = arith.addf %17, %18 : vector<8x128x128xf32>
    %20 = math.tanh %19 : vector<8x128x128xf32>
    %21 = vector.shape_cast %2 : vector<128xf32> to vector<1x1x128xf32>
    %22 = vector.broadcast %21 : vector<1x1x128xf32> to vector<8x128x128xf32>
    %23 = arith.mulf %20, %22 : vector<8x128x128xf32>
    %cst_14 = arith.constant dense<0.000000e+00> : vector<8x128xf32>
    %24 = vector.multi_reduction <add>, %23, %cst_14 [2] : vector<8x128x128xf32> to vector<8x128xf32>
    %c0_15 = arith.constant 0 : index
    %c0_16 = arith.constant 0 : index
    %25 = vector.load %arg11[%c0_15, %c0_16] : memref<8x128xf32, #tpu.memory_space<vmem>>, vector<8x128xf32>
    tpu.vector_store %arg11[%c0_15, %c0_16], %24 {strides = array<i32>} : memref<8x128xf32, #tpu.memory_space<vmem>>, vector<8x128xf32>,
    %26 = vector.broadcast %11 : i32 to vector<8x128xi32>
    %27 = arith.cmpi slt, %3, %26 : vector<8x128xi32>
    %c0_17 = arith.constant 0 : index
    %c0_18 = arith.constant 0 : index
    %28 = vector.load %arg11[%c0_17, %c0_18] : memref<8x128xf32, #tpu.memory_space<vmem>>, vector<8x128xf32>
    %cst_19 = arith.constant -1.000000e+30 : f32
    %29 = vector.broadcast %cst_19 : f32 to vector<8x128xf32>
    %30 = arith.select %27, %28, %29 : vector<8x128xi1>, vector<8x128xf32>
    %cst_20 = arith.constant dense<0xFF800000> : vector<8xf32>
    %31 = vector.multi_reduction <maximumf>, %30, %cst_20 [1] : vector<8x128xf32> to vector<8xf32>
    %32 = vector.shape_cast %31 : vector<8xf32> to vector<8x1xf32>
    %33 = vector.broadcast %32 : vector<8x1xf32> to vector<8x128xf32>
    %34 = arith.subf %30, %33 : vector<8x128xf32>
    %35 = math.exp %34 : vector<8x128xf32>
    %cst_21 = arith.constant dense<0.000000e+00> : vector<8xf32>
    %36 = vector.multi_reduction <add>, %35, %cst_21 [1] : vector<8x128xf32> to vector<8xf32>
    %37 = vector.shape_cast %36 : vector<8xf32> to vector<8x1xf32>
    %38 = tpu.reciprocal %37 : vector<8x1xf32> -> vector<8x1xf32>
    %39 = vector.broadcast %38 : vector<8x1xf32> to vector<8x128xf32>
    %40 = arith.mulf %35, %39 : vector<8x128xf32>
    %c0_22 = arith.constant 0 : index
    %c0_23 = arith.constant 0 : index
    %41 = vector.load %arg10[%c0_22, %c0_23] : memref<16x128xf32, #tpu.memory_space<vmem>>, vector<8x128xf32>
    tpu.vector_store %arg10[%c0_22, %c0_23], %40 {strides = array<i32>} : memref<16x128xf32, #tpu.memory_space<vmem>>, vector<8x128xf32>,
    %c0_24 = arith.constant 0 : index
    %c0_25 = arith.constant 0 : index
    %42 = vector.load %arg3[%c0_24, %c0_25] : memref<256x128xf32, #tpu.memory_space<vmem>>, vector<128x128xf32>
    %cst_26 = arith.constant dense<0.000000e+00> : vector<8x128xf32>
    %43 = tpu.matmul %40, %42, %cst_26 {dimension_numbers = #tpu.dot_dimension_numbers<[1], [0], [0], [1], [0, 0, 1, 1], [], []>} : vector<8x128xf32>, vector<128x128xf32>, vector<8x128xf32> -> vector<8x128xf32>
    %c0_27 = arith.constant 0 : index
    %c0_28 = arith.constant 0 : index
    %44 = vector.load %arg12[%c0_27, %c0_28] : memref<16x128xf32, #tpu.memory_space<vmem>>, vector<8x128xf32>
    tpu.vector_store %arg12[%c0_27, %c0_28], %43 {strides = array<i32>} : memref<16x128xf32, #tpu.memory_space<vmem>>, vector<8x128xf32>,
    %c2_i32_29 = arith.constant 2 : i32
    %45 = arith.muli %arg0, %c2_i32_29 : i32
    %c1_i32 = arith.constant 1 : i32
    %46 = arith.addi %45, %c1_i32 : i32
    %47 = arith.index_cast %46 : i32 to index
    %48 = memref.load %arg1[%47] : memref<4xi32, #tpu.memory_space<smem>>
    %c8 = arith.constant 8 : index
    %c0_30 = arith.constant 0 : index
    %49 = vector.load %arg13[%c8, %c0_30] : memref<16x128xf32, #tpu.memory_space<vmem>>, vector<8x128xf32>
    %c128 = arith.constant 128 : index
    %c0_31 = arith.constant 0 : index
    %50 = vector.load %arg3[%c128, %c0_31] : memref<256x128xf32, #tpu.memory_space<vmem>>, vector<128x128xf32>
    %cst_32 = arith.constant dense<0.000000e+00> : vector<128x128xf32>
    %51 = tpu.matmul %50, %0, %cst_32 {dimension_numbers = #tpu.dot_dimension_numbers<[1], [0], [0], [1], [0, 0, 1, 1], [], []>} : vector<128x128xf32>, vector<128x128xf32>, vector<128x128xf32> -> vector<128x128xf32>
    %52 = vector.shape_cast %49 : vector<8x128xf32> to vector<8x1x128xf32>
    %53 = vector.shape_cast %51 : vector<128x128xf32> to vector<1x128x128xf32>
    %54 = vector.broadcast %52 : vector<8x1x128xf32> to vector<8x128x128xf32>
    %55 = vector.broadcast %53 : vector<1x128x128xf32> to vector<8x128x128xf32>
    %56 = arith.addf %54, %55 : vector<8x128x128xf32>
    %57 = math.tanh %56 : vector<8x128x128xf32>
    %58 = vector.shape_cast %2 : vector<128xf32> to vector<1x1x128xf32>
    %59 = vector.broadcast %58 : vector<1x1x128xf32> to vector<8x128x128xf32>
    %60 = arith.mulf %57, %59 : vector<8x128x128xf32>
    %cst_33 = arith.constant dense<0.000000e+00> : vector<8x128xf32>
    %61 = vector.multi_reduction <add>, %60, %cst_33 [2] : vector<8x128x128xf32> to vector<8x128xf32>
    %c0_34 = arith.constant 0 : index
    %c0_35 = arith.constant 0 : index
    %62 = vector.load %arg11[%c0_34, %c0_35] : memref<8x128xf32, #tpu.memory_space<vmem>>, vector<8x128xf32>
    tpu.vector_store %arg11[%c0_34, %c0_35], %61 {strides = array<i32>} : memref<8x128xf32, #tpu.memory_space<vmem>>, vector<8x128xf32>,
    %63 = vector.broadcast %48 : i32 to vector<8x128xi32>
    %64 = arith.cmpi slt, %3, %63 : vector<8x128xi32>
    %c0_36 = arith.constant 0 : index
    %c0_37 = arith.constant 0 : index
    %65 = vector.load %arg11[%c0_36, %c0_37] : memref<8x128xf32, #tpu.memory_space<vmem>>, vector<8x128xf32>
    %cst_38 = arith.constant -1.000000e+30 : f32
    %66 = vector.broadcast %cst_38 : f32 to vector<8x128xf32>
    %67 = arith.select %64, %65, %66 : vector<8x128xi1>, vector<8x128xf32>
    %cst_39 = arith.constant dense<0xFF800000> : vector<8xf32>
    %68 = vector.multi_reduction <maximumf>, %67, %cst_39 [1] : vector<8x128xf32> to vector<8xf32>
    %69 = vector.shape_cast %68 : vector<8xf32> to vector<8x1xf32>
    %70 = vector.broadcast %69 : vector<8x1xf32> to vector<8x128xf32>
    %71 = arith.subf %67, %70 : vector<8x128xf32>
    %72 = math.exp %71 : vector<8x128xf32>
    %cst_40 = arith.constant dense<0.000000e+00> : vector<8xf32>
    %73 = vector.multi_reduction <add>, %72, %cst_40 [1] : vector<8x128xf32> to vector<8xf32>
    %74 = vector.shape_cast %73 : vector<8xf32> to vector<8x1xf32>
    %75 = tpu.reciprocal %74 : vector<8x1xf32> -> vector<8x1xf32>
    %76 = vector.broadcast %75 : vector<8x1xf32> to vector<8x128xf32>
    %77 = arith.mulf %72, %76 : vector<8x128xf32>
    %c8_41 = arith.constant 8 : index
    %c0_42 = arith.constant 0 : index
    %78 = vector.load %arg10[%c8_41, %c0_42] : memref<16x128xf32, #tpu.memory_space<vmem>>, vector<8x128xf32>
    tpu.vector_store %arg10[%c8_41, %c0_42], %77 {strides = array<i32>} : memref<16x128xf32, #tpu.memory_space<vmem>>, vector<8x128xf32>,
    %c128_43 = arith.constant 128 : index
    %c0_44 = arith.constant 0 : index
    %79 = vector.load %arg3[%c128_43, %c0_44] : memref<256x128xf32, #tpu.memory_space<vmem>>, vector<128x128xf32>
    %cst_45 = arith.constant dense<0.000000e+00> : vector<8x128xf32>
    %80 = tpu.matmul %77, %79, %cst_45 {dimension_numbers = #tpu.dot_dimension_numbers<[1], [0], [0], [1], [0, 0, 1, 1], [], []>} : vector<8x128xf32>, vector<128x128xf32>, vector<8x128xf32> -> vector<8x128xf32>
    %c8_46 = arith.constant 8 : index
    %c0_47 = arith.constant 0 : index
    %81 = vector.load %arg12[%c8_46, %c0_47] : memref<16x128xf32, #tpu.memory_space<vmem>>, vector<8x128xf32>
    tpu.vector_store %arg12[%c8_46, %c0_47], %80 {strides = array<i32>} : memref<16x128xf32, #tpu.memory_space<vmem>>, vector<8x128xf32>,
    %c0_48 = arith.constant 0 : index
    %c0_49 = arith.constant 0 : index
    %82 = vector.load %arg12[%c0_48, %c0_49] : memref<16x128xf32, #tpu.memory_space<vmem>>, vector<16x128xf32>
    %c0_50 = arith.constant 0 : index
    %c0_51 = arith.constant 0 : index
    %83 = vector.load %arg7[%c0_50, %c0_51] : memref<128x128xf32, #tpu.memory_space<vmem>>, vector<128x128xf32>
    %cst_52 = arith.constant dense<0.000000e+00> : vector<16x128xf32>
    %84 = tpu.matmul %82, %83, %cst_52 {dimension_numbers = #tpu.dot_dimension_numbers<[1], [0], [0], [1], [0, 0, 1, 1], [], []>} : vector<16x128xf32>, vector<128x128xf32>, vector<16x128xf32> -> vector<16x128xf32>
    %c0_53 = arith.constant 0 : index
    %c0_54 = arith.constant 0 : index
    %85 = vector.load %arg2[%c0_53, %c0_54] : memref<16x128xf32, #tpu.memory_space<vmem>>, vector<16x128xf32>
    %c0_55 = arith.constant 0 : index
    %c0_56 = arith.constant 0 : index
    %86 = vector.load %arg8[%c0_55, %c0_56] : memref<128x128xf32, #tpu.memory_space<vmem>>, vector<128x128xf32>
    %cst_57 = arith.constant dense<0.000000e+00> : vector<16x128xf32>
    %87 = tpu.matmul %85, %86, %cst_57 {dimension_numbers = #tpu.dot_dimension_numbers<[1], [0], [0], [1], [0, 0, 1, 1], [], []>} : vector<16x128xf32>, vector<128x128xf32>, vector<16x128xf32> -> vector<16x128xf32>
    %88 = arith.addf %84, %87 : vector<16x128xf32>
    %89 = math.tanh %88 : vector<16x128xf32>
    %c0_58 = arith.constant 0 : index
    %c0_59 = arith.constant 0 : index
    %90 = vector.load %arg9[%c0_58, %c0_59] : memref<16x128xf32, #tpu.memory_space<vmem>>, vector<16x128xf32>
    tpu.vector_store %arg9[%c0_58, %c0_59], %89 {strides = array<i32>} : memref<16x128xf32, #tpu.memory_space<vmem>>, vector<16x128xf32>,
    return
  }
  func.func @transform_0(%arg0: i32, %arg1: memref<4xi32, #tpu.memory_space<smem>>) -> (i32, i32) {
    %c0_i32 = arith.constant 0 : i32
    %c0_i32_0 = arith.constant 0 : i32
    return %arg0, %c0_i32 : i32, i32
  }
  func.func @transform_1(%arg0: i32, %arg1: memref<4xi32, #tpu.memory_space<smem>>) -> (i32, i32) {
    %c0_i32 = arith.constant 0 : i32
    %c0_i32_0 = arith.constant 0 : i32
    return %arg0, %c0_i32 : i32, i32
  }
  func.func @transform_2(%arg0: i32, %arg1: memref<4xi32, #tpu.memory_space<smem>>) -> (i32, i32) {
    %c0_i32 = arith.constant 0 : i32
    %c0_i32_0 = arith.constant 0 : i32
    %c0_i32_1 = arith.constant 0 : i32
    return %c0_i32, %c0_i32_0 : i32, i32
  }
  func.func @transform_3(%arg0: i32, %arg1: memref<4xi32, #tpu.memory_space<smem>>) -> (i32, i32) {
    %c0_i32 = arith.constant 0 : i32
    %c0_i32_0 = arith.constant 0 : i32
    %c0_i32_1 = arith.constant 0 : i32
    return %c0_i32, %c0_i32_0 : i32, i32
  }
  func.func @transform_4(%arg0: i32, %arg1: memref<4xi32, #tpu.memory_space<smem>>) -> (i32, i32) {
    %c0_i32 = arith.constant 0 : i32
    %c0_i32_0 = arith.constant 0 : i32
    %c0_i32_1 = arith.constant 0 : i32
    return %c0_i32, %c0_i32_0 : i32, i32
  }
  func.func @transform_5(%arg0: i32, %arg1: memref<4xi32, #tpu.memory_space<smem>>) -> (i32, i32) {
    %c0_i32 = arith.constant 0 : i32
    %c0_i32_0 = arith.constant 0 : i32
    %c0_i32_1 = arith.constant 0 : i32
    return %c0_i32, %c0_i32_0 : i32, i32
  }
  func.func @transform_6(%arg0: i32, %arg1: memref<4xi32, #tpu.memory_space<smem>>) -> (i32, i32) {
    %c0_i32 = arith.constant 0 : i32
    %c0_i32_0 = arith.constant 0 : i32
    %c0_i32_1 = arith.constant 0 : i32
    return %c0_i32, %c0_i32_0 : i32, i32
  }
  func.func @transform_7(%arg0: i32, %arg1: memref<4xi32, #tpu.memory_space<smem>>) -> (i32, i32) {
    %c0_i32 = arith.constant 0 : i32
    %c0_i32_0 = arith.constant 0 : i32
    return %arg0, %c0_i32 : i32, i32
  }
  func.func @transform_8(%arg0: i32, %arg1: memref<4xi32, #tpu.memory_space<smem>>) -> (i32, i32) {
    %c0_i32 = arith.constant 0 : i32
    %c0_i32_0 = arith.constant 0 : i32
    return %arg0, %c0_i32 : i32, i32
  }
}

</mosaic_0001>

<llo_original>
// kernel: tpu_custom_call.1
$region0: #{tpu_custom_call.1}
  #allocation0 [shape = 'u32[]', space=smem, size = 0x4, offset = 0x4, fixed_abs, tag = 'smem constant byte address 0x4 - core index']
  #allocation1 [shape = 'u32[72,128]{1,0:T(1,128)}', space=vmem, size = 0x9000, scoped, tag = 'internal scratch']
  #allocation2 [shape = 'f32[8,128]{1,0:T(8,128)}', space=vmem, size = 0x1000, scoped, tag = 'scratch operand']
  #allocation3 [shape = 'f32[16,128]{1,0:T(8,128)}', space=vmem, size = 0x2000, scoped, tag = 'scratch operand']
  #allocation4 [shape = 'f32[16,128]{1,0:T(8,128)}', space=vmem, size = 0x2000, scoped, tag = 'scratch operand']
  #allocation5 [shape = 's32[1]{0}', space=sflag, size = 0x4, scoped, tag = 'scoped memory for tpu_custom_call.1']
  #allocation6 [shape = 'u8[512]{0}', space=smem, size = 0x200, scoped, tag = 'prefetched SMEM operand 0']
  %s0 = inlined_call_operand.hbm [shape: s32[4], index: 0, kind: input, shape index: {}]
  %s1 = inlined_call_operand.hbm [shape: f32[32,128], index: 1, kind: input, shape index: {}]
  %s2 = inlined_call_operand.hbm [shape: f32[512,128], index: 2, kind: input, shape index: {}]
  %s3 = inlined_call_operand.hbm [shape: f32[128,128], index: 3, kind: input, shape index: {}]
  %s4 = inlined_call_operand.hbm [shape: f32[128,128], index: 4, kind: input, shape index: {}]
  %s5 = inlined_call_operand.vmem [shape: f32[1,128], index: 5, kind: input, shape index: {}]
  %s6 = inlined_call_operand.hbm [shape: f32[128,128], index: 6, kind: input, shape index: {}]
  %s7 = inlined_call_operand.hbm [shape: f32[128,128], index: 7, kind: input, shape index: {}]
  %s8 = inlined_call_operand.hbm [shape: f32[32,128], index: 8, kind: output, shape index: {0}]
  %s9 = inlined_call_operand.hbm [shape: f32[32,128], index: 9, kind: output, shape index: {1}]
  %10 = xla_tuple %s8, %s9
  %s11 = sld [smem:[#allocation0]]
  $region93: #{tpu_custom_call.1} parent=0
    _
  %s13 = ssub.s32 1, %s11
  %s14 = scalar_select 0, %s13, %s11
  %s16 = sshll.u32 %s0, 4
  %s17 = int_to_ptr.hbm [resolvable:$true] %s16
  %19 = dma.hbm_to_smem %s17, 16, [#allocation6], [#allocation5]
  %21 = dma.done [#allocation5], 16
  %22 = sfence
  $region1: #{tpu_custom_call.1} parent=0
    #allocation7 [shape = 'u8[16384]{0}', space=vmem, size = 0x4000, scoped, tag = 'input window, operand 1']
    #allocation8 [shape = 's32[2]{0}', space=sflag, size = 0x8, scoped, tag = 'scoped memory for tpu_custom_call.1']
    #allocation9 [shape = 's32[2]{0}', space=sflag, size = 0x8, scoped, tag = 'scoped memory for tpu_custom_call.1']
    #allocation10 [shape = 'u8[262144]{0}', space=vmem, size = 0x40000, scoped, tag = 'input window, operand 2']
    #allocation11 [shape = 's32[2]{0}', space=sflag, size = 0x8, scoped, tag = 'scoped memory for tpu_custom_call.1']
    #allocation12 [shape = 'u8[65536]{0}', space=vmem, size = 0x10000, scoped, tag = 'input window, operand 3, single buffered']
    #allocation13 [shape = 'u8[65536]{0}', space=vmem, size = 0x10000, scoped, tag = 'input window, operand 4, single buffered']
    #allocation14 [shape = 's32[1]{0}', space=sflag, size = 0x4, scoped, tag = 'scoped memory for tpu_custom_call.1']
    #allocation15 [shape = 'u8[65536]{0}', space=vmem, size = 0x10000, scoped, tag = 'input window, operand 6, single buffered']
    #allocation16 [shape = 'u8[65536]{0}', space=vmem, size = 0x10000, scoped, tag = 'input window, operand 7, single buffered']
    #allocation17 [shape = 's32[1]{0}', space=sflag, size = 0x4, scoped, tag = 'scoped memory for tpu_custom_call.1']
    #allocation18 [shape = 'u8[16384]{0}', space=vmem, size = 0x4000, scoped, tag = 'output window, operand 0']
    #allocation19 [shape = 'u8[16384]{0}', space=vmem, size = 0x4000, scoped, tag = 'output window, operand 1']
    #allocation20 [shape = 's32[2]{0}', space=sflag, size = 0x8, scoped, tag = 'scoped memory for tpu_custom_call.1']
    %23 = vsyncpa [#allocation8], 0
    %s24 = scalar_lea.sflag [#allocation8], 1
    %25 = vsyncpa %s24, 0
    %26 = vsyncpa [#allocation11], 0
    %s27 = scalar_lea.sflag [#allocation11], 1
    %28 = vsyncpa %s27, 0
    %29 = vsyncpa [#allocation14], 0
    %30 = vsyncpa [#allocation17], 0
    %31 = vsyncpa [#allocation9], 0
    %s32 = scalar_lea.sflag [#allocation9], 1
    %33 = vsyncpa %s32, 0
    %34 = vsyncpa [#allocation20], 0
    %s35 = scalar_lea.sflag [#allocation20], 1
    %36 = vsyncpa %s35, 0
    loop: start=0, step=1, limit=4
    $region2: #{tpu_custom_call.1} parent=1 // loop_pre_header
      _
    $region3: #{tpu_custom_call.1} parent=1 // loop_header
      %s38 = sphi 0, %s42
      %p39 = scmp.ge.s32.totalorder %s38, 4
      %s48 = sphi 0, %s50
      %s51 = sphi 0, %s48
      %s52 = sphi 0, %s51
      %s68 = sphi 0, %s52
      %s74 = sphi 0, %s76
      %s77 = sphi 0, %s74
      %s78 = sphi 0, %s77
      %s94 = sphi 0, %s78
      %s98 = sphi 0, %s98
      %s100 = sphi 0, %s98
      %s101 = sphi 0, %s100
      %s115 = sphi 0, %s101
      %s119 = sphi 0, %s119
      %s121 = sphi 0, %s119
      %s122 = sphi 0, %s121
      %s136 = sphi 0, %s122
      %s140 = sphi 0, %s140
      %s142 = sphi 0, %s140
      %s143 = sphi 0, %s142
      %s157 = sphi 0, %s143
      %s161 = sphi 0, %s161
      %s163 = sphi 0, %s161
      %s164 = sphi 0, %s163
      %s178 = sphi 0, %s164
      %s182 = sphi 0, %s182
      %s184 = sphi 0, %s182
      %s185 = sphi 0, %s184
      %s199 = sphi 0, %s185
      %s205 = sphi 0, %s207
      %s208 = sphi 0, %s205
      %s209 = sphi 0, %s208
      %s225 = sphi 0, %s209
      %s231 = sphi 0, %s233
      %s234 = sphi 0, %s231
      %s235 = sphi 0, %s234
      %s251 = sphi 0, %s235
    $region4: #{tpu_custom_call.1} parent=1 // loop_header_branch
      %41 = sbr.rel (%p39) target = $region8
    $region5: #{tpu_custom_call.1} parent=1 // loop_body
      %s43 = ssub.s32 %s38, 1
      %s44 = ssub.s32 %s38, 2
      %s45 = sadd.s32 %s38, 1
      %s46 = ssub.s32 %s38, %s45
      %p47 = scmp.eq.s32.totalorder %s46, 0
      %s49 = sadd.s32 %s48, 1
      %s50 = scalar_select %p47, %s48, %s49
      %p53 = pneg %p47
      %p54 = scmp.eq.s32.totalorder %s38, 1
      %p55 = por %p53, %p54
      %p56 = scmp.ne.s32.totalorder %s48, %s51
      %p57 = scmp.eq.s32.totalorder %s38, 0
      %p58 = por %p56, %p57
      %p59 = scmp.ne.s32.totalorder %s48, %s51
      %p60 = scmp.eq.s32.totalorder %s43, 1
      %p61 = por %p59, %p60
      %p62 = scmp.ne.s32.totalorder %s51, %s52
      %p63 = scmp.eq.s32.totalorder %s43, 0
      %p64 = por %p62, %p63
      %p65 = scmp.ne.s32.totalorder %s51, %s52
      %p66 = scmp.eq.s32.totalorder %s44, 1
      %p67 = por %p65, %p66
      %p69 = scmp.ne.s32.totalorder %s52, %s68
      %p70 = scmp.eq.s32.totalorder %s44, 0
      %p71 = por %p69, %p70
      %s72 = ssub.s32 %s38, %s45
      %p73 = scmp.eq.s32.totalorder %s72, 0
      %s75 = sadd.s32 %s74, 1
      %s76 = scalar_select %p73, %s74, %s75
      %p79 = pneg %p73
      %p80 = scmp.eq.s32.totalorder %s38, 1
      %p81 = por %p79, %p80
      %p82 = scmp.ne.s32.totalorder %s74, %s77
      %p83 = scmp.eq.s32.totalorder %s38, 0
      %p84 = por %p82, %p83
      %p85 = scmp.ne.s32.totalorder %s74, %s77
      %p86 = scmp.eq.s32.totalorder %s43, 1
      %p87 = por %p85, %p86
      %p88 = scmp.ne.s32.totalorder %s77, %s78
      %p89 = scmp.eq.s32.totalorder %s43, 0
      %p90 = por %p88, %p89
      %p91 = scmp.ne.s32.totalorder %s77, %s78
      %p92 = scmp.eq.s32.totalorder %s44, 1
      %p93 = por %p91, %p92
      %p95 = scmp.ne.s32.totalorder %s78, %s94
      %p96 = scmp.eq.s32.totalorder %s44, 0
      %p97 = por %p95, %p96
      %s99 = sadd.s32 %s98, 1
      %p102 = scmp.eq.s32.totalorder %s38, 1
      %p103 = scmp.ne.s32.totalorder %s98, %s100
      %p104 = scmp.eq.s32.totalorder %s38, 0
      %p105 = por %p103, %p104
      %p106 = scmp.ne.s32.totalorder %s98, %s100
      %p107 = scmp.eq.s32.totalorder %s43, 1
      %p108 = por %p106, %p107
      %p109 = scmp.ne.s32.totalorder %s100, %s101
      %p110 = scmp.eq.s32.totalorder %s43, 0
      %p111 = por %p109, %p110
      %p112 = scmp.ne.s32.totalorder %s100, %s101
      %p113 = scmp.eq.s32.totalorder %s44, 1
      %p114 = por %p112, %p113
      %p116 = scmp.ne.s32.totalorder %s101, %s115
      %p117 = scmp.eq.s32.totalorder %s44, 0
      %p118 = por %p116, %p117
      %s120 = sadd.s32 %s119, 1
      %p123 = scmp.eq.s32.totalorder %s38, 1
      %p124 = scmp.ne.s32.totalorder %s119, %s121
      %p125 = scmp.eq.s32.totalorder %s38, 0
      %p126 = por %p124, %p125
      %p127 = scmp.ne.s32.totalorder %s119, %s121
      %p128 = scmp.eq.s32.totalorder %s43, 1
      %p129 = por %p127, %p128
      %p130 = scmp.ne.s32.totalorder %s121, %s122
      %p131 = scmp.eq.s32.totalorder %s43, 0
      %p132 = por %p130, %p131
      %p133 = scmp.ne.s32.totalorder %s121, %s122
      %p134 = scmp.eq.s32.totalorder %s44, 1
      %p135 = por %p133, %p134
      %p137 = scmp.ne.s32.totalorder %s122, %s136
      %p138 = scmp.eq.s32.totalorder %s44, 0
      %p139 = por %p137, %p138
      %s141 = sadd.s32 %s140, 1
      %p144 = scmp.eq.s32.totalorder %s38, 1
      %p145 = scmp.ne.s32.totalorder %s140, %s142
      %p146 = scmp.eq.s32.totalorder %s38, 0
      %p147 = por %p145, %p146
      %p148 = scmp.ne.s32.totalorder %s140, %s142
      %p149 = scmp.eq.s32.totalorder %s43, 1
      %p150 = por %p148, %p149
      %p151 = scmp.ne.s32.totalorder %s142, %s143
      %p152 = scmp.eq.s32.totalorder %s43, 0
      %p153 = por %p151, %p152
      %p154 = scmp.ne.s32.totalorder %s142, %s143
      %p155 = scmp.eq.s32.totalorder %s44, 1
      %p156 = por %p154, %p155
      %p158 = scmp.ne.s32.totalorder %s143, %s157
      %p159 = scmp.eq.s32.totalorder %s44, 0
      %p160 = por %p158, %p159
      %s162 = sadd.s32 %s161, 1
      %p165 = scmp.eq.s32.totalorder %s38, 1
      %p166 = scmp.ne.s32.totalorder %s161, %s163
      %p167 = scmp.eq.s32.totalorder %s38, 0
      %p168 = por %p166, %p167
      %p169 = scmp.ne.s32.totalorder %s161, %s163
      %p170 = scmp.eq.s32.totalorder %s43, 1
      %p171 = por %p169, %p170
      %p172 = scmp.ne.s32.totalorder %s163, %s164
      %p173 = scmp.eq.s32.totalorder %s43, 0
      %p174 = por %p172, %p173
      %p175 = scmp.ne.s32.totalorder %s163, %s164
      %p176 = scmp.eq.s32.totalorder %s44, 1
      %p177 = por %p175, %p176
      %p179 = scmp.ne.s32.totalorder %s164, %s178
      %p180 = scmp.eq.s32.totalorder %s44, 0
      %p181 = por %p179, %p180
      %s183 = sadd.s32 %s182, 1
      %p186 = scmp.eq.s32.totalorder %s38, 1
      %p187 = scmp.ne.s32.totalorder %s182, %s184
      %p188 = scmp.eq.s32.totalorder %s38, 0
      %p189 = por %p187, %p188
      %p190 = scmp.ne.s32.totalorder %s182, %s184
      %p191 = scmp.eq.s32.totalorder %s43, 1
      %p192 = por %p190, %p191
      %p193 = scmp.ne.s32.totalorder %s184, %s185
      %p194 = scmp.eq.s32.totalorder %s43, 0
      %p195 = por %p193, %p194
      %p196 = scmp.ne.s32.totalorder %s184, %s185
      %p197 = scmp.eq.s32.totalorder %s44, 1
      %p198 = por %p196, %p197
      %p200 = scmp.ne.s32.totalorder %s185, %s199
      %p201 = scmp.eq.s32.totalorder %s44, 0
      %p202 = por %p200, %p201
      %s203 = ssub.s32 %s38, %s45
      %p204 = scmp.eq.s32.totalorder %s203, 0
      %s206 = sadd.s32 %s205, 1
      %s207 = scalar_select %p204, %s205, %s206
      %p210 = pneg %p204
      %p211 = scmp.eq.s32.totalorder %s38, 1
      %p212 = por %p210, %p211
      %p213 = scmp.ne.s32.totalorder %s205, %s208
      %p214 = scmp.eq.s32.totalorder %s38, 0
      %p215 = por %p213, %p214
      %p216 = scmp.ne.s32.totalorder %s205, %s208
      %p217 = scmp.eq.s32.totalorder %s43, 1
      %p218 = por %p216, %p217
      %p219 = scmp.ne.s32.totalorder %s208, %s209
      %p220 = scmp.eq.s32.totalorder %s43, 0
      %p221 = por %p219, %p220
      %p222 = scmp.ne.s32.totalorder %s208, %s209
      %p223 = scmp.eq.s32.totalorder %s44, 1
      %p224 = por %p222, %p223
      %p226 = scmp.ne.s32.totalorder %s209, %s225
      %p227 = scmp.eq.s32.totalorder %s44, 0
      %p228 = por %p226, %p227
      %s229 = ssub.s32 %s38, %s45
      %p230 = scmp.eq.s32.totalorder %s229, 0
      %s232 = sadd.s32 %s231, 1
      %s233 = scalar_select %p230, %s231, %s232
      %p236 = pneg %p230
      %p237 = scmp.eq.s32.totalorder %s38, 1
      %p238 = por %p236, %p237
      %p239 = scmp.ne.s32.totalorder %s231, %s234
      %p240 = scmp.eq.s32.totalorder %s38, 0
      %p241 = por %p239, %p240
      %p242 = scmp.ne.s32.totalorder %s231, %s234
      %p243 = scmp.eq.s32.totalorder %s43, 1
      %p244 = por %p242, %p243
      %p245 = scmp.ne.s32.totalorder %s234, %s235
      %p246 = scmp.eq.s32.totalorder %s43, 0
      %p247 = por %p245, %p246
      %p248 = scmp.ne.s32.totalorder %s234, %s235
      %p249 = scmp.eq.s32.totalorder %s44, 1
      %p250 = por %p248, %p249
      %p252 = scmp.ne.s32.totalorder %s235, %s251
      %p253 = scmp.eq.s32.totalorder %s44, 0
      %p254 = por %p252, %p253
      %p255 = scmp.le.s32.totalorder 1, %s38
      %p256 = scmp.lt.s32.totalorder %s38, 3
      %p257 = pnand %p255, %p256
      %p258 = pneg %p257
      // Predicated region
      $region9: #{tpu_custom_call.1} parent=5 // pred_check
        _
      $region10: #{tpu_custom_call.1} parent=5 // pred_check_branch
        %260 = sbr.rel (%p257) target = $region12
      $region11: #{tpu_custom_call.1} parent=5 // pred_region
        %s261 = ssub.s32 %s38, 1
        // Predicated region
        $region13: #{tpu_custom_call.1} parent=11 // pred_check
          %p262 = pneg %p111
        $region14: #{tpu_custom_call.1} parent=11 // pred_check_branch
          %264 = sbr.rel (%p262) target = $region16
        $region15: #{tpu_custom_call.1} parent=11 // pred_region
          %266 = vsyncadd [#allocation11], 0
          %s267 = sshll.u32 %s3, 4
          %s268 = int_to_ptr.hbm [resolvable:$true] %s267
          %s269 = sshll.u32 [#allocation12], 4
          %s270 = int_to_ptr.vmem [resolvable:$true] %s269
          %275 = dma.hbm_to_vmem [thread:$0]  %s268, 2048, %s270, [#allocation11], 128, 128, 8
        $region16: #{tpu_custom_call.1} parent=11 // pred_fallthru
          _
        // Predicated region
        $region17: #{tpu_custom_call.1} parent=11 // pred_check
          %p276 = pneg %p132
        $region18: #{tpu_custom_call.1} parent=11 // pred_check_branch
          %278 = sbr.rel (%p276) target = $region20
        $region19: #{tpu_custom_call.1} parent=11 // pred_region
          %280 = vsyncadd [#allocation14], 0
          %s281 = sshll.u32 %s4, 4
          %s282 = int_to_ptr.hbm [resolvable:$true] %s281
          %s283 = sshll.u32 [#allocation13], 4
          %s284 = int_to_ptr.vmem [resolvable:$true] %s283
          %289 = dma.hbm_to_vmem [thread:$0]  %s282, 2048, %s284, [#allocation14], 128, 128, 8
        $region20: #{tpu_custom_call.1} parent=11 // pred_fallthru
          _
        // Predicated region
        $region21: #{tpu_custom_call.1} parent=11 // pred_check
          %p290 = pneg %p153
        $region22: #{tpu_custom_call.1} parent=11 // pred_check_branch
          %292 = sbr.rel (%p290) target = $region24
        $region23: #{tpu_custom_call.1} parent=11 // pred_region
          _
        $region24: #{tpu_custom_call.1} parent=11 // pred_fallthru
          _
        // Predicated region
        $region25: #{tpu_custom_call.1} parent=11 // pred_check
          %p293 = pneg %p174
        $region26: #{tpu_custom_call.1} parent=11 // pred_check_branch
          %295 = sbr.rel (%p293) target = $region28
        $region27: #{tpu_custom_call.1} parent=11 // pred_region
          %297 = vsyncadd [#allocation14], 0
          %s298 = sshll.u32 %s6, 4
          %s299 = int_to_ptr.hbm [resolvable:$true] %s298
          %s300 = sshll.u32 [#allocation15], 4
          %s301 = int_to_ptr.vmem [resolvable:$true] %s300
          %306 = dma.hbm_to_vmem [thread:$0]  %s299, 2048, %s301, [#allocation14], 128, 128, 8
        $region28: #{tpu_custom_call.1} parent=11 // pred_fallthru
          _
        // Predicated region
        $region29: #{tpu_custom_call.1} parent=11 // pred_check
          %p307 = pneg %p195
        $region30: #{tpu_custom_call.1} parent=11 // pred_check_branch
          %309 = sbr.rel (%p307) target = $region32
        $region31: #{tpu_custom_call.1} parent=11 // pred_region
          %311 = vsyncadd [#allocation17], 0
          %s312 = sshll.u32 %s7, 4
          %s313 = int_to_ptr.hbm [resolvable:$true] %s312
          %s314 = sshll.u32 [#allocation16], 4
          %s315 = int_to_ptr.vmem [resolvable:$true] %s314
          %320 = dma.hbm_to_vmem [thread:$0]  %s313, 2048, %s315, [#allocation17], 128, 128, 8
        $region32: #{tpu_custom_call.1} parent=11 // pred_fallthru
          _
      $region12: #{tpu_custom_call.1} parent=5 // pred_fallthru
        _
      %p321 = scmp.lt.s32.totalorder %s38, 2
      // Predicated region
      $region33: #{tpu_custom_call.1} parent=5 // pred_check
        %p322 = pneg %p321
      $region34: #{tpu_custom_call.1} parent=5 // pred_check_branch
        %324 = sbr.rel (%p322) target = $region36
      $region35: #{tpu_custom_call.1} parent=5 // pred_region
        // Predicated region
        $region37: #{tpu_custom_call.1} parent=35 // pred_check
          %p325 = pneg %p58
        $region38: #{tpu_custom_call.1} parent=35 // pred_check_branch
          %327 = sbr.rel (%p325) target = $region40
        $region39: #{tpu_custom_call.1} parent=35 // pred_region
          %s328 = sand.u32 %s48, 1
          %s329 = scalar_lea.sflag [#allocation8], %s328
          %s330 = sand.u32 %s48, 1
          %s331 = smul.addr %s330, 16
          %s332 = scalar_lea.vmem [#allocation7], %s331
          %s333 = smul.u32 2, %s38
          %335 = vsyncadd %s329, 0
          %s336 = smul.addr %s333, 8
          %s337 = scalar_lea.hbm %s1, %s336
          %s338 = sshll.u32 %s337, 4
          %s339 = int_to_ptr.hbm [resolvable:$true] %s338
          %s340 = sshll.u32 %s332, 4
          %s341 = int_to_ptr.vmem [resolvable:$true] %s340
          %346 = dma.hbm_to_vmem [thread:$0]  %s339, 256, %s341, %s329, 128, 128, 8
        $region40: #{tpu_custom_call.1} parent=35 // pred_fallthru
          _
        // Predicated region
        $region41: #{tpu_custom_call.1} parent=35 // pred_check
          %p347 = pneg %p84
        $region42: #{tpu_custom_call.1} parent=35 // pred_check_branch
          %349 = sbr.rel (%p347) target = $region44
        $region43: #{tpu_custom_call.1} parent=35 // pred_region
          %s350 = sand.u32 %s38, 1
          %s351 = scalar_lea.sflag [#allocation11], %s350
          %s352 = sand.u32 %s74, 1
          %s353 = smul.addr %s352, 256
          %s354 = scalar_lea.vmem [#allocation10], %s353
          %s355 = smul.u32 32, %s38
          %357 = vsyncadd %s351, 0
          %s358 = smul.addr %s355, 8
          %s359 = scalar_lea.hbm %s2, %s358
          %s360 = sshll.u32 %s359, 4
          %s361 = int_to_ptr.hbm [resolvable:$true] %s360
          %s362 = sshll.u32 %s354, 4
          %s363 = int_to_ptr.vmem [resolvable:$true] %s362
          %368 = dma.hbm_to_vmem [thread:$0]  %s361, 4096, %s363, %s351, 128, 128, 8
        $region44: #{tpu_custom_call.1} parent=35 // pred_fallthru
          _
      $region36: #{tpu_custom_call.1} parent=5 // pred_fallthru
        _
      %p369 = scmp.le.s32.totalorder 1, %s38
      %p370 = scmp.lt.s32.totalorder %s38, 3
      %p371 = pnand %p369, %p370
      %p372 = pneg %p371
      // Predicated region
      $region45: #{tpu_custom_call.1} parent=5 // pred_check
        _
      $region46: #{tpu_custom_call.1} parent=5 // pred_check_branch
        %374 = sbr.rel (%p371) target = $region48
      $region47: #{tpu_custom_call.1} parent=5 // pred_region
        %s375 = ssub.s32 %s38, 1
        %s376 = sand.u32 %s51, 1
        %s377 = scalar_lea.sflag [#allocation8], %s376
        %s378 = sand.u32 %s51, 1
        %s379 = smul.addr %s378, 16
        %s380 = scalar_lea.vmem [#allocation7], %s379
        // Predicated region
        $region49: #{tpu_custom_call.1} parent=47 // pred_check
          %p381 = pneg %p64
        $region50: #{tpu_custom_call.1} parent=47 // pred_check_branch
          %383 = sbr.rel (%p381) target = $region52
        $region51: #{tpu_custom_call.1} parent=47 // pred_region
          %385 = dma.done %s377, 256
        $region52: #{tpu_custom_call.1} parent=47 // pred_fallthru
          _
        %s386 = sand.u32 %s43, 1
        %s387 = scalar_lea.sflag [#allocation11], %s386
        %s388 = sand.u32 %s77, 1
        %s389 = smul.addr %s388, 256
        %s390 = scalar_lea.vmem [#allocation10], %s389
        // Predicated region
        $region53: #{tpu_custom_call.1} parent=47 // pred_check
          %p391 = pneg %p90
        $region54: #{tpu_custom_call.1} parent=47 // pred_check_branch
          %393 = sbr.rel (%p391) target = $region56
        $region55: #{tpu_custom_call.1} parent=47 // pred_region
          %395 = dma.done %s387, 4096
        $region56: #{tpu_custom_call.1} parent=47 // pred_fallthru
          _
        // Predicated region
        $region57: #{tpu_custom_call.1} parent=47 // pred_check
          %p396 = pneg %p111
        $region58: #{tpu_custom_call.1} parent=47 // pred_check_branch
          %398 = sbr.rel (%p396) target = $region60
        $region59: #{tpu_custom_call.1} parent=47 // pred_region
          %400 = dma.done [#allocation11], 2048
        $region60: #{tpu_custom_call.1} parent=47 // pred_fallthru
          _
        // Predicated region
        $region61: #{tpu_custom_call.1} parent=47 // pred_check
          %p401 = pneg %p132
        $region62: #{tpu_custom_call.1} parent=47 // pred_check_branch
          %403 = sbr.rel (%p401) target = $region64
        $region63: #{tpu_custom_call.1} parent=47 // pred_region
          %405 = dma.done [#allocation14], 2048
        $region64: #{tpu_custom_call.1} parent=47 // pred_fallthru
          _
        // Predicated region
        $region65: #{tpu_custom_call.1} parent=47 // pred_check
          %p406 = pneg %p174
        $region66: #{tpu_custom_call.1} parent=47 // pred_check_branch
          %408 = sbr.rel (%p406) target = $region68
        $region67: #{tpu_custom_call.1} parent=47 // pred_region
          %410 = dma.done [#allocation14], 2048
        $region68: #{tpu_custom_call.1} parent=47 // pred_fallthru
          _
        // Predicated region
        $region69: #{tpu_custom_call.1} parent=47 // pred_check
          %p411 = pneg %p195
        $region70: #{tpu_custom_call.1} parent=47 // pred_check_branch
          %413 = sbr.rel (%p411) target = $region72
        $region71: #{tpu_custom_call.1} parent=47 // pred_region
          %415 = dma.done [#allocation17], 2048
        $region72: #{tpu_custom_call.1} parent=47 // pred_fallthru
          _
        %s416 = sand.u32 %s51, 1
        %s417 = scalar_lea.sflag [#allocation8], %s416
        %s418 = sand.u32 %s51, 1
        %s419 = smul.addr %s418, 16
        %s420 = scalar_lea.vmem [#allocation7], %s419
        %p421 = pneg %p64
        %p422 = pneg %p61
        %s423 = sand.u32 %s43, 1
        %s424 = scalar_lea.sflag [#allocation11], %s423
        %s425 = sand.u32 %s77, 1
        %s426 = smul.addr %s425, 256
        %s427 = scalar_lea.vmem [#allocation10], %s426
        %p428 = pneg %p90
        %p429 = pneg %p87
        %p430 = pneg %p111
        %p431 = pneg %p108
        %p432 = pneg %p132
        %p433 = pneg %p129
        %p434 = pneg %p153
        %p435 = pneg %p150
        %p436 = pneg %p174
        %p437 = pneg %p171
        %p438 = pneg %p195
        %p439 = pneg %p192
        %p440 = pneg %p221
        %p441 = pneg %p218
        %s442 = sand.u32 %s208, 1
        %s443 = scalar_lea.sflag [#allocation9], %s442
        %s444 = sand.u32 %s208, 1
        %s445 = smul.addr %s444, 16
        %s446 = scalar_lea.vmem [#allocation18], %s445
        %p447 = pneg %p247
        %p448 = pneg %p244
        %s449 = sand.u32 %s234, 1
        %s450 = scalar_lea.sflag [#allocation20], %s449
        %s451 = sand.u32 %s234, 1
        %s452 = smul.addr %s451, 16
        %s453 = scalar_lea.vmem [#allocation19], %s452
        %s454 = smul.u32 2, %s43
        %s455 = smul.u32 32, %s43
        %s456 = smul.u32 2, %s43
        %s457 = smul.u32 2, %s43
        %v458 = vld [vmem:[#allocation12] sm:$0xff]
        %v459 = vld [vmem:[#allocation12 + $0x8] sm:$0xff]
        %v460 = vld [vmem:[#allocation12 + $0x10] sm:$0xff]
        %v461 = vld [vmem:[#allocation12 + $0x18] sm:$0xff]
        %v462 = vld [vmem:[#allocation12 + $0x20] sm:$0xff]
        %v463 = vld [vmem:[#allocation12 + $0x28] sm:$0xff]
        %v464 = vld [vmem:[#allocation12 + $0x30] sm:$0xff]
        %v465 = vld [vmem:[#allocation12 + $0x38] sm:$0xff]
        %v466 = vld [vmem:[#allocation12 + $0x40] sm:$0xff]
        %v467 = vld [vmem:[#allocation12 + $0x48] sm:$0xff]
        %v468 = vld [vmem:[#allocation12 + $0x50] sm:$0xff]
        %v469 = vld [vmem:[#allocation12 + $0x58] sm:$0xff]
        %v470 = vld [vmem:[#allocation12 + $0x60] sm:$0xff]
        %v471 = vld [vmem:[#allocation12 + $0x68] sm:$0xff]
        %v472 = vld [vmem:[#allocation12 + $0x70] sm:$0xff]
        %v473 = vld [vmem:[#allocation12 + $0x78] sm:$0xff]
        %v474 = vld [vmem:[%s5] sm:$0x1]
        %v475 = vlaneseq
        %v476 = vand.u32 %v475, 127
        %v477 = vld [vmem:[%s380] sm:$0xff]
        %v478 = vld [vmem:[%s380 + $0x8] sm:$0xff]
        %v479 = vld [vmem:[#allocation13] sm:$0xff]
        %v480 = vld [vmem:[#allocation13 + $0x8] sm:$0xff]
        %v481 = vld [vmem:[#allocation13 + $0x10] sm:$0xff]
        %v482 = vld [vmem:[#allocation13 + $0x18] sm:$0xff]
        %v483 = vld [vmem:[#allocation13 + $0x20] sm:$0xff]
        %v484 = vld [vmem:[#allocation13 + $0x28] sm:$0xff]
        %v485 = vld [vmem:[#allocation13 + $0x30] sm:$0xff]
        %v486 = vld [vmem:[#allocation13 + $0x38] sm:$0xff]
        %v487 = vld [vmem:[#allocation13 + $0x40] sm:$0xff]
        %v488 = vld [vmem:[#allocation13 + $0x48] sm:$0xff]
        %v489 = vld [vmem:[#allocation13 + $0x50] sm:$0xff]
        %v490 = vld [vmem:[#allocation13 + $0x58] sm:$0xff]
        %v491 = vld [vmem:[#allocation13 + $0x60] sm:$0xff]
        %v492 = vld [vmem:[#allocation13 + $0x68] sm:$0xff]
        %v493 = vld [vmem:[#allocation13 + $0x70] sm:$0xff]
        %v494 = vld [vmem:[#allocation13 + $0x78] sm:$0xff]
        %495 = vmatpush.msra.mxu0 %v494
        %496 = vmatpush.msra.mxu0 %v493
        %497 = vmatpush.msra.mxu0 %v492
        %498 = vmatpush.msra.mxu0 %v491
        %499 = vmatpush.msra.mxu0 %v490
        %500 = vmatpush.msra.mxu0 %v489
        %501 = vmatpush.msra.mxu0 %v488
        %502 = vmatpush.msra.mxu0 %v487
        %503 = vmatpush.msra.mxu0 %v486
        %504 = vmatpush.msra.mxu0 %v485
        %505 = vmatpush.msra.mxu0 %v484
        %506 = vmatpush.msra.mxu0 %v483
        %507 = vmatpush.msra.mxu0 %v482
        %508 = vmatpush.msra.mxu0 %v481
        %509 = vmatpush.msra.mxu0 %v480
        %510 = vmatpush.msra.mxu0 %v479
        %511 = vmatmul.f32.gmra.mxu0 %v477
        %v512 = vpop.f32.mrf.mxu0
        %v513 = vadd.f32 0.0, %v512
        %514 = vmatmul.f32.gmra.mxu0 %v478
        %v515 = vpop.f32.mrf.mxu0
        %v516 = vadd.f32 0.0, %v515
        %517 = vdwg.mxu0
        %518 = vst [vmem:[#allocation4] sm:$0xff] %v513
        %519 = vst [vmem:[#allocation4 + $0x8] sm:$0xff] %v516
        %s520 = smul.u32 %s43, 2
        %s521 = sld [smem:[#allocation6 + %s520]]
        %v522 = vld [vmem:[#allocation4] sm:$0xff]
        %v523 = vld [vmem:[%s390] sm:$0xff]
        %v524 = vld [vmem:[%s390 + $0x8] sm:$0xff]
        %v525 = vld [vmem:[%s390 + $0x10] sm:$0xff]
        %v526 = vld [vmem:[%s390 + $0x18] sm:$0xff]
        %v527 = vld [vmem:[%s390 + $0x20] sm:$0xff]
        %v528 = vld [vmem:[%s390 + $0x28] sm:$0xff]
        %v529 = vld [vmem:[%s390 + $0x30] sm:$0xff]
        %v530 = vld [vmem:[%s390 + $0x38] sm:$0xff]
        %v531 = vld [vmem:[%s390 + $0x40] sm:$0xff]
        %v532 = vld [vmem:[%s390 + $0x48] sm:$0xff]
        %v533 = vld [vmem:[%s390 + $0x50] sm:$0xff]
        %v534 = vld [vmem:[%s390 + $0x58] sm:$0xff]
        %v535 = vld [vmem:[%s390 + $0x60] sm:$0xff]
        %v536 = vld [vmem:[%s390 + $0x68] sm:$0xff]
        %v537 = vld [vmem:[%s390 + $0x70] sm:$0xff]
        %v538 = vld [vmem:[%s390 + $0x78] sm:$0xff]
        %539 = vmatpush.msra.mxu0 %v473
        %540 = vmatpush.msra.mxu0 %v472
        %541 = vmatpush.msra.mxu0 %v471
        %542 = vmatpush.msra.mxu0 %v470
        %543 = vmatpush.msra.mxu0 %v469
        %544 = vmatpush.msra.mxu0 %v468
        %545 = vmatpush.msra.mxu0 %v467
        %546 = vmatpush.msra.mxu0 %v466
        %547 = vmatpush.msra.mxu0 %v465
        %548 = vmatpush.msra.mxu0 %v464
        %549 = vmatpush.msra.mxu0 %v463
        %550 = vmatpush.msra.mxu0 %v462
        %551 = vmatpush.msra.mxu0 %v461
        %552 = vmatpush.msra.mxu0 %v460
        %553 = vmatpush.msra.mxu0 %v459
        %554 = vmatpush.msra.mxu0 %v458
        %555 = vmatmul.f32.gmra.mxu0 %v523
        %v556 = vpop.f32.mrf.mxu0
        %v557 = vadd.f32 0.0, %v556
        %558 = vmatmul.f32.gmra.mxu0 %v524
        %v559 = vpop.f32.mrf.mxu0
        %v560 = vadd.f32 0.0, %v559
        %561 = vmatmul.f32.gmra.mxu0 %v525
        %v562 = vpop.f32.mrf.mxu0
        %v563 = vadd.f32 0.0, %v562
        %564 = vmatmul.f32.gmra.mxu0 %v526
        %v565 = vpop.f32.mrf.mxu0
        %v566 = vadd.f32 0.0, %v565
        %567 = vmatmul.f32.gmra.mxu0 %v527
        %v568 = vpop.f32.mrf.mxu0
        %v569 = vadd.f32 0.0, %v568
        %570 = vmatmul.f32.gmra.mxu0 %v528
        %v571 = vpop.f32.mrf.mxu0
        %v572 = vadd.f32 0.0, %v571
        %573 = vmatmul.f32.gmra.mxu0 %v529
        %v574 = vpop.f32.mrf.mxu0
        %v575 = vadd.f32 0.0, %v574
        %576 = vmatmul.f32.gmra.mxu0 %v530
        %v577 = vpop.f32.mrf.mxu0
        %v578 = vadd.f32 0.0, %v577
        %579 = vmatmul.f32.gmra.mxu0 %v531
        %v580 = vpop.f32.mrf.mxu0
        %v581 = vadd.f32 0.0, %v580
        %582 = vmatmul.f32.gmra.mxu0 %v532
        %v583 = vpop.f32.mrf.mxu0
        %v584 = vadd.f32 0.0, %v583
        %585 = vmatmul.f32.gmra.mxu0 %v533
        %v586 = vpop.f32.mrf.mxu0
        %v587 = vadd.f32 0.0, %v586
        %588 = vmatmul.f32.gmra.mxu0 %v534
        %v589 = vpop.f32.mrf.mxu0
        %v590 = vadd.f32 0.0, %v589
        %591 = vmatmul.f32.gmra.mxu0 %v535
        %v592 = vpop.f32.mrf.mxu0
        %v593 = vadd.f32 0.0, %v592
        %594 = vmatmul.f32.gmra.mxu0 %v536
        %v595 = vpop.f32.mrf.mxu0
        %v596 = vadd.f32 0.0, %v595
        %597 = vmatmul.f32.gmra.mxu0 %v537
        %v598 = vpop.f32.mrf.mxu0
        %v599 = vadd.f32 0.0, %v598
        %600 = vmatmul.f32.gmra.mxu0 %v538
        %v601 = vpop.f32.mrf.mxu0
        %v602 = vadd.f32 0.0, %v601
        %603 = vdwg.mxu0
        %v605 = vrot.slane %v522, 1
        %v606 = vrot.slane %v522, 2
        %v607 = vrot.slane %v522, 3
        %v608 = vrot.slane %v522, 4
        %v609 = vrot.slane %v522, 5
        %v610 = vrot.slane %v522, 6
        %v611 = vrot.slane %v522, 7
        %v612 = vperm.slane %v522, 0
        %v613 = vperm.slane %v605, 0
        %v614 = vperm.slane %v606, 0
        %v615 = vperm.slane %v607, 0
        %v616 = vperm.slane %v608, 0
        %v617 = vperm.slane %v609, 0
        %v618 = vperm.slane %v610, 0
        %v619 = vperm.slane %v611, 0
        %v628 = vadd.f32 %v612, %v557
        %v629 = vadd.f32 %v612, %v560
        %v630 = vadd.f32 %v612, %v563
        %v631 = vadd.f32 %v612, %v566
        %v632 = vadd.f32 %v612, %v569
        %v633 = vadd.f32 %v612, %v572
        %v634 = vadd.f32 %v612, %v575
        %v635 = vadd.f32 %v612, %v578
        %v636 = vadd.f32 %v612, %v581
        %v637 = vadd.f32 %v612, %v584
        %v638 = vadd.f32 %v612, %v587
        %v639 = vadd.f32 %v612, %v590
        %v640 = vadd.f32 %v612, %v593
        %v641 = vadd.f32 %v612, %v596
        %v642 = vadd.f32 %v612, %v599
        %v643 = vadd.f32 %v612, %v602
        %v644 = vadd.f32 %v613, %v557
        %v645 = vadd.f32 %v613, %v560
        %v646 = vadd.f32 %v613, %v563
        %v647 = vadd.f32 %v613, %v566
        %v648 = vadd.f32 %v613, %v569
        %v649 = vadd.f32 %v613, %v572
        %v650 = vadd.f32 %v613, %v575
        %v651 = vadd.f32 %v613, %v578
        %v652 = vadd.f32 %v613, %v581
        %v653 = vadd.f32 %v613, %v584
        %v654 = vadd.f32 %v613, %v587
        %v655 = vadd.f32 %v613, %v590
        %v656 = vadd.f32 %v613, %v593
        %v657 = vadd.f32 %v613, %v596
        %v658 = vadd.f32 %v613, %v599
        %v659 = vadd.f32 %v613, %v602
        %v660 = vadd.f32 %v614, %v557
        %v661 = vadd.f32 %v614, %v560
        %v662 = vadd.f32 %v614, %v563
        %v663 = vadd.f32 %v614, %v566
        %v664 = vadd.f32 %v614, %v569
        %v665 = vadd.f32 %v614, %v572
        %v666 = vadd.f32 %v614, %v575
        %v667 = vadd.f32 %v614, %v578
        %v668 = vadd.f32 %v614, %v581
        %v669 = vadd.f32 %v614, %v584
        %v670 = vadd.f32 %v614, %v587
        %v671 = vadd.f32 %v614, %v590
        %v672 = vadd.f32 %v614, %v593
        %v673 = vadd.f32 %v614, %v596
        %v674 = vadd.f32 %v614, %v599
        %v675 = vadd.f32 %v614, %v602
        %v676 = vadd.f32 %v615, %v557
        %v677 = vadd.f32 %v615, %v560
        %v678 = vadd.f32 %v615, %v563
        %v679 = vadd.f32 %v615, %v566
        %v680 = vadd.f32 %v615, %v569
        %v681 = vadd.f32 %v615, %v572
        %v682 = vadd.f32 %v615, %v575
        %v683 = vadd.f32 %v615, %v578
        %v684 = vadd.f32 %v615, %v581
        %v685 = vadd.f32 %v615, %v584
        %v686 = vadd.f32 %v615, %v587
        %v687 = vadd.f32 %v615, %v590
        %v688 = vadd.f32 %v615, %v593
        %v689 = vadd.f32 %v615, %v596
        %v690 = vadd.f32 %v615, %v599
        %v691 = vadd.f32 %v615, %v602
        %v692 = vadd.f32 %v616, %v557
        %v693 = vadd.f32 %v616, %v560
        %v694 = vadd.f32 %v616, %v563
        %v695 = vadd.f32 %v616, %v566
        %v696 = vadd.f32 %v616, %v569
        %v697 = vadd.f32 %v616, %v572
        %v698 = vadd.f32 %v616, %v575
        %v699 = vadd.f32 %v616, %v578
        %v700 = vadd.f32 %v616, %v581
        %v701 = vadd.f32 %v616, %v584
        %v702 = vadd.f32 %v616, %v587
        %v703 = vadd.f32 %v616, %v590
        %v704 = vadd.f32 %v616, %v593
        %v705 = vadd.f32 %v616, %v596
        %v706 = vadd.f32 %v616, %v599
        %v707 = vadd.f32 %v616, %v602
        %v708 = vadd.f32 %v617, %v557
        %v709 = vadd.f32 %v617, %v560
        %v710 = vadd.f32 %v617, %v563
        %v711 = vadd.f32 %v617, %v566
        %v712 = vadd.f32 %v617, %v569
        %v713 = vadd.f32 %v617, %v572
        %v714 = vadd.f32 %v617, %v575
        %v715 = vadd.f32 %v617, %v578
        %v716 = vadd.f32 %v617, %v581
        %v717 = vadd.f32 %v617, %v584
        %v718 = vadd.f32 %v617, %v587
        %v719 = vadd.f32 %v617, %v590
        %v720 = vadd.f32 %v617, %v593
        %v721 = vadd.f32 %v617, %v596
        %v722 = vadd.f32 %v617, %v599
        %v723 = vadd.f32 %v617, %v602
        %v724 = vadd.f32 %v618, %v557
        %v725 = vadd.f32 %v618, %v560
        %v726 = vadd.f32 %v618, %v563
        %v727 = vadd.f32 %v618, %v566
        %v728 = vadd.f32 %v618, %v569
        %v729 = vadd.f32 %v618, %v572
        %v730 = vadd.f32 %v618, %v575
        %v731 = vadd.f32 %v618, %v578
        %v732 = vadd.f32 %v618, %v581
        %v733 = vadd.f32 %v618, %v584
        %v734 = vadd.f32 %v618, %v587
        %v735 = vadd.f32 %v618, %v590
        %v736 = vadd.f32 %v618, %v593
        %v737 = vadd.f32 %v618, %v596
        %v738 = vadd.f32 %v618, %v599
        %v739 = vadd.f32 %v618, %v602
        %v740 = vadd.f32 %v619, %v557
        %v741 = vadd.f32 %v619, %v560
        %v742 = vadd.f32 %v619, %v563
        %v743 = vadd.f32 %v619, %v566
        %v744 = vadd.f32 %v619, %v569
        %v745 = vadd.f32 %v619, %v572
        %v746 = vadd.f32 %v619, %v575
        %v747 = vadd.f32 %v619, %v578
        %v748 = vadd.f32 %v619, %v581
        %v749 = vadd.f32 %v619, %v584
        %v750 = vadd.f32 %v619, %v587
        %v751 = vadd.f32 %v619, %v590
        %v752 = vadd.f32 %v619, %v593
        %v753 = vadd.f32 %v619, %v596
        %v754 = vadd.f32 %v619, %v599
        %v755 = vadd.f32 %v619, %v602
        %v756 = vtanh.pop %v628
        %v757 = vtanh.pop %v629
        %v758 = vtanh.pop %v630
        %v759 = vtanh.pop %v631
        %v760 = vtanh.pop %v632
        %v761 = vtanh.pop %v633
        %v762 = vtanh.pop %v634
        %v763 = vtanh.pop %v635
        %v764 = vtanh.pop %v636
        %v765 = vtanh.pop %v637
        %v766 = vtanh.pop %v638
        %v767 = vtanh.pop %v639
        %v768 = vtanh.pop %v640
        %v769 = vtanh.pop %v641
        %v770 = vtanh.pop %v642
        %v771 = vtanh.pop %v643
        %v772 = vtanh.pop %v644
        %v773 = vtanh.pop %v645
        %v774 = vtanh.pop %v646
        %v775 = vtanh.pop %v647
        %v776 = vtanh.pop %v648
        %v777 = vtanh.pop %v649
        %v778 = vtanh.pop %v650
        %v779 = vtanh.pop %v651
        %v780 = vtanh.pop %v652
        %v781 = vtanh.pop %v653
        %v782 = vtanh.pop %v654
        %v783 = vtanh.pop %v655
        %v784 = vtanh.pop %v656
        %v785 = vtanh.pop %v657
        %v786 = vtanh.pop %v658
        %v787 = vtanh.pop %v659
        %v788 = vtanh.pop %v660
        %v789 = vtanh.pop %v661
        %v790 = vtanh.pop %v662
        %v791 = vtanh.pop %v663
        %v792 = vtanh.pop %v664
        %v793 = vtanh.pop %v665
        %v794 = vtanh.pop %v666
        %v795 = vtanh.pop %v667
        %v796 = vtanh.pop %v668
        %v797 = vtanh.pop %v669
        %v798 = vtanh.pop %v670
        %v799 = vtanh.pop %v671
        %v800 = vtanh.pop %v672
        %v801 = vtanh.pop %v673
        %v802 = vtanh.pop %v674
        %v803 = vtanh.pop %v675
        %v804 = vtanh.pop %v676
        %v805 = vtanh.pop %v677
        %v806 = vtanh.pop %v678
        %v807 = vtanh.pop %v679
        %v808 = vtanh.pop %v680
        %v809 = vtanh.pop %v681
        %v810 = vtanh.pop %v682
        %v811 = vtanh.pop %v683
        %v812 = vtanh.pop %v684
        %v813 = vtanh.pop %v685
        %v814 = vtanh.pop %v686
        %v815 = vtanh.pop %v687
        %v816 = vtanh.pop %v688
        %v817 = vtanh.pop %v689
        %v818 = vtanh.pop %v690
        %v819 = vtanh.pop %v691
        %v820 = vtanh.pop %v692
        %v821 = vtanh.pop %v693
        %v822 = vtanh.pop %v694
        %v823 = vtanh.pop %v695
        %v824 = vtanh.pop %v696
        %v825 = vtanh.pop %v697
        %v826 = vtanh.pop %v698
        %v827 = vtanh.pop %v699
        %v828 = vtanh.pop %v700
        %v829 = vtanh.pop %v701
        %v830 = vtanh.pop %v702
        %v831 = vtanh.pop %v703
        %v832 = vtanh.pop %v704
        %v833 = vtanh.pop %v705
        %v834 = vtanh.pop %v706
        %v835 = vtanh.pop %v707
        %v836 = vtanh.pop %v708
        %v837 = vtanh.pop %v709
        %v838 = vtanh.pop %v710
        %v839 = vtanh.pop %v711
        %v840 = vtanh.pop %v712
        %v841 = vtanh.pop %v713
        %v842 = vtanh.pop %v714
        %v843 = vtanh.pop %v715
        %v844 = vtanh.pop %v716
        %v845 = vtanh.pop %v717
        %v846 = vtanh.pop %v718
        %v847 = vtanh.pop %v719
        %v848 = vtanh.pop %v720
        %v849 = vtanh.pop %v721
        %v850 = vtanh.pop %v722
        %v851 = vtanh.pop %v723
        %v852 = vtanh.pop %v724
        %v853 = vtanh.pop %v725
        %v854 = vtanh.pop %v726
        %v855 = vtanh.pop %v727
        %v856 = vtanh.pop %v728
        %v857 = vtanh.pop %v729
        %v858 = vtanh.pop %v730
        %v859 = vtanh.pop %v731
        %v860 = vtanh.pop %v732
        %v861 = vtanh.pop %v733
        %v862 = vtanh.pop %v734
        %v863 = vtanh.pop %v735
        %v864 = vtanh.pop %v736
        %v865 = vtanh.pop %v737
        %v866 = vtanh.pop %v738
        %v867 = vtanh.pop %v739
        %v868 = vtanh.pop %v740
        %v869 = vtanh.pop %v741
        %v870 = vtanh.pop %v742
        %v871 = vtanh.pop %v743
        %v872 = vtanh.pop %v744
        %v873 = vtanh.pop %v745
        %v874 = vtanh.pop %v746
        %v875 = vtanh.pop %v747
        %v876 = vtanh.pop %v748
        %v877 = vtanh.pop %v749
        %v878 = vtanh.pop %v750
        %v879 = vtanh.pop %v751
        %v880 = vtanh.pop %v752
        %v881 = vtanh.pop %v753
        %v882 = vtanh.pop %v754
        %v883 = vtanh.pop %v755
        %v885 = vperm.slane %v474, 0
        %v887 = vmul.f32 %v756, %v885
        %v888 = vmul.f32 %v757, %v885
        %v889 = vmul.f32 %v758, %v885
        %v890 = vmul.f32 %v759, %v885
        %v891 = vmul.f32 %v760, %v885
        %v892 = vmul.f32 %v761, %v885
        %v893 = vmul.f32 %v762, %v885
        %v894 = vmul.f32 %v763, %v885
        %v895 = vmul.f32 %v764, %v885
        %v896 = vmul.f32 %v765, %v885
        %v897 = vmul.f32 %v766, %v885
        %v898 = vmul.f32 %v767, %v885
        %v899 = vmul.f32 %v768, %v885
        %v900 = vmul.f32 %v769, %v885
        %v901 = vmul.f32 %v770, %v885
        %v902 = vmul.f32 %v771, %v885
        %v903 = vmul.f32 %v772, %v885
        %v904 = vmul.f32 %v773, %v885
        %v905 = vmul.f32 %v774, %v885
        %v906 = vmul.f32 %v775, %v885
        %v907 = vmul.f32 %v776, %v885
        %v908 = vmul.f32 %v777, %v885
        %v909 = vmul.f32 %v778, %v885
        %v910 = vmul.f32 %v779, %v885
        %v911 = vmul.f32 %v780, %v885
        %v912 = vmul.f32 %v781, %v885
        %v913 = vmul.f32 %v782, %v885
        %v914 = vmul.f32 %v783, %v885
        %v915 = vmul.f32 %v784, %v885
        %v916 = vmul.f32 %v785, %v885
        %v917 = vmul.f32 %v786, %v885
        %v918 = vmul.f32 %v787, %v885
        %v919 = vmul.f32 %v788, %v885
        %v920 = vmul.f32 %v789, %v885
        %v921 = vmul.f32 %v790, %v885
        %v922 = vmul.f32 %v791, %v885
        %v923 = vmul.f32 %v792, %v885
        %v924 = vmul.f32 %v793, %v885
        %v925 = vmul.f32 %v794, %v885
        %v926 = vmul.f32 %v795, %v885
        %v927 = vmul.f32 %v796, %v885
        %v928 = vmul.f32 %v797, %v885
        %v929 = vmul.f32 %v798, %v885
        %v930 = vmul.f32 %v799, %v885
        %v931 = vmul.f32 %v800, %v885
        %v932 = vmul.f32 %v801, %v885
        %v933 = vmul.f32 %v802, %v885
        %v934 = vmul.f32 %v803, %v885
        %v935 = vmul.f32 %v804, %v885
        %v936 = vmul.f32 %v805, %v885
        %v937 = vmul.f32 %v806, %v885
        %v938 = vmul.f32 %v807, %v885
        %v939 = vmul.f32 %v808, %v885
        %v940 = vmul.f32 %v809, %v885
        %v941 = vmul.f32 %v810, %v885
        %v942 = vmul.f32 %v811, %v885
        %v943 = vmul.f32 %v812, %v885
        %v944 = vmul.f32 %v813, %v885
        %v945 = vmul.f32 %v814, %v885
        %v946 = vmul.f32 %v815, %v885
        %v947 = vmul.f32 %v816, %v885
        %v948 = vmul.f32 %v817, %v885
        %v949 = vmul.f32 %v818, %v885
        %v950 = vmul.f32 %v819, %v885
        %v951 = vmul.f32 %v820, %v885
        %v952 = vmul.f32 %v821, %v885
        %v953 = vmul.f32 %v822, %v885
        %v954 = vmul.f32 %v823, %v885
        %v955 = vmul.f32 %v824, %v885
        %v956 = vmul.f32 %v825, %v885
        %v957 = vmul.f32 %v826, %v885
        %v958 = vmul.f32 %v827, %v885
        %v959 = vmul.f32 %v828, %v885
        %v960 = vmul.f32 %v829, %v885
        %v961 = vmul.f32 %v830, %v885
        %v962 = vmul.f32 %v831, %v885
        %v963 = vmul.f32 %v832, %v885
        %v964 = vmul.f32 %v833, %v885
        %v965 = vmul.f32 %v834, %v885
        %v966 = vmul.f32 %v835, %v885
        %v967 = vmul.f32 %v836, %v885
        %v968 = vmul.f32 %v837, %v885
        %v969 = vmul.f32 %v838, %v885
        %v970 = vmul.f32 %v839, %v885
        %v971 = vmul.f32 %v840, %v885
        %v972 = vmul.f32 %v841, %v885
        %v973 = vmul.f32 %v842, %v885
        %v974 = vmul.f32 %v843, %v885
        %v975 = vmul.f32 %v844, %v885
        %v976 = vmul.f32 %v845, %v885
        %v977 = vmul.f32 %v846, %v885
        %v978 = vmul.f32 %v847, %v885
        %v979 = vmul.f32 %v848, %v885
        %v980 = vmul.f32 %v849, %v885
        %v981 = vmul.f32 %v850, %v885
        %v982 = vmul.f32 %v851, %v885
        %v983 = vmul.f32 %v852, %v885
        %v984 = vmul.f32 %v853, %v885
        %v985 = vmul.f32 %v854, %v885
        %v986 = vmul.f32 %v855, %v885
        %v987 = vmul.f32 %v856, %v885
        %v988 = vmul.f32 %v857, %v885
        %v989 = vmul.f32 %v858, %v885
        %v990 = vmul.f32 %v859, %v885
        %v991 = vmul.f32 %v860, %v885
        %v992 = vmul.f32 %v861, %v885
        %v993 = vmul.f32 %v862, %v885
        %v994 = vmul.f32 %v863, %v885
        %v995 = vmul.f32 %v864, %v885
        %v996 = vmul.f32 %v865, %v885
        %v997 = vmul.f32 %v866, %v885
        %v998 = vmul.f32 %v867, %v885
        %v999 = vmul.f32 %v868, %v885
        %v1000 = vmul.f32 %v869, %v885
        %v1001 = vmul.f32 %v870, %v885
        %v1002 = vmul.f32 %v871, %v885
        %v1003 = vmul.f32 %v872, %v885
        %v1004 = vmul.f32 %v873, %v885
        %v1005 = vmul.f32 %v874, %v885
        %v1006 = vmul.f32 %v875, %v885
        %v1007 = vmul.f32 %v876, %v885
        %v1008 = vmul.f32 %v877, %v885
        %v1009 = vmul.f32 %v878, %v885
        %v1010 = vmul.f32 %v879, %v885
        %v1011 = vmul.f32 %v880, %v885
        %v1012 = vmul.f32 %v881, %v885
        %v1013 = vmul.f32 %v882, %v885
        %v1014 = vmul.f32 %v883, %v885
        %1015 = vadd.xlane.f32.xlu0 %v887
        %v1016 = vpop.xlane.xlu0 %1015
        %1017 = vadd.xlane.f32.xlu0 %v888
        %v1018 = vpop.xlane.xlu0 %1017
        %1019 = vadd.xlane.f32.xlu0 %v889
        %v1020 = vpop.xlane.xlu0 %1019
        %1021 = vadd.xlane.f32.xlu0 %v890
        %v1022 = vpop.xlane.xlu0 %1021
        %1023 = vadd.xlane.f32.xlu0 %v891
        %v1024 = vpop.xlane.xlu0 %1023
        %1025 = vadd.xlane.f32.xlu0 %v892
        %v1026 = vpop.xlane.xlu0 %1025
        %1027 = vadd.xlane.f32.xlu0 %v893
        %v1028 = vpop.xlane.xlu0 %1027
        %1029 = vadd.xlane.f32.xlu0 %v894
        %v1030 = vpop.xlane.xlu0 %1029
        %1031 = vadd.xlane.f32.xlu0 %v895
        %v1032 = vpop.xlane.xlu0 %1031
        %1033 = vadd.xlane.f32.xlu0 %v896
        %v1034 = vpop.xlane.xlu0 %1033
        %1035 = vadd.xlane.f32.xlu0 %v897
        %v1036 = vpop.xlane.xlu0 %1035
        %1037 = vadd.xlane.f32.xlu0 %v898
        %v1038 = vpop.xlane.xlu0 %1037
        %1039 = vadd.xlane.f32.xlu0 %v899
        %v1040 = vpop.xlane.xlu0 %1039
        %1041 = vadd.xlane.f32.xlu0 %v900
        %v1042 = vpop.xlane.xlu0 %1041
        %1043 = vadd.xlane.f32.xlu0 %v901
        %v1044 = vpop.xlane.xlu0 %1043
        %1045 = vadd.xlane.f32.xlu0 %v902
        %v1046 = vpop.xlane.xlu0 %1045
        %1047 = vadd.xlane.f32.xlu0 %v903
        %v1048 = vpop.xlane.xlu0 %1047
        %1049 = vadd.xlane.f32.xlu0 %v904
        %v1050 = vpop.xlane.xlu0 %1049
        %1051 = vadd.xlane.f32.xlu0 %v905
        %v1052 = vpop.xlane.xlu0 %1051
        %1053 = vadd.xlane.f32.xlu0 %v906
        %v1054 = vpop.xlane.xlu0 %1053
        %1055 = vadd.xlane.f32.xlu0 %v907
        %v1056 = vpop.xlane.xlu0 %1055
        %1057 = vadd.xlane.f32.xlu0 %v908
        %v1058 = vpop.xlane.xlu0 %1057
        %1059 = vadd.xlane.f32.xlu0 %v909
        %v1060 = vpop.xlane.xlu0 %1059
        %1061 = vadd.xlane.f32.xlu0 %v910
        %v1062 = vpop.xlane.xlu0 %1061
        %1063 = vadd.xlane.f32.xlu0 %v911
        %v1064 = vpop.xlane.xlu0 %1063
        %1065 = vadd.xlane.f32.xlu0 %v912
        %v1066 = vpop.xlane.xlu0 %1065
        %1067 = vadd.xlane.f32.xlu0 %v913
        %v1068 = vpop.xlane.xlu0 %1067
        %1069 = vadd.xlane.f32.xlu0 %v914
        %v1070 = vpop.xlane.xlu0 %1069
        %1071 = vadd.xlane.f32.xlu0 %v915
        %v1072 = vpop.xlane.xlu0 %1071
        %1073 = vadd.xlane.f32.xlu0 %v916
        %v1074 = vpop.xlane.xlu0 %1073
        %1075 = vadd.xlane.f32.xlu0 %v917
        %v1076 = vpop.xlane.xlu0 %1075
        %1077 = vadd.xlane.f32.xlu0 %v918
        %v1078 = vpop.xlane.xlu0 %1077
        %1079 = vadd.xlane.f32.xlu0 %v919
        %v1080 = vpop.xlane.xlu0 %1079
        %1081 = vadd.xlane.f32.xlu0 %v920
        %v1082 = vpop.xlane.xlu0 %1081
        %1083 = vadd.xlane.f32.xlu0 %v921
        %v1084 = vpop.xlane.xlu0 %1083
        %1085 = vadd.xlane.f32.xlu0 %v922
        %v1086 = vpop.xlane.xlu0 %1085
        %1087 = vadd.xlane.f32.xlu0 %v923
        %v1088 = vpop.xlane.xlu0 %1087
        %1089 = vadd.xlane.f32.xlu0 %v924
        %v1090 = vpop.xlane.xlu0 %1089
        %1091 = vadd.xlane.f32.xlu0 %v925
        %v1092 = vpop.xlane.xlu0 %1091
        %1093 = vadd.xlane.f32.xlu0 %v926
        %v1094 = vpop.xlane.xlu0 %1093
        %1095 = vadd.xlane.f32.xlu0 %v927
        %v1096 = vpop.xlane.xlu0 %1095
        %1097 = vadd.xlane.f32.xlu0 %v928
        %v1098 = vpop.xlane.xlu0 %1097
        %1099 = vadd.xlane.f32.xlu0 %v929
        %v1100 = vpop.xlane.xlu0 %1099
        %1101 = vadd.xlane.f32.xlu0 %v930
        %v1102 = vpop.xlane.xlu0 %1101
        %1103 = vadd.xlane.f32.xlu0 %v931
        %v1104 = vpop.xlane.xlu0 %1103
        %1105 = vadd.xlane.f32.xlu0 %v932
        %v1106 = vpop.xlane.xlu0 %1105
        %1107 = vadd.xlane.f32.xlu0 %v933
        %v1108 = vpop.xlane.xlu0 %1107
        %1109 = vadd.xlane.f32.xlu0 %v934
        %v1110 = vpop.xlane.xlu0 %1109
        %1111 = vadd.xlane.f32.xlu0 %v935
        %v1112 = vpop.xlane.xlu0 %1111
        %1113 = vadd.xlane.f32.xlu0 %v936
        %v1114 = vpop.xlane.xlu0 %1113
        %1115 = vadd.xlane.f32.xlu0 %v937
        %v1116 = vpop.xlane.xlu0 %1115
        %1117 = vadd.xlane.f32.xlu0 %v938
        %v1118 = vpop.xlane.xlu0 %1117
        %1119 = vadd.xlane.f32.xlu0 %v939
        %v1120 = vpop.xlane.xlu0 %1119
        %1121 = vadd.xlane.f32.xlu0 %v940
        %v1122 = vpop.xlane.xlu0 %1121
        %1123 = vadd.xlane.f32.xlu0 %v941
        %v1124 = vpop.xlane.xlu0 %1123
        %1125 = vadd.xlane.f32.xlu0 %v942
        %v1126 = vpop.xlane.xlu0 %1125
        %1127 = vadd.xlane.f32.xlu0 %v943
        %v1128 = vpop.xlane.xlu0 %1127
        %1129 = vadd.xlane.f32.xlu0 %v944
        %v1130 = vpop.xlane.xlu0 %1129
        %1131 = vadd.xlane.f32.xlu0 %v945
        %v1132 = vpop.xlane.xlu0 %1131
        %1133 = vadd.xlane.f32.xlu0 %v946
        %v1134 = vpop.xlane.xlu0 %1133
        %1135 = vadd.xlane.f32.xlu0 %v947
        %v1136 = vpop.xlane.xlu0 %1135
        %1137 = vadd.xlane.f32.xlu0 %v948
        %v1138 = vpop.xlane.xlu0 %1137
        %1139 = vadd.xlane.f32.xlu0 %v949
        %v1140 = vpop.xlane.xlu0 %1139
        %1141 = vadd.xlane.f32.xlu0 %v950
        %v1142 = vpop.xlane.xlu0 %1141
        %1143 = vadd.xlane.f32.xlu0 %v951
        %v1144 = vpop.xlane.xlu0 %1143
        %1145 = vadd.xlane.f32.xlu0 %v952
        %v1146 = vpop.xlane.xlu0 %1145
        %1147 = vadd.xlane.f32.xlu0 %v953
        %v1148 = vpop.xlane.xlu0 %1147
        %1149 = vadd.xlane.f32.xlu0 %v954
        %v1150 = vpop.xlane.xlu0 %1149
        %1151 = vadd.xlane.f32.xlu0 %v955
        %v1152 = vpop.xlane.xlu0 %1151
        %1153 = vadd.xlane.f32.xlu0 %v956
        %v1154 = vpop.xlane.xlu0 %1153
        %1155 = vadd.xlane.f32.xlu0 %v957
        %v1156 = vpop.xlane.xlu0 %1155
        %1157 = vadd.xlane.f32.xlu0 %v958
        %v1158 = vpop.xlane.xlu0 %1157
        %1159 = vadd.xlane.f32.xlu0 %v959
        %v1160 = vpop.xlane.xlu0 %1159
        %1161 = vadd.xlane.f32.xlu0 %v960
        %v1162 = vpop.xlane.xlu0 %1161
        %1163 = vadd.xlane.f32.xlu0 %v961
        %v1164 = vpop.xlane.xlu0 %1163
        %1165 = vadd.xlane.f32.xlu0 %v962
        %v1166 = vpop.xlane.xlu0 %1165
        %1167 = vadd.xlane.f32.xlu0 %v963
        %v1168 = vpop.xlane.xlu0 %1167
        %1169 = vadd.xlane.f32.xlu0 %v964
        %v1170 = vpop.xlane.xlu0 %1169
        %1171 = vadd.xlane.f32.xlu0 %v965
        %v1172 = vpop.xlane.xlu0 %1171
        %1173 = vadd.xlane.f32.xlu0 %v966
        %v1174 = vpop.xlane.xlu0 %1173
        %1175 = vadd.xlane.f32.xlu0 %v967
        %v1176 = vpop.xlane.xlu0 %1175
        %1177 = vadd.xlane.f32.xlu0 %v968
        %v1178 = vpop.xlane.xlu0 %1177
        %1179 = vadd.xlane.f32.xlu0 %v969
        %v1180 = vpop.xlane.xlu0 %1179
        %1181 = vadd.xlane.f32.xlu0 %v970
        %v1182 = vpop.xlane.xlu0 %1181
        %1183 = vadd.xlane.f32.xlu0 %v971
        %v1184 = vpop.xlane.xlu0 %1183
        %1185 = vadd.xlane.f32.xlu0 %v972
        %v1186 = vpop.xlane.xlu0 %1185
        %1187 = vadd.xlane.f32.xlu0 %v973
        %v1188 = vpop.xlane.xlu0 %1187
        %1189 = vadd.xlane.f32.xlu0 %v974
        %v1190 = vpop.xlane.xlu0 %1189
        %1191 = vadd.xlane.f32.xlu0 %v975
        %v1192 = vpop.xlane.xlu0 %1191
        %1193 = vadd.xlane.f32.xlu0 %v976
        %v1194 = vpop.xlane.xlu0 %1193
        %1195 = vadd.xlane.f32.xlu0 %v977
        %v1196 = vpop.xlane.xlu0 %1195
        %1197 = vadd.xlane.f32.xlu0 %v978
        %v1198 = vpop.xlane.xlu0 %1197
        %1199 = vadd.xlane.f32.xlu0 %v979
        %v1200 = vpop.xlane.xlu0 %1199
        %1201 = vadd.xlane.f32.xlu0 %v980
        %v1202 = vpop.xlane.xlu0 %1201
        %1203 = vadd.xlane.f32.xlu0 %v981
        %v1204 = vpop.xlane.xlu0 %1203
        %1205 = vadd.xlane.f32.xlu0 %v982
        %v1206 = vpop.xlane.xlu0 %1205
        %1207 = vadd.xlane.f32.xlu0 %v983
        %v1208 = vpop.xlane.xlu0 %1207
        %1209 = vadd.xlane.f32.xlu0 %v984
        %v1210 = vpop.xlane.xlu0 %1209
        %1211 = vadd.xlane.f32.xlu0 %v985
        %v1212 = vpop.xlane.xlu0 %1211
        %1213 = vadd.xlane.f32.xlu0 %v986
        %v1214 = vpop.xlane.xlu0 %1213
        %1215 = vadd.xlane.f32.xlu0 %v987
        %v1216 = vpop.xlane.xlu0 %1215
        %1217 = vadd.xlane.f32.xlu0 %v988
        %v1218 = vpop.xlane.xlu0 %1217
        %1219 = vadd.xlane.f32.xlu0 %v989
        %v1220 = vpop.xlane.xlu0 %1219
        %1221 = vadd.xlane.f32.xlu0 %v990
        %v1222 = vpop.xlane.xlu0 %1221
        %1223 = vadd.xlane.f32.xlu0 %v991
        %v1224 = vpop.xlane.xlu0 %1223
        %1225 = vadd.xlane.f32.xlu0 %v992
        %v1226 = vpop.xlane.xlu0 %1225
        %1227 = vadd.xlane.f32.xlu0 %v993
        %v1228 = vpop.xlane.xlu0 %1227
        %1229 = vadd.xlane.f32.xlu0 %v994
        %v1230 = vpop.xlane.xlu0 %1229
        %1231 = vadd.xlane.f32.xlu0 %v995
        %v1232 = vpop.xlane.xlu0 %1231
        %1233 = vadd.xlane.f32.xlu0 %v996
        %v1234 = vpop.xlane.xlu0 %1233
        %1235 = vadd.xlane.f32.xlu0 %v997
        %v1236 = vpop.xlane.xlu0 %1235
        %1237 = vadd.xlane.f32.xlu0 %v998
        %v1238 = vpop.xlane.xlu0 %1237
        %1239 = vadd.xlane.f32.xlu0 %v999
        %v1240 = vpop.xlane.xlu0 %1239
        %1241 = vadd.xlane.f32.xlu0 %v1000
        %v1242 = vpop.xlane.xlu0 %1241
        %1243 = vadd.xlane.f32.xlu0 %v1001
        %v1244 = vpop.xlane.xlu0 %1243
        %1245 = vadd.xlane.f32.xlu0 %v1002
        %v1246 = vpop.xlane.xlu0 %1245
        %1247 = vadd.xlane.f32.xlu0 %v1003
        %v1248 = vpop.xlane.xlu0 %1247
        %1249 = vadd.xlane.f32.xlu0 %v1004
        %v1250 = vpop.xlane.xlu0 %1249
        %1251 = vadd.xlane.f32.xlu0 %v1005
        %v1252 = vpop.xlane.xlu0 %1251
        %1253 = vadd.xlane.f32.xlu0 %v1006
        %v1254 = vpop.xlane.xlu0 %1253
        %1255 = vadd.xlane.f32.xlu0 %v1007
        %v1256 = vpop.xlane.xlu0 %1255
        %1257 = vadd.xlane.f32.xlu0 %v1008
        %v1258 = vpop.xlane.xlu0 %1257
        %1259 = vadd.xlane.f32.xlu0 %v1009
        %v1260 = vpop.xlane.xlu0 %1259
        %1261 = vadd.xlane.f32.xlu0 %v1010
        %v1262 = vpop.xlane.xlu0 %1261
        %1263 = vadd.xlane.f32.xlu0 %v1011
        %v1264 = vpop.xlane.xlu0 %1263
        %1265 = vadd.xlane.f32.xlu0 %v1012
        %v1266 = vpop.xlane.xlu0 %1265
        %1267 = vadd.xlane.f32.xlu0 %v1013
        %v1268 = vpop.xlane.xlu0 %1267
        %1269 = vadd.xlane.f32.xlu0 %v1014
        %v1270 = vpop.xlane.xlu0 %1269
        %v1399 = vperm.slane %v1016, %v476
        %v1400 = vadd.s32 %v476, 4294967288
        %v1401 = vperm.slane %v1018, %v1400
        %vm1402 = vcmask 130112
        %v1403 = vsel %vm1402, %v1401, %v1399
        %v1404 = vadd.s32 %v476, 4294967280
        %v1405 = vperm.slane %v1020, %v1404
        %vm1406 = vcmask 195712
        %v1407 = vsel %vm1406, %v1405, %v1403
        %v1408 = vadd.s32 %v476, 4294967272
        %v1409 = vperm.slane %v1022, %v1408
        %vm1410 = vcmask 261312
        %v1411 = vsel %vm1410, %v1409, %v1407
        %v1412 = vadd.s32 %v476, 4294967264
        %v1413 = vperm.slane %v1024, %v1412
        %vm1414 = vcmask 326912
        %v1415 = vsel %vm1414, %v1413, %v1411
        %v1416 = vadd.s32 %v476, 4294967256
        %v1417 = vperm.slane %v1026, %v1416
        %vm1418 = vcmask 392512
        %v1419 = vsel %vm1418, %v1417, %v1415
        %v1420 = vadd.s32 %v476, 4294967248
        %v1421 = vperm.slane %v1028, %v1420
        %vm1422 = vcmask 458112
        %v1423 = vsel %vm1422, %v1421, %v1419
        %v1424 = vadd.s32 %v476, 4294967240
        %v1425 = vperm.slane %v1030, %v1424
        %vm1426 = vcmask 523712
        %v1427 = vsel %vm1426, %v1425, %v1423
        %v1428 = vadd.s32 %v476, 4294967232
        %v1429 = vperm.slane %v1032, %v1428
        %vm1430 = vcmask 589312
        %v1431 = vsel %vm1430, %v1429, %v1427
        %v1432 = vadd.s32 %v476, 4294967224
        %v1433 = vperm.slane %v1034, %v1432
        %vm1434 = vcmask 654912
        %v1435 = vsel %vm1434, %v1433, %v1431
        %v1436 = vadd.s32 %v476, 4294967216
        %v1437 = vperm.slane %v1036, %v1436
        %vm1438 = vcmask 720512
        %v1439 = vsel %vm1438, %v1437, %v1435
        %v1440 = vadd.s32 %v476, 4294967208
        %v1441 = vperm.slane %v1038, %v1440
        %vm1442 = vcmask 786112
        %v1443 = vsel %vm1442, %v1441, %v1439
        %v1444 = vadd.s32 %v476, 4294967200
        %v1445 = vperm.slane %v1040, %v1444
        %vm1446 = vcmask 851712
        %v1447 = vsel %vm1446, %v1445, %v1443
        %v1448 = vadd.s32 %v476, 4294967192
        %v1449 = vperm.slane %v1042, %v1448
        %vm1450 = vcmask 917312
        %v1451 = vsel %vm1450, %v1449, %v1447
        %v1452 = vadd.s32 %v476, 4294967184
        %v1453 = vperm.slane %v1044, %v1452
        %vm1454 = vcmask 982912
        %v1455 = vsel %vm1454, %v1453, %v1451
        %v1456 = vadd.s32 %v476, 4294967176
        %v1457 = vperm.slane %v1046, %v1456
        %vm1458 = vcmask 1048512
        %v1459 = vsel %vm1458, %v1457, %v1455
        %v1460 = vperm.slane %v1048, %v476
        %v1461 = vperm.slane %v1050, %v1400
        %v1462 = vsel %vm1402, %v1461, %v1460
        %v1463 = vperm.slane %v1052, %v1404
        %v1464 = vsel %vm1406, %v1463, %v1462
        %v1465 = vperm.slane %v1054, %v1408
        %v1466 = vsel %vm1410, %v1465, %v1464
        %v1467 = vperm.slane %v1056, %v1412
        %v1468 = vsel %vm1414, %v1467, %v1466
        %v1469 = vperm.slane %v1058, %v1416
        %v1470 = vsel %vm1418, %v1469, %v1468
        %v1471 = vperm.slane %v1060, %v1420
        %v1472 = vsel %vm1422, %v1471, %v1470
        %v1473 = vperm.slane %v1062, %v1424
        %v1474 = vsel %vm1426, %v1473, %v1472
        %v1475 = vperm.slane %v1064, %v1428
        %v1476 = vsel %vm1430, %v1475, %v1474
        %v1477 = vperm.slane %v1066, %v1432
        %v1478 = vsel %vm1434, %v1477, %v1476
        %v1479 = vperm.slane %v1068, %v1436
        %v1480 = vsel %vm1438, %v1479, %v1478
        %v1481 = vperm.slane %v1070, %v1440
        %v1482 = vsel %vm1442, %v1481, %v1480
        %v1483 = vperm.slane %v1072, %v1444
        %v1484 = vsel %vm1446, %v1483, %v1482
        %v1485 = vperm.slane %v1074, %v1448
        %v1486 = vsel %vm1450, %v1485, %v1484
        %v1487 = vperm.slane %v1076, %v1452
        %v1488 = vsel %vm1454, %v1487, %v1486
        %v1489 = vperm.slane %v1078, %v1456
        %v1490 = vsel %vm1458, %v1489, %v1488
        %v1491 = vperm.slane %v1080, %v476
        %v1492 = vperm.slane %v1082, %v1400
        %v1493 = vsel %vm1402, %v1492, %v1491
        %v1494 = vperm.slane %v1084, %v1404
        %v1495 = vsel %vm1406, %v1494, %v1493
        %v1496 = vperm.slane %v1086, %v1408
        %v1497 = vsel %vm1410, %v1496, %v1495
        %v1498 = vperm.slane %v1088, %v1412
        %v1499 = vsel %vm1414, %v1498, %v1497
        %v1500 = vperm.slane %v1090, %v1416
        %v1501 = vsel %vm1418, %v1500, %v1499
        %v1502 = vperm.slane %v1092, %v1420
        %v1503 = vsel %vm1422, %v1502, %v1501
        %v1504 = vperm.slane %v1094, %v1424
        %v1505 = vsel %vm1426, %v1504, %v1503
        %v1506 = vperm.slane %v1096, %v1428
        %v1507 = vsel %vm1430, %v1506, %v1505
        %v1508 = vperm.slane %v1098, %v1432
        %v1509 = vsel %vm1434, %v1508, %v1507
        %v1510 = vperm.slane %v1100, %v1436
        %v1511 = vsel %vm1438, %v1510, %v1509
        %v1512 = vperm.slane %v1102, %v1440
        %v1513 = vsel %vm1442, %v1512, %v1511
        %v1514 = vperm.slane %v1104, %v1444
        %v1515 = vsel %vm1446, %v1514, %v1513
        %v1516 = vperm.slane %v1106, %v1448
        %v1517 = vsel %vm1450, %v1516, %v1515
        %v1518 = vperm.slane %v1108, %v1452
        %v1519 = vsel %vm1454, %v1518, %v1517
        %v1520 = vperm.slane %v1110, %v1456
        %v1521 = vsel %vm1458, %v1520, %v1519
        %v1522 = vperm.slane %v1112, %v476
        %v1523 = vperm.slane %v1114, %v1400
        %v1524 = vsel %vm1402, %v1523, %v1522
        %v1525 = vperm.slane %v1116, %v1404
        %v1526 = vsel %vm1406, %v1525, %v1524
        %v1527 = vperm.slane %v1118, %v1408
        %v1528 = vsel %vm1410, %v1527, %v1526
        %v1529 = vperm.slane %v1120, %v1412
        %v1530 = vsel %vm1414, %v1529, %v1528
        %v1531 = vperm.slane %v1122, %v1416
        %v1532 = vsel %vm1418, %v1531, %v1530
        %v1533 = vperm.slane %v1124, %v1420
        %v1534 = vsel %vm1422, %v1533, %v1532
        %v1535 = vperm.slane %v1126, %v1424
        %v1536 = vsel %vm1426, %v1535, %v1534
        %v1537 = vperm.slane %v1128, %v1428
        %v1538 = vsel %vm1430, %v1537, %v1536
        %v1539 = vperm.slane %v1130, %v1432
        %v1540 = vsel %vm1434, %v1539, %v1538
        %v1541 = vperm.slane %v1132, %v1436
        %v1542 = vsel %vm1438, %v1541, %v1540
        %v1543 = vperm.slane %v1134, %v1440
        %v1544 = vsel %vm1442, %v1543, %v1542
        %v1545 = vperm.slane %v1136, %v1444
        %v1546 = vsel %vm1446, %v1545, %v1544
        %v1547 = vperm.slane %v1138, %v1448
        %v1548 = vsel %vm1450, %v1547, %v1546
        %v1549 = vperm.slane %v1140, %v1452
        %v1550 = vsel %vm1454, %v1549, %v1548
        %v1551 = vperm.slane %v1142, %v1456
        %v1552 = vsel %vm1458, %v1551, %v1550
        %v1553 = vperm.slane %v1144, %v476
        %v1554 = vperm.slane %v1146, %v1400
        %v1555 = vsel %vm1402, %v1554, %v1553
        %v1556 = vperm.slane %v1148, %v1404
        %v1557 = vsel %vm1406, %v1556, %v1555
        %v1558 = vperm.slane %v1150, %v1408
        %v1559 = vsel %vm1410, %v1558, %v1557
        %v1560 = vperm.slane %v1152, %v1412
        %v1561 = vsel %vm1414, %v1560, %v1559
        %v1562 = vperm.slane %v1154, %v1416
        %v1563 = vsel %vm1418, %v1562, %v1561
        %v1564 = vperm.slane %v1156, %v1420
        %v1565 = vsel %vm1422, %v1564, %v1563
        %v1566 = vperm.slane %v1158, %v1424
        %v1567 = vsel %vm1426, %v1566, %v1565
        %v1568 = vperm.slane %v1160, %v1428
        %v1569 = vsel %vm1430, %v1568, %v1567
        %v1570 = vperm.slane %v1162, %v1432
        %v1571 = vsel %vm1434, %v1570, %v1569
        %v1572 = vperm.slane %v1164, %v1436
        %v1573 = vsel %vm1438, %v1572, %v1571
        %v1574 = vperm.slane %v1166, %v1440
        %v1575 = vsel %vm1442, %v1574, %v1573
        %v1576 = vperm.slane %v1168, %v1444
        %v1577 = vsel %vm1446, %v1576, %v1575
        %v1578 = vperm.slane %v1170, %v1448
        %v1579 = vsel %vm1450, %v1578, %v1577
        %v1580 = vperm.slane %v1172, %v1452
        %v1581 = vsel %vm1454, %v1580, %v1579
        %v1582 = vperm.slane %v1174, %v1456
        %v1583 = vsel %vm1458, %v1582, %v1581
        %v1584 = vperm.slane %v1176, %v476
        %v1585 = vperm.slane %v1178, %v1400
        %v1586 = vsel %vm1402, %v1585, %v1584
        %v1587 = vperm.slane %v1180, %v1404
        %v1588 = vsel %vm1406, %v1587, %v1586
        %v1589 = vperm.slane %v1182, %v1408
        %v1590 = vsel %vm1410, %v1589, %v1588
        %v1591 = vperm.slane %v1184, %v1412
        %v1592 = vsel %vm1414, %v1591, %v1590
        %v1593 = vperm.slane %v1186, %v1416
        %v1594 = vsel %vm1418, %v1593, %v1592
        %v1595 = vperm.slane %v1188, %v1420
        %v1596 = vsel %vm1422, %v1595, %v1594
        %v1597 = vperm.slane %v1190, %v1424
        %v1598 = vsel %vm1426, %v1597, %v1596
        %v1599 = vperm.slane %v1192, %v1428
        %v1600 = vsel %vm1430, %v1599, %v1598
        %v1601 = vperm.slane %v1194, %v1432
        %v1602 = vsel %vm1434, %v1601, %v1600
        %v1603 = vperm.slane %v1196, %v1436
        %v1604 = vsel %vm1438, %v1603, %v1602
        %v1605 = vperm.slane %v1198, %v1440
        %v1606 = vsel %vm1442, %v1605, %v1604
        %v1607 = vperm.slane %v1200, %v1444
        %v1608 = vsel %vm1446, %v1607, %v1606
        %v1609 = vperm.slane %v1202, %v1448
        %v1610 = vsel %vm1450, %v1609, %v1608
        %v1611 = vperm.slane %v1204, %v1452
        %v1612 = vsel %vm1454, %v1611, %v1610
        %v1613 = vperm.slane %v1206, %v1456
        %v1614 = vsel %vm1458, %v1613, %v1612
        %v1615 = vperm.slane %v1208, %v476
        %v1616 = vperm.slane %v1210, %v1400
        %v1617 = vsel %vm1402, %v1616, %v1615
        %v1618 = vperm.slane %v1212, %v1404
        %v1619 = vsel %vm1406, %v1618, %v1617
        %v1620 = vperm.slane %v1214, %v1408
        %v1621 = vsel %vm1410, %v1620, %v1619
        %v1622 = vperm.slane %v1216, %v1412
        %v1623 = vsel %vm1414, %v1622, %v1621
        %v1624 = vperm.slane %v1218, %v1416
        %v1625 = vsel %vm1418, %v1624, %v1623
        %v1626 = vperm.slane %v1220, %v1420
        %v1627 = vsel %vm1422, %v1626, %v1625
        %v1628 = vperm.slane %v1222, %v1424
        %v1629 = vsel %vm1426, %v1628, %v1627
        %v1630 = vperm.slane %v1224, %v1428
        %v1631 = vsel %vm1430, %v1630, %v1629
        %v1632 = vperm.slane %v1226, %v1432
        %v1633 = vsel %vm1434, %v1632, %v1631
        %v1634 = vperm.slane %v1228, %v1436
        %v1635 = vsel %vm1438, %v1634, %v1633
        %v1636 = vperm.slane %v1230, %v1440
        %v1637 = vsel %vm1442, %v1636, %v1635
        %v1638 = vperm.slane %v1232, %v1444
        %v1639 = vsel %vm1446, %v1638, %v1637
        %v1640 = vperm.slane %v1234, %v1448
        %v1641 = vsel %vm1450, %v1640, %v1639
        %v1642 = vperm.slane %v1236, %v1452
        %v1643 = vsel %vm1454, %v1642, %v1641
        %v1644 = vperm.slane %v1238, %v1456
        %v1645 = vsel %vm1458, %v1644, %v1643
        %v1646 = vperm.slane %v1240, %v476
        %v1647 = vperm.slane %v1242, %v1400
        %v1648 = vsel %vm1402, %v1647, %v1646
        %v1649 = vperm.slane %v1244, %v1404
        %v1650 = vsel %vm1406, %v1649, %v1648
        %v1651 = vperm.slane %v1246, %v1408
        %v1652 = vsel %vm1410, %v1651, %v1650
        %v1653 = vperm.slane %v1248, %v1412
        %v1654 = vsel %vm1414, %v1653, %v1652
        %v1655 = vperm.slane %v1250, %v1416
        %v1656 = vsel %vm1418, %v1655, %v1654
        %v1657 = vperm.slane %v1252, %v1420
        %v1658 = vsel %vm1422, %v1657, %v1656
        %v1659 = vperm.slane %v1254, %v1424
        %v1660 = vsel %vm1426, %v1659, %v1658
        %v1661 = vperm.slane %v1256, %v1428
        %v1662 = vsel %vm1430, %v1661, %v1660
        %v1663 = vperm.slane %v1258, %v1432
        %v1664 = vsel %vm1434, %v1663, %v1662
        %v1665 = vperm.slane %v1260, %v1436
        %v1666 = vsel %vm1438, %v1665, %v1664
        %v1667 = vperm.slane %v1262, %v1440
        %v1668 = vsel %vm1442, %v1667, %v1666
        %v1669 = vperm.slane %v1264, %v1444
        %v1670 = vsel %vm1446, %v1669, %v1668
        %v1671 = vperm.slane %v1266, %v1448
        %v1672 = vsel %vm1450, %v1671, %v1670
        %v1673 = vperm.slane %v1268, %v1452
        %v1674 = vsel %vm1454, %v1673, %v1672
        %v1675 = vperm.slane %v1270, %v1456
        %v1676 = vsel %vm1458, %v1675, %v1674
        %vm1677 = vcmask 1041409
        %v1678 = vsel %vm1677, %v1490, %v1459
        %vm1679 = vcmask 1042434
        %v1680 = vsel %vm1679, %v1521, %v1678
        %vm1681 = vcmask 1043459
        %v1682 = vsel %vm1681, %v1552, %v1680
        %vm1683 = vcmask 1044484
        %v1684 = vsel %vm1683, %v1583, %v1682
        %vm1685 = vcmask 1045509
        %v1686 = vsel %vm1685, %v1614, %v1684
        %vm1687 = vcmask 1046534
        %v1688 = vsel %vm1687, %v1645, %v1686
        %vm1689 = vcmask 1047559
        %v1690 = vsel %vm1689, %v1676, %v1688
        %1692 = vst [vmem:[#allocation2] sm:$0xff] %v1690
        %v1693 = vstv %s521
        %vm1694 = vcmp.lt.s32.totalorder %v476, %v1693
        %v1695 = vld [vmem:[#allocation2] sm:$0xff]
        %v1696 = vsel %vm1694, %v1695, -1e+30
        %1697 = vmax.xlane.f32.xlu0 %v1696
        %v1698 = vpop.xlane.xlu0 %1697
        %v1699 = vsub.f32 %v1696, %v1698
        %v1700 = vmul.f32 %v1699, 1.442695
        %v1701 = vpow.pop %v1700
        %1702 = vadd.xlane.f32.xlu0 %v1701
        %v1703 = vpop.xlane.xlu0 %1702
        %v1704 = vrcp.pop %v1703
        %v1705 = vmul.f32 %v1703, %v1704
        %v1706 = vsub.f32 1.0, %v1705
        %v1707 = vmul.f32 %v1704, %v1706
        %v1708 = vadd.f32 %v1704, %v1707
        %vm1709 = vweird.f32 %v1703
        %vm1710 = vweird.f32 %v1704
        %vm1711 = vmor %vm1709, %vm1710
        %v1712 = vsel %vm1711, %v1704, %v1708
        %v1713 = vand.u32 2147483647, %v1703
        %vm1714 = vcmp.eq.f32.partialorder %v1713, 8.507059e+37
        %v1715 = vand.u32 %v1703, 2147483648
        %v1716 = vor.u32 1.1754944e-38, %v1715
        %v1717 = vsel %vm1714, %v1716, %v1712
        %v1718 = vmul.f32 %v1701, %v1717
        %1719 = vst [vmem:[%s453] sm:$0xff] %v1718
        %v1720 = vld [vmem:[%s390] sm:$0xff]
        %v1721 = vld [vmem:[%s390 + $0x8] sm:$0xff]
        %v1722 = vld [vmem:[%s390 + $0x10] sm:$0xff]
        %v1723 = vld [vmem:[%s390 + $0x18] sm:$0xff]
        %v1724 = vld [vmem:[%s390 + $0x20] sm:$0xff]
        %v1725 = vld [vmem:[%s390 + $0x28] sm:$0xff]
        %v1726 = vld [vmem:[%s390 + $0x30] sm:$0xff]
        %v1727 = vld [vmem:[%s390 + $0x38] sm:$0xff]
        %v1728 = vld [vmem:[%s390 + $0x40] sm:$0xff]
        %v1729 = vld [vmem:[%s390 + $0x48] sm:$0xff]
        %v1730 = vld [vmem:[%s390 + $0x50] sm:$0xff]
        %v1731 = vld [vmem:[%s390 + $0x58] sm:$0xff]
        %v1732 = vld [vmem:[%s390 + $0x60] sm:$0xff]
        %v1733 = vld [vmem:[%s390 + $0x68] sm:$0xff]
        %v1734 = vld [vmem:[%s390 + $0x70] sm:$0xff]
        %v1735 = vld [vmem:[%s390 + $0x78] sm:$0xff]
        %1736 = vmatpush.msra.mxu0 %v1735
        %1737 = vmatpush.msra.mxu0 %v1734
        %1738 = vmatpush.msra.mxu0 %v1733
        %1739 = vmatpush.msra.mxu0 %v1732
        %1740 = vmatpush.msra.mxu0 %v1731
        %1741 = vmatpush.msra.mxu0 %v1730
        %1742 = vmatpush.msra.mxu0 %v1729
        %1743 = vmatpush.msra.mxu0 %v1728
        %1744 = vmatpush.msra.mxu0 %v1727
        %1745 = vmatpush.msra.mxu0 %v1726
        %1746 = vmatpush.msra.mxu0 %v1725
        %1747 = vmatpush.msra.mxu0 %v1724
        %1748 = vmatpush.msra.mxu0 %v1723
        %1749 = vmatpush.msra.mxu0 %v1722
        %1750 = vmatpush.msra.mxu0 %v1721
        %1751 = vmatpush.msra.mxu0 %v1720
        %1752 = vmatmul.f32.gmra.mxu0 %v1718
        %v1753 = vpop.f32.mrf.mxu0
        %v1754 = vadd.f32 0.0, %v1753
        %1755 = vdwg.mxu0
        %1756 = vst [vmem:[#allocation3] sm:$0xff] %v1754
        %s1757 = sadd.s32 %s520, 1
        %s1758 = sld [smem:[#allocation6 + %s1757]]
        %v1759 = vld [vmem:[#allocation4 + $0x8] sm:$0xff]
        %v1760 = vld [vmem:[%s390 + $0x80] sm:$0xff]
        %v1761 = vld [vmem:[%s390 + $0x88] sm:$0xff]
        %v1762 = vld [vmem:[%s390 + $0x90] sm:$0xff]
        %v1763 = vld [vmem:[%s390 + $0x98] sm:$0xff]
        %v1764 = vld [vmem:[%s390 + $0xa0] sm:$0xff]
        %v1765 = vld [vmem:[%s390 + $0xa8] sm:$0xff]
        %v1766 = vld [vmem:[%s390 + $0xb0] sm:$0xff]
        %v1767 = vld [vmem:[%s390 + $0xb8] sm:$0xff]
        %v1768 = vld [vmem:[%s390 + $0xc0] sm:$0xff]
        %v1769 = vld [vmem:[%s390 + $0xc8] sm:$0xff]
        %v1770 = vld [vmem:[%s390 + $0xd0] sm:$0xff]
        %v1771 = vld [vmem:[%s390 + $0xd8] sm:$0xff]
        %v1772 = vld [vmem:[%s390 + $0xe0] sm:$0xff]
        %v1773 = vld [vmem:[%s390 + $0xe8] sm:$0xff]
        %v1774 = vld [vmem:[%s390 + $0xf0] sm:$0xff]
        %v1775 = vld [vmem:[%s390 + $0xf8] sm:$0xff]
        %1776 = vmatpush.msra.mxu0 %v473
        %1777 = vmatpush.msra.mxu0 %v472
        %1778 = vmatpush.msra.mxu0 %v471
        %1779 = vmatpush.msra.mxu0 %v470
        %1780 = vmatpush.msra.mxu0 %v469
        %1781 = vmatpush.msra.mxu0 %v468
        %1782 = vmatpush.msra.mxu0 %v467
        %1783 = vmatpush.msra.mxu0 %v466
        %1784 = vmatpush.msra.mxu0 %v465
        %1785 = vmatpush.msra.mxu0 %v464
        %1786 = vmatpush.msra.mxu0 %v463
        %1787 = vmatpush.msra.mxu0 %v462
        %1788 = vmatpush.msra.mxu0 %v461
        %1789 = vmatpush.msra.mxu0 %v460
        %1790 = vmatpush.msra.mxu0 %v459
        %1791 = vmatpush.msra.mxu0 %v458
        %1792 = vmatmul.f32.gmra.mxu0 %v1760
        %v1793 = vpop.f32.mrf.mxu0
        %v1794 = vadd.f32 0.0, %v1793
        %1795 = vmatmul.f32.gmra.mxu0 %v1761
        %v1796 = vpop.f32.mrf.mxu0
        %v1797 = vadd.f32 0.0, %v1796
        %1798 = vmatmul.f32.gmra.mxu0 %v1762
        %v1799 = vpop.f32.mrf.mxu0
        %v1800 = vadd.f32 0.0, %v1799
        %1801 = vmatmul.f32.gmra.mxu0 %v1763
        %v1802 = vpop.f32.mrf.mxu0
        %v1803 = vadd.f32 0.0, %v1802
        %1804 = vmatmul.f32.gmra.mxu0 %v1764
        %v1805 = vpop.f32.mrf.mxu0
        %v1806 = vadd.f32 0.0, %v1805
        %1807 = vmatmul.f32.gmra.mxu0 %v1765
        %v1808 = vpop.f32.mrf.mxu0
        %v1809 = vadd.f32 0.0, %v1808
        %1810 = vmatmul.f32.gmra.mxu0 %v1766
        %v1811 = vpop.f32.mrf.mxu0
        %v1812 = vadd.f32 0.0, %v1811
        %1813 = vmatmul.f32.gmra.mxu0 %v1767
        %v1814 = vpop.f32.mrf.mxu0
        %v1815 = vadd.f32 0.0, %v1814
        %1816 = vmatmul.f32.gmra.mxu0 %v1768
        %v1817 = vpop.f32.mrf.mxu0
        %v1818 = vadd.f32 0.0, %v1817
        %1819 = vmatmul.f32.gmra.mxu0 %v1769
        %v1820 = vpop.f32.mrf.mxu0
        %v1821 = vadd.f32 0.0, %v1820
        %1822 = vmatmul.f32.gmra.mxu0 %v1770
        %v1823 = vpop.f32.mrf.mxu0
        %v1824 = vadd.f32 0.0, %v1823
        %1825 = vmatmul.f32.gmra.mxu0 %v1771
        %v1826 = vpop.f32.mrf.mxu0
        %v1827 = vadd.f32 0.0, %v1826
        %1828 = vmatmul.f32.gmra.mxu0 %v1772
        %v1829 = vpop.f32.mrf.mxu0
        %v1830 = vadd.f32 0.0, %v1829
        %1831 = vmatmul.f32.gmra.mxu0 %v1773
        %v1832 = vpop.f32.mrf.mxu0
        %v1833 = vadd.f32 0.0, %v1832
        %1834 = vmatmul.f32.gmra.mxu0 %v1774
        %v1835 = vpop.f32.mrf.mxu0
        %v1836 = vadd.f32 0.0, %v1835
        %1837 = vmatmul.f32.gmra.mxu0 %v1775
        %v1838 = vpop.f32.mrf.mxu0
        %v1839 = vadd.f32 0.0, %v1838
        %1840 = vdwg.mxu0
        %v1842 = vrot.slane %v1759, 1
        %v1843 = vrot.slane %v1759, 2
        %v1844 = vrot.slane %v1759, 3
        %v1845 = vrot.slane %v1759, 4
        %v1846 = vrot.slane %v1759, 5
        %v1847 = vrot.slane %v1759, 6
        %v1848 = vrot.slane %v1759, 7
        %v1849 = vperm.slane %v1759, 0
        %v1850 = vperm.slane %v1842, 0
        %v1851 = vperm.slane %v1843, 0
        %v1852 = vperm.slane %v1844, 0
        %v1853 = vperm.slane %v1845, 0
        %v1854 = vperm.slane %v1846, 0
        %v1855 = vperm.slane %v1847, 0
        %v1856 = vperm.slane %v1848, 0
        %v1865 = vadd.f32 %v1849, %v1794
        %v1866 = vadd.f32 %v1849, %v1797
        %v1867 = vadd.f32 %v1849, %v1800
        %v1868 = vadd.f32 %v1849, %v1803
        %v1869 = vadd.f32 %v1849, %v1806
        %v1870 = vadd.f32 %v1849, %v1809
        %v1871 = vadd.f32 %v1849, %v1812
        %v1872 = vadd.f32 %v1849, %v1815
        %v1873 = vadd.f32 %v1849, %v1818
        %v1874 = vadd.f32 %v1849, %v1821
        %v1875 = vadd.f32 %v1849, %v1824
        %v1876 = vadd.f32 %v1849, %v1827
        %v1877 = vadd.f32 %v1849, %v1830
        %v1878 = vadd.f32 %v1849, %v1833
        %v1879 = vadd.f32 %v1849, %v1836
        %v1880 = vadd.f32 %v1849, %v1839
        %v1881 = vadd.f32 %v1850, %v1794
        %v1882 = vadd.f32 %v1850, %v1797
        %v1883 = vadd.f32 %v1850, %v1800
        %v1884 = vadd.f32 %v1850, %v1803
        %v1885 = vadd.f32 %v1850, %v1806
        %v1886 = vadd.f32 %v1850, %v1809
        %v1887 = vadd.f32 %v1850, %v1812
        %v1888 = vadd.f32 %v1850, %v1815
        %v1889 = vadd.f32 %v1850, %v1818
        %v1890 = vadd.f32 %v1850, %v1821
        %v1891 = vadd.f32 %v1850, %v1824
        %v1892 = vadd.f32 %v1850, %v1827
        %v1893 = vadd.f32 %v1850, %v1830
        %v1894 = vadd.f32 %v1850, %v1833
        %v1895 = vadd.f32 %v1850, %v1836
        %v1896 = vadd.f32 %v1850, %v1839
        %v1897 = vadd.f32 %v1851, %v1794
        %v1898 = vadd.f32 %v1851, %v1797
        %v1899 = vadd.f32 %v1851, %v1800
        %v1900 = vadd.f32 %v1851, %v1803
        %v1901 = vadd.f32 %v1851, %v1806
        %v1902 = vadd.f32 %v1851, %v1809
        %v1903 = vadd.f32 %v1851, %v1812
        %v1904 = vadd.f32 %v1851, %v1815
        %v1905 = vadd.f32 %v1851, %v1818
        %v1906 = vadd.f32 %v1851, %v1821
        %v1907 = vadd.f32 %v1851, %v1824
        %v1908 = vadd.f32 %v1851, %v1827
        %v1909 = vadd.f32 %v1851, %v1830
        %v1910 = vadd.f32 %v1851, %v1833
        %v1911 = vadd.f32 %v1851, %v1836
        %v1912 = vadd.f32 %v1851, %v1839
        %v1913 = vadd.f32 %v1852, %v1794
        %v1914 = vadd.f32 %v1852, %v1797
        %v1915 = vadd.f32 %v1852, %v1800
        %v1916 = vadd.f32 %v1852, %v1803
        %v1917 = vadd.f32 %v1852, %v1806
        %v1918 = vadd.f32 %v1852, %v1809
        %v1919 = vadd.f32 %v1852, %v1812
        %v1920 = vadd.f32 %v1852, %v1815
        %v1921 = vadd.f32 %v1852, %v1818
        %v1922 = vadd.f32 %v1852, %v1821
        %v1923 = vadd.f32 %v1852, %v1824
        %v1924 = vadd.f32 %v1852, %v1827
        %v1925 = vadd.f32 %v1852, %v1830
        %v1926 = vadd.f32 %v1852, %v1833
        %v1927 = vadd.f32 %v1852, %v1836
        %v1928 = vadd.f32 %v1852, %v1839
        %v1929 = vadd.f32 %v1853, %v1794
        %v1930 = vadd.f32 %v1853, %v1797
        %v1931 = vadd.f32 %v1853, %v1800
        %v1932 = vadd.f32 %v1853, %v1803
        %v1933 = vadd.f32 %v1853, %v1806
        %v1934 = vadd.f32 %v1853, %v1809
        %v1935 = vadd.f32 %v1853, %v1812
        %v1936 = vadd.f32 %v1853, %v1815
        %v1937 = vadd.f32 %v1853, %v1818
        %v1938 = vadd.f32 %v1853, %v1821
        %v1939 = vadd.f32 %v1853, %v1824
        %v1940 = vadd.f32 %v1853, %v1827
        %v1941 = vadd.f32 %v1853, %v1830
        %v1942 = vadd.f32 %v1853, %v1833
        %v1943 = vadd.f32 %v1853, %v1836
        %v1944 = vadd.f32 %v1853, %v1839
        %v1945 = vadd.f32 %v1854, %v1794
        %v1946 = vadd.f32 %v1854, %v1797
        %v1947 = vadd.f32 %v1854, %v1800
        %v1948 = vadd.f32 %v1854, %v1803
        %v1949 = vadd.f32 %v1854, %v1806
        %v1950 = vadd.f32 %v1854, %v1809
        %v1951 = vadd.f32 %v1854, %v1812
        %v1952 = vadd.f32 %v1854, %v1815
        %v1953 = vadd.f32 %v1854, %v1818
        %v1954 = vadd.f32 %v1854, %v1821
        %v1955 = vadd.f32 %v1854, %v1824
        %v1956 = vadd.f32 %v1854, %v1827
        %v1957 = vadd.f32 %v1854, %v1830
        %v1958 = vadd.f32 %v1854, %v1833
        %v1959 = vadd.f32 %v1854, %v1836
        %v1960 = vadd.f32 %v1854, %v1839
        %v1961 = vadd.f32 %v1855, %v1794
        %v1962 = vadd.f32 %v1855, %v1797
        %v1963 = vadd.f32 %v1855, %v1800
        %v1964 = vadd.f32 %v1855, %v1803
        %v1965 = vadd.f32 %v1855, %v1806
        %v1966 = vadd.f32 %v1855, %v1809
        %v1967 = vadd.f32 %v1855, %v1812
        %v1968 = vadd.f32 %v1855, %v1815
        %v1969 = vadd.f32 %v1855, %v1818
        %v1970 = vadd.f32 %v1855, %v1821
        %v1971 = vadd.f32 %v1855, %v1824
        %v1972 = vadd.f32 %v1855, %v1827
        %v1973 = vadd.f32 %v1855, %v1830
        %v1974 = vadd.f32 %v1855, %v1833
        %v1975 = vadd.f32 %v1855, %v1836
        %v1976 = vadd.f32 %v1855, %v1839
        %v1977 = vadd.f32 %v1856, %v1794
        %v1978 = vadd.f32 %v1856, %v1797
        %v1979 = vadd.f32 %v1856, %v1800
        %v1980 = vadd.f32 %v1856, %v1803
        %v1981 = vadd.f32 %v1856, %v1806
        %v1982 = vadd.f32 %v1856, %v1809
        %v1983 = vadd.f32 %v1856, %v1812
        %v1984 = vadd.f32 %v1856, %v1815
        %v1985 = vadd.f32 %v1856, %v1818
        %v1986 = vadd.f32 %v1856, %v1821
        %v1987 = vadd.f32 %v1856, %v1824
        %v1988 = vadd.f32 %v1856, %v1827
        %v1989 = vadd.f32 %v1856, %v1830
        %v1990 = vadd.f32 %v1856, %v1833
        %v1991 = vadd.f32 %v1856, %v1836
        %v1992 = vadd.f32 %v1856, %v1839
        %v1993 = vtanh.pop %v1865
        %v1994 = vtanh.pop %v1866
        %v1995 = vtanh.pop %v1867
        %v1996 = vtanh.pop %v1868
        %v1997 = vtanh.pop %v1869
        %v1998 = vtanh.pop %v1870
        %v1999 = vtanh.pop %v1871
        %v2000 = vtanh.pop %v1872
        %v2001 = vtanh.pop %v1873
        %v2002 = vtanh.pop %v1874
        %v2003 = vtanh.pop %v1875
        %v2004 = vtanh.pop %v1876
        %v2005 = vtanh.pop %v1877
        %v2006 = vtanh.pop %v1878
        %v2007 = vtanh.pop %v1879
        %v2008 = vtanh.pop %v1880
        %v2009 = vtanh.pop %v1881
        %v2010 = vtanh.pop %v1882
        %v2011 = vtanh.pop %v1883
        %v2012 = vtanh.pop %v1884
        %v2013 = vtanh.pop %v1885
        %v2014 = vtanh.pop %v1886
        %v2015 = vtanh.pop %v1887
        %v2016 = vtanh.pop %v1888
        %v2017 = vtanh.pop %v1889
        %v2018 = vtanh.pop %v1890
        %v2019 = vtanh.pop %v1891
        %v2020 = vtanh.pop %v1892
        %v2021 = vtanh.pop %v1893
        %v2022 = vtanh.pop %v1894
        %v2023 = vtanh.pop %v1895
        %v2024 = vtanh.pop %v1896
        %v2025 = vtanh.pop %v1897
        %v2026 = vtanh.pop %v1898
        %v2027 = vtanh.pop %v1899
        %v2028 = vtanh.pop %v1900
        %v2029 = vtanh.pop %v1901
        %v2030 = vtanh.pop %v1902
        %v2031 = vtanh.pop %v1903
        %v2032 = vtanh.pop %v1904
        %v2033 = vtanh.pop %v1905
        %v2034 = vtanh.pop %v1906
        %v2035 = vtanh.pop %v1907
        %v2036 = vtanh.pop %v1908
        %v2037 = vtanh.pop %v1909
        %v2038 = vtanh.pop %v1910
        %v2039 = vtanh.pop %v1911
        %v2040 = vtanh.pop %v1912
        %v2041 = vtanh.pop %v1913
        %v2042 = vtanh.pop %v1914
        %v2043 = vtanh.pop %v1915
        %v2044 = vtanh.pop %v1916
        %v2045 = vtanh.pop %v1917
        %v2046 = vtanh.pop %v1918
        %v2047 = vtanh.pop %v1919
        %v2048 = vtanh.pop %v1920
        %v2049 = vtanh.pop %v1921
        %v2050 = vtanh.pop %v1922
        %v2051 = vtanh.pop %v1923
        %v2052 = vtanh.pop %v1924
        %v2053 = vtanh.pop %v1925
        %v2054 = vtanh.pop %v1926
        %v2055 = vtanh.pop %v1927
        %v2056 = vtanh.pop %v1928
        %v2057 = vtanh.pop %v1929
        %v2058 = vtanh.pop %v1930
        %v2059 = vtanh.pop %v1931
        %v2060 = vtanh.pop %v1932
        %v2061 = vtanh.pop %v1933
        %v2062 = vtanh.pop %v1934
        %v2063 = vtanh.pop %v1935
        %v2064 = vtanh.pop %v1936
        %v2065 = vtanh.pop %v1937
        %v2066 = vtanh.pop %v1938
        %v2067 = vtanh.pop %v1939
        %v2068 = vtanh.pop %v1940
        %v2069 = vtanh.pop %v1941
        %v2070 = vtanh.pop %v1942
        %v2071 = vtanh.pop %v1943
        %v2072 = vtanh.pop %v1944
        %v2073 = vtanh.pop %v1945
        %v2074 = vtanh.pop %v1946
        %v2075 = vtanh.pop %v1947
        %v2076 = vtanh.pop %v1948
        %v2077 = vtanh.pop %v1949
        %v2078 = vtanh.pop %v1950
        %v2079 = vtanh.pop %v1951
        %v2080 = vtanh.pop %v1952
        %v2081 = vtanh.pop %v1953
        %v2082 = vtanh.pop %v1954
        %v2083 = vtanh.pop %v1955
        %v2084 = vtanh.pop %v1956
        %v2085 = vtanh.pop %v1957
        %v2086 = vtanh.pop %v1958
        %v2087 = vtanh.pop %v1959
        %v2088 = vtanh.pop %v1960
        %v2089 = vtanh.pop %v1961
        %v2090 = vtanh.pop %v1962
        %v2091 = vtanh.pop %v1963
        %v2092 = vtanh.pop %v1964
        %v2093 = vtanh.pop %v1965
        %v2094 = vtanh.pop %v1966
        %v2095 = vtanh.pop %v1967
        %v2096 = vtanh.pop %v1968
        %v2097 = vtanh.pop %v1969
        %v2098 = vtanh.pop %v1970
        %v2099 = vtanh.pop %v1971
        %v2100 = vtanh.pop %v1972
        %v2101 = vtanh.pop %v1973
        %v2102 = vtanh.pop %v1974
        %v2103 = vtanh.pop %v1975
        %v2104 = vtanh.pop %v1976
        %v2105 = vtanh.pop %v1977
        %v2106 = vtanh.pop %v1978
        %v2107 = vtanh.pop %v1979
        %v2108 = vtanh.pop %v1980
        %v2109 = vtanh.pop %v1981
        %v2110 = vtanh.pop %v1982
        %v2111 = vtanh.pop %v1983
        %v2112 = vtanh.pop %v1984
        %v2113 = vtanh.pop %v1985
        %v2114 = vtanh.pop %v1986
        %v2115 = vtanh.pop %v1987
        %v2116 = vtanh.pop %v1988
        %v2117 = vtanh.pop %v1989
        %v2118 = vtanh.pop %v1990
        %v2119 = vtanh.pop %v1991
        %v2120 = vtanh.pop %v1992
        %v2121 = vmul.f32 %v1993, %v885
        %v2122 = vmul.f32 %v1994, %v885
        %v2123 = vmul.f32 %v1995, %v885
        %v2124 = vmul.f32 %v1996, %v885
        %v2125 = vmul.f32 %v1997, %v885
        %v2126 = vmul.f32 %v1998, %v885
        %v2127 = vmul.f32 %v1999, %v885
        %v2128 = vmul.f32 %v2000, %v885
        %v2129 = vmul.f32 %v2001, %v885
        %v2130 = vmul.f32 %v2002, %v885
        %v2131 = vmul.f32 %v2003, %v885
        %v2132 = vmul.f32 %v2004, %v885
        %v2133 = vmul.f32 %v2005, %v885
        %v2134 = vmul.f32 %v2006, %v885
        %v2135 = vmul.f32 %v2007, %v885
        %v2136 = vmul.f32 %v2008, %v885
        %v2137 = vmul.f32 %v2009, %v885
        %v2138 = vmul.f32 %v2010, %v885
        %v2139 = vmul.f32 %v2011, %v885
        %v2140 = vmul.f32 %v2012, %v885
        %v2141 = vmul.f32 %v2013, %v885
        %v2142 = vmul.f32 %v2014, %v885
        %v2143 = vmul.f32 %v2015, %v885
        %v2144 = vmul.f32 %v2016, %v885
        %v2145 = vmul.f32 %v2017, %v885
        %v2146 = vmul.f32 %v2018, %v885
        %v2147 = vmul.f32 %v2019, %v885
        %v2148 = vmul.f32 %v2020, %v885
        %v2149 = vmul.f32 %v2021, %v885
        %v2150 = vmul.f32 %v2022, %v885
        %v2151 = vmul.f32 %v2023, %v885
        %v2152 = vmul.f32 %v2024, %v885
        %v2153 = vmul.f32 %v2025, %v885
        %v2154 = vmul.f32 %v2026, %v885
        %v2155 = vmul.f32 %v2027, %v885
        %v2156 = vmul.f32 %v2028, %v885
        %v2157 = vmul.f32 %v2029, %v885
        %v2158 = vmul.f32 %v2030, %v885
        %v2159 = vmul.f32 %v2031, %v885
        %v2160 = vmul.f32 %v2032, %v885
        %v2161 = vmul.f32 %v2033, %v885
        %v2162 = vmul.f32 %v2034, %v885
        %v2163 = vmul.f32 %v2035, %v885
        %v2164 = vmul.f32 %v2036, %v885
        %v2165 = vmul.f32 %v2037, %v885
        %v2166 = vmul.f32 %v2038, %v885
        %v2167 = vmul.f32 %v2039, %v885
        %v2168 = vmul.f32 %v2040, %v885
        %v2169 = vmul.f32 %v2041, %v885
        %v2170 = vmul.f32 %v2042, %v885
        %v2171 = vmul.f32 %v2043, %v885
        %v2172 = vmul.f32 %v2044, %v885
        %v2173 = vmul.f32 %v2045, %v885
        %v2174 = vmul.f32 %v2046, %v885
        %v2175 = vmul.f32 %v2047, %v885
        %v2176 = vmul.f32 %v2048, %v885
        %v2177 = vmul.f32 %v2049, %v885
        %v2178 = vmul.f32 %v2050, %v885
        %v2179 = vmul.f32 %v2051, %v885
        %v2180 = vmul.f32 %v2052, %v885
        %v2181 = vmul.f32 %v2053, %v885
        %v2182 = vmul.f32 %v2054, %v885
        %v2183 = vmul.f32 %v2055, %v885
        %v2184 = vmul.f32 %v2056, %v885
        %v2185 = vmul.f32 %v2057, %v885
        %v2186 = vmul.f32 %v2058, %v885
        %v2187 = vmul.f32 %v2059, %v885
        %v2188 = vmul.f32 %v2060, %v885
        %v2189 = vmul.f32 %v2061, %v885
        %v2190 = vmul.f32 %v2062, %v885
        %v2191 = vmul.f32 %v2063, %v885
        %v2192 = vmul.f32 %v2064, %v885
        %v2193 = vmul.f32 %v2065, %v885
        %v2194 = vmul.f32 %v2066, %v885
        %v2195 = vmul.f32 %v2067, %v885
        %v2196 = vmul.f32 %v2068, %v885
        %v2197 = vmul.f32 %v2069, %v885
        %v2198 = vmul.f32 %v2070, %v885
        %v2199 = vmul.f32 %v2071, %v885
        %v2200 = vmul.f32 %v2072, %v885
        %v2201 = vmul.f32 %v2073, %v885
        %v2202 = vmul.f32 %v2074, %v885
        %v2203 = vmul.f32 %v2075, %v885
        %v2204 = vmul.f32 %v2076, %v885
        %v2205 = vmul.f32 %v2077, %v885
        %v2206 = vmul.f32 %v2078, %v885
        %v2207 = vmul.f32 %v2079, %v885
        %v2208 = vmul.f32 %v2080, %v885
        %v2209 = vmul.f32 %v2081, %v885
        %v2210 = vmul.f32 %v2082, %v885
        %v2211 = vmul.f32 %v2083, %v885
        %v2212 = vmul.f32 %v2084, %v885
        %v2213 = vmul.f32 %v2085, %v885
        %v2214 = vmul.f32 %v2086, %v885
        %v2215 = vmul.f32 %v2087, %v885
        %v2216 = vmul.f32 %v2088, %v885
        %v2217 = vmul.f32 %v2089, %v885
        %v2218 = vmul.f32 %v2090, %v885
        %v2219 = vmul.f32 %v2091, %v885
        %v2220 = vmul.f32 %v2092, %v885
        %v2221 = vmul.f32 %v2093, %v885
        %v2222 = vmul.f32 %v2094, %v885
        %v2223 = vmul.f32 %v2095, %v885
        %v2224 = vmul.f32 %v2096, %v885
        %v2225 = vmul.f32 %v2097, %v885
        %v2226 = vmul.f32 %v2098, %v885
        %v2227 = vmul.f32 %v2099, %v885
        %v2228 = vmul.f32 %v2100, %v885
        %v2229 = vmul.f32 %v2101, %v885
        %v2230 = vmul.f32 %v2102, %v885
        %v2231 = vmul.f32 %v2103, %v885
        %v2232 = vmul.f32 %v2104, %v885
        %v2233 = vmul.f32 %v2105, %v885
        %v2234 = vmul.f32 %v2106, %v885
        %v2235 = vmul.f32 %v2107, %v885
        %v2236 = vmul.f32 %v2108, %v885
        %v2237 = vmul.f32 %v2109, %v885
        %v2238 = vmul.f32 %v2110, %v885
        %v2239 = vmul.f32 %v2111, %v885
        %v2240 = vmul.f32 %v2112, %v885
        %v2241 = vmul.f32 %v2113, %v885
        %v2242 = vmul.f32 %v2114, %v885
        %v2243 = vmul.f32 %v2115, %v885
        %v2244 = vmul.f32 %v2116, %v885
        %v2245 = vmul.f32 %v2117, %v885
        %v2246 = vmul.f32 %v2118, %v885
        %v2247 = vmul.f32 %v2119, %v885
        %v2248 = vmul.f32 %v2120, %v885
        %2249 = vadd.xlane.f32.xlu0 %v2121
        %v2250 = vpop.xlane.xlu0 %2249
        %2251 = vadd.xlane.f32.xlu0 %v2122
        %v2252 = vpop.xlane.xlu0 %2251
        %2253 = vadd.xlane.f32.xlu0 %v2123
        %v2254 = vpop.xlane.xlu0 %2253
        %2255 = vadd.xlane.f32.xlu0 %v2124
        %v2256 = vpop.xlane.xlu0 %2255
        %2257 = vadd.xlane.f32.xlu0 %v2125
        %v2258 = vpop.xlane.xlu0 %2257
        %2259 = vadd.xlane.f32.xlu0 %v2126
        %v2260 = vpop.xlane.xlu0 %2259
        %2261 = vadd.xlane.f32.xlu0 %v2127
        %v2262 = vpop.xlane.xlu0 %2261
        %2263 = vadd.xlane.f32.xlu0 %v2128
        %v2264 = vpop.xlane.xlu0 %2263
        %2265 = vadd.xlane.f32.xlu0 %v2129
        %v2266 = vpop.xlane.xlu0 %2265
        %2267 = vadd.xlane.f32.xlu0 %v2130
        %v2268 = vpop.xlane.xlu0 %2267
        %2269 = vadd.xlane.f32.xlu0 %v2131
        %v2270 = vpop.xlane.xlu0 %2269
        %2271 = vadd.xlane.f32.xlu0 %v2132
        %v2272 = vpop.xlane.xlu0 %2271
        %2273 = vadd.xlane.f32.xlu0 %v2133
        %v2274 = vpop.xlane.xlu0 %2273
        %2275 = vadd.xlane.f32.xlu0 %v2134
        %v2276 = vpop.xlane.xlu0 %2275
        %2277 = vadd.xlane.f32.xlu0 %v2135
        %v2278 = vpop.xlane.xlu0 %2277
        %2279 = vadd.xlane.f32.xlu0 %v2136
        %v2280 = vpop.xlane.xlu0 %2279
        %2281 = vadd.xlane.f32.xlu0 %v2137
        %v2282 = vpop.xlane.xlu0 %2281
        %2283 = vadd.xlane.f32.xlu0 %v2138
        %v2284 = vpop.xlane.xlu0 %2283
        %2285 = vadd.xlane.f32.xlu0 %v2139
        %v2286 = vpop.xlane.xlu0 %2285
        %2287 = vadd.xlane.f32.xlu0 %v2140
        %v2288 = vpop.xlane.xlu0 %2287
        %2289 = vadd.xlane.f32.xlu0 %v2141
        %v2290 = vpop.xlane.xlu0 %2289
        %2291 = vadd.xlane.f32.xlu0 %v2142
        %v2292 = vpop.xlane.xlu0 %2291
        %2293 = vadd.xlane.f32.xlu0 %v2143
        %v2294 = vpop.xlane.xlu0 %2293
        %2295 = vadd.xlane.f32.xlu0 %v2144
        %v2296 = vpop.xlane.xlu0 %2295
        %2297 = vadd.xlane.f32.xlu0 %v2145
        %v2298 = vpop.xlane.xlu0 %2297
        %2299 = vadd.xlane.f32.xlu0 %v2146
        %v2300 = vpop.xlane.xlu0 %2299
        %2301 = vadd.xlane.f32.xlu0 %v2147
        %v2302 = vpop.xlane.xlu0 %2301
        %2303 = vadd.xlane.f32.xlu0 %v2148
        %v2304 = vpop.xlane.xlu0 %2303
        %2305 = vadd.xlane.f32.xlu0 %v2149
        %v2306 = vpop.xlane.xlu0 %2305
        %2307 = vadd.xlane.f32.xlu0 %v2150
        %v2308 = vpop.xlane.xlu0 %2307
        %2309 = vadd.xlane.f32.xlu0 %v2151
        %v2310 = vpop.xlane.xlu0 %2309
        %2311 = vadd.xlane.f32.xlu0 %v2152
        %v2312 = vpop.xlane.xlu0 %2311
        %2313 = vadd.xlane.f32.xlu0 %v2153
        %v2314 = vpop.xlane.xlu0 %2313
        %2315 = vadd.xlane.f32.xlu0 %v2154
        %v2316 = vpop.xlane.xlu0 %2315
        %2317 = vadd.xlane.f32.xlu0 %v2155
        %v2318 = vpop.xlane.xlu0 %2317
        %2319 = vadd.xlane.f32.xlu0 %v2156
        %v2320 = vpop.xlane.xlu0 %2319
        %2321 = vadd.xlane.f32.xlu0 %v2157
        %v2322 = vpop.xlane.xlu0 %2321
        %2323 = vadd.xlane.f32.xlu0 %v2158
        %v2324 = vpop.xlane.xlu0 %2323
        %2325 = vadd.xlane.f32.xlu0 %v2159
        %v2326 = vpop.xlane.xlu0 %2325
        %2327 = vadd.xlane.f32.xlu0 %v2160
        %v2328 = vpop.xlane.xlu0 %2327
        %2329 = vadd.xlane.f32.xlu0 %v2161
        %v2330 = vpop.xlane.xlu0 %2329
        %2331 = vadd.xlane.f32.xlu0 %v2162
        %v2332 = vpop.xlane.xlu0 %2331
        %2333 = vadd.xlane.f32.xlu0 %v2163
        %v2334 = vpop.xlane.xlu0 %2333
        %2335 = vadd.xlane.f32.xlu0 %v2164
        %v2336 = vpop.xlane.xlu0 %2335
        %2337 = vadd.xlane.f32.xlu0 %v2165
        %v2338 = vpop.xlane.xlu0 %2337
        %2339 = vadd.xlane.f32.xlu0 %v2166
        %v2340 = vpop.xlane.xlu0 %2339
        %2341 = vadd.xlane.f32.xlu0 %v2167
        %v2342 = vpop.xlane.xlu0 %2341
        %2343 = vadd.xlane.f32.xlu0 %v2168
        %v2344 = vpop.xlane.xlu0 %2343
        %2345 = vadd.xlane.f32.xlu0 %v2169
        %v2346 = vpop.xlane.xlu0 %2345
        %2347 = vadd.xlane.f32.xlu0 %v2170
        %v2348 = vpop.xlane.xlu0 %2347
        %2349 = vadd.xlane.f32.xlu0 %v2171
        %v2350 = vpop.xlane.xlu0 %2349
        %2351 = vadd.xlane.f32.xlu0 %v2172
        %v2352 = vpop.xlane.xlu0 %2351
        %2353 = vadd.xlane.f32.xlu0 %v2173
        %v2354 = vpop.xlane.xlu0 %2353
        %2355 = vadd.xlane.f32.xlu0 %v2174
        %v2356 = vpop.xlane.xlu0 %2355
        %2357 = vadd.xlane.f32.xlu0 %v2175
        %v2358 = vpop.xlane.xlu0 %2357
        %2359 = vadd.xlane.f32.xlu0 %v2176
        %v2360 = vpop.xlane.xlu0 %2359
        %2361 = vadd.xlane.f32.xlu0 %v2177
        %v2362 = vpop.xlane.xlu0 %2361
        %2363 = vadd.xlane.f32.xlu0 %v2178
        %v2364 = vpop.xlane.xlu0 %2363
        %2365 = vadd.xlane.f32.xlu0 %v2179
        %v2366 = vpop.xlane.xlu0 %2365
        %2367 = vadd.xlane.f32.xlu0 %v2180
        %v2368 = vpop.xlane.xlu0 %2367
        %2369 = vadd.xlane.f32.xlu0 %v2181
        %v2370 = vpop.xlane.xlu0 %2369
        %2371 = vadd.xlane.f32.xlu0 %v2182
        %v2372 = vpop.xlane.xlu0 %2371
        %2373 = vadd.xlane.f32.xlu0 %v2183
        %v2374 = vpop.xlane.xlu0 %2373
        %2375 = vadd.xlane.f32.xlu0 %v2184
        %v2376 = vpop.xlane.xlu0 %2375
        %2377 = vadd.xlane.f32.xlu0 %v2185
        %v2378 = vpop.xlane.xlu0 %2377
        %2379 = vadd.xlane.f32.xlu0 %v2186
        %v2380 = vpop.xlane.xlu0 %2379
        %2381 = vadd.xlane.f32.xlu0 %v2187
        %v2382 = vpop.xlane.xlu0 %2381
        %2383 = vadd.xlane.f32.xlu0 %v2188
        %v2384 = vpop.xlane.xlu0 %2383
        %2385 = vadd.xlane.f32.xlu0 %v2189
        %v2386 = vpop.xlane.xlu0 %2385
        %2387 = vadd.xlane.f32.xlu0 %v2190
        %v2388 = vpop.xlane.xlu0 %2387
        %2389 = vadd.xlane.f32.xlu0 %v2191
        %v2390 = vpop.xlane.xlu0 %2389
        %2391 = vadd.xlane.f32.xlu0 %v2192
        %v2392 = vpop.xlane.xlu0 %2391
        %2393 = vadd.xlane.f32.xlu0 %v2193
        %v2394 = vpop.xlane.xlu0 %2393
        %2395 = vadd.xlane.f32.xlu0 %v2194
        %v2396 = vpop.xlane.xlu0 %2395
        %2397 = vadd.xlane.f32.xlu0 %v2195
        %v2398 = vpop.xlane.xlu0 %2397
        %2399 = vadd.xlane.f32.xlu0 %v2196
        %v2400 = vpop.xlane.xlu0 %2399
        %2401 = vadd.xlane.f32.xlu0 %v2197
        %v2402 = vpop.xlane.xlu0 %2401
        %2403 = vadd.xlane.f32.xlu0 %v2198
        %v2404 = vpop.xlane.xlu0 %2403
        %2405 = vadd.xlane.f32.xlu0 %v2199
        %v2406 = vpop.xlane.xlu0 %2405
        %2407 = vadd.xlane.f32.xlu0 %v2200
        %v2408 = vpop.xlane.xlu0 %2407
        %2409 = vadd.xlane.f32.xlu0 %v2201
        %v2410 = vpop.xlane.xlu0 %2409
        %2411 = vadd.xlane.f32.xlu0 %v2202
        %v2412 = vpop.xlane.xlu0 %2411
        %2413 = vadd.xlane.f32.xlu0 %v2203
        %v2414 = vpop.xlane.xlu0 %2413
        %2415 = vadd.xlane.f32.xlu0 %v2204
        %v2416 = vpop.xlane.xlu0 %2415
        %2417 = vadd.xlane.f32.xlu0 %v2205
        %v2418 = vpop.xlane.xlu0 %2417
        %2419 = vadd.xlane.f32.xlu0 %v2206
        %v2420 = vpop.xlane.xlu0 %2419
        %2421 = vadd.xlane.f32.xlu0 %v2207
        %v2422 = vpop.xlane.xlu0 %2421
        %2423 = vadd.xlane.f32.xlu0 %v2208
        %v2424 = vpop.xlane.xlu0 %2423
        %2425 = vadd.xlane.f32.xlu0 %v2209
        %v2426 = vpop.xlane.xlu0 %2425
        %2427 = vadd.xlane.f32.xlu0 %v2210
        %v2428 = vpop.xlane.xlu0 %2427
        %2429 = vadd.xlane.f32.xlu0 %v2211
        %v2430 = vpop.xlane.xlu0 %2429
        %2431 = vadd.xlane.f32.xlu0 %v2212
        %v2432 = vpop.xlane.xlu0 %2431
        %2433 = vadd.xlane.f32.xlu0 %v2213
        %v2434 = vpop.xlane.xlu0 %2433
        %2435 = vadd.xlane.f32.xlu0 %v2214
        %v2436 = vpop.xlane.xlu0 %2435
        %2437 = vadd.xlane.f32.xlu0 %v2215
        %v2438 = vpop.xlane.xlu0 %2437
        %2439 = vadd.xlane.f32.xlu0 %v2216
        %v2440 = vpop.xlane.xlu0 %2439
        %2441 = vadd.xlane.f32.xlu0 %v2217
        %v2442 = vpop.xlane.xlu0 %2441
        %2443 = vadd.xlane.f32.xlu0 %v2218
        %v2444 = vpop.xlane.xlu0 %2443
        %2445 = vadd.xlane.f32.xlu0 %v2219
        %v2446 = vpop.xlane.xlu0 %2445
        %2447 = vadd.xlane.f32.xlu0 %v2220
        %v2448 = vpop.xlane.xlu0 %2447
        %2449 = vadd.xlane.f32.xlu0 %v2221
        %v2450 = vpop.xlane.xlu0 %2449
        %2451 = vadd.xlane.f32.xlu0 %v2222
        %v2452 = vpop.xlane.xlu0 %2451
        %2453 = vadd.xlane.f32.xlu0 %v2223
        %v2454 = vpop.xlane.xlu0 %2453
        %2455 = vadd.xlane.f32.xlu0 %v2224
        %v2456 = vpop.xlane.xlu0 %2455
        %2457 = vadd.xlane.f32.xlu0 %v2225
        %v2458 = vpop.xlane.xlu0 %2457
        %2459 = vadd.xlane.f32.xlu0 %v2226
        %v2460 = vpop.xlane.xlu0 %2459
        %2461 = vadd.xlane.f32.xlu0 %v2227
        %v2462 = vpop.xlane.xlu0 %2461
        %2463 = vadd.xlane.f32.xlu0 %v2228
        %v2464 = vpop.xlane.xlu0 %2463
        %2465 = vadd.xlane.f32.xlu0 %v2229
        %v2466 = vpop.xlane.xlu0 %2465
        %2467 = vadd.xlane.f32.xlu0 %v2230
        %v2468 = vpop.xlane.xlu0 %2467
        %2469 = vadd.xlane.f32.xlu0 %v2231
        %v2470 = vpop.xlane.xlu0 %2469
        %2471 = vadd.xlane.f32.xlu0 %v2232
        %v2472 = vpop.xlane.xlu0 %2471
        %2473 = vadd.xlane.f32.xlu0 %v2233
        %v2474 = vpop.xlane.xlu0 %2473
        %2475 = vadd.xlane.f32.xlu0 %v2234
        %v2476 = vpop.xlane.xlu0 %2475
        %2477 = vadd.xlane.f32.xlu0 %v2235
        %v2478 = vpop.xlane.xlu0 %2477
        %2479 = vadd.xlane.f32.xlu0 %v2236
        %v2480 = vpop.xlane.xlu0 %2479
        %2481 = vadd.xlane.f32.xlu0 %v2237
        %v2482 = vpop.xlane.xlu0 %2481
        %2483 = vadd.xlane.f32.xlu0 %v2238
        %v2484 = vpop.xlane.xlu0 %2483
        %2485 = vadd.xlane.f32.xlu0 %v2239
        %v2486 = vpop.xlane.xlu0 %2485
        %2487 = vadd.xlane.f32.xlu0 %v2240
        %v2488 = vpop.xlane.xlu0 %2487
        %2489 = vadd.xlane.f32.xlu0 %v2241
        %v2490 = vpop.xlane.xlu0 %2489
        %2491 = vadd.xlane.f32.xlu0 %v2242
        %v2492 = vpop.xlane.xlu0 %2491
        %2493 = vadd.xlane.f32.xlu0 %v2243
        %v2494 = vpop.xlane.xlu0 %2493
        %2495 = vadd.xlane.f32.xlu0 %v2244
        %v2496 = vpop.xlane.xlu0 %2495
        %2497 = vadd.xlane.f32.xlu0 %v2245
        %v2498 = vpop.xlane.xlu0 %2497
        %2499 = vadd.xlane.f32.xlu0 %v2246
        %v2500 = vpop.xlane.xlu0 %2499
        %2501 = vadd.xlane.f32.xlu0 %v2247
        %v2502 = vpop.xlane.xlu0 %2501
        %2503 = vadd.xlane.f32.xlu0 %v2248
        %v2504 = vpop.xlane.xlu0 %2503
        %v2633 = vperm.slane %v2250, %v476
        %v2634 = vperm.slane %v2252, %v1400
        %v2635 = vsel %vm1402, %v2634, %v2633
        %v2636 = vperm.slane %v2254, %v1404
        %v2637 = vsel %vm1406, %v2636, %v2635
        %v2638 = vperm.slane %v2256, %v1408
        %v2639 = vsel %vm1410, %v2638, %v2637
        %v2640 = vperm.slane %v2258, %v1412
        %v2641 = vsel %vm1414, %v2640, %v2639
        %v2642 = vperm.slane %v2260, %v1416
        %v2643 = vsel %vm1418, %v2642, %v2641
        %v2644 = vperm.slane %v2262, %v1420
        %v2645 = vsel %vm1422, %v2644, %v2643
        %v2646 = vperm.slane %v2264, %v1424
        %v2647 = vsel %vm1426, %v2646, %v2645
        %v2648 = vperm.slane %v2266, %v1428
        %v2649 = vsel %vm1430, %v2648, %v2647
        %v2650 = vperm.slane %v2268, %v1432
        %v2651 = vsel %vm1434, %v2650, %v2649
        %v2652 = vperm.slane %v2270, %v1436
        %v2653 = vsel %vm1438, %v2652, %v2651
        %v2654 = vperm.slane %v2272, %v1440
        %v2655 = vsel %vm1442, %v2654, %v2653
        %v2656 = vperm.slane %v2274, %v1444
        %v2657 = vsel %vm1446, %v2656, %v2655
        %v2658 = vperm.slane %v2276, %v1448
        %v2659 = vsel %vm1450, %v2658, %v2657
        %v2660 = vperm.slane %v2278, %v1452
        %v2661 = vsel %vm1454, %v2660, %v2659
        %v2662 = vperm.slane %v2280, %v1456
        %v2663 = vsel %vm1458, %v2662, %v2661
        %v2664 = vperm.slane %v2282, %v476
        %v2665 = vperm.slane %v2284, %v1400
        %v2666 = vsel %vm1402, %v2665, %v2664
        %v2667 = vperm.slane %v2286, %v1404
        %v2668 = vsel %vm1406, %v2667, %v2666
        %v2669 = vperm.slane %v2288, %v1408
        %v2670 = vsel %vm1410, %v2669, %v2668
        %v2671 = vperm.slane %v2290, %v1412
        %v2672 = vsel %vm1414, %v2671, %v2670
        %v2673 = vperm.slane %v2292, %v1416
        %v2674 = vsel %vm1418, %v2673, %v2672
        %v2675 = vperm.slane %v2294, %v1420
        %v2676 = vsel %vm1422, %v2675, %v2674
        %v2677 = vperm.slane %v2296, %v1424
        %v2678 = vsel %vm1426, %v2677, %v2676
        %v2679 = vperm.slane %v2298, %v1428
        %v2680 = vsel %vm1430, %v2679, %v2678
        %v2681 = vperm.slane %v2300, %v1432
        %v2682 = vsel %vm1434, %v2681, %v2680
        %v2683 = vperm.slane %v2302, %v1436
        %v2684 = vsel %vm1438, %v2683, %v2682
        %v2685 = vperm.slane %v2304, %v1440
        %v2686 = vsel %vm1442, %v2685, %v2684
        %v2687 = vperm.slane %v2306, %v1444
        %v2688 = vsel %vm1446, %v2687, %v2686
        %v2689 = vperm.slane %v2308, %v1448
        %v2690 = vsel %vm1450, %v2689, %v2688
        %v2691 = vperm.slane %v2310, %v1452
        %v2692 = vsel %vm1454, %v2691, %v2690
        %v2693 = vperm.slane %v2312, %v1456
        %v2694 = vsel %vm1458, %v2693, %v2692
        %v2695 = vperm.slane %v2314, %v476
        %v2696 = vperm.slane %v2316, %v1400
        %v2697 = vsel %vm1402, %v2696, %v2695
        %v2698 = vperm.slane %v2318, %v1404
        %v2699 = vsel %vm1406, %v2698, %v2697
        %v2700 = vperm.slane %v2320, %v1408
        %v2701 = vsel %vm1410, %v2700, %v2699
        %v2702 = vperm.slane %v2322, %v1412
        %v2703 = vsel %vm1414, %v2702, %v2701
        %v2704 = vperm.slane %v2324, %v1416
        %v2705 = vsel %vm1418, %v2704, %v2703
        %v2706 = vperm.slane %v2326, %v1420
        %v2707 = vsel %vm1422, %v2706, %v2705
        %v2708 = vperm.slane %v2328, %v1424
        %v2709 = vsel %vm1426, %v2708, %v2707
        %v2710 = vperm.slane %v2330, %v1428
        %v2711 = vsel %vm1430, %v2710, %v2709
        %v2712 = vperm.slane %v2332, %v1432
        %v2713 = vsel %vm1434, %v2712, %v2711
        %v2714 = vperm.slane %v2334, %v1436
        %v2715 = vsel %vm1438, %v2714, %v2713
        %v2716 = vperm.slane %v2336, %v1440
        %v2717 = vsel %vm1442, %v2716, %v2715
        %v2718 = vperm.slane %v2338, %v1444
        %v2719 = vsel %vm1446, %v2718, %v2717
        %v2720 = vperm.slane %v2340, %v1448
        %v2721 = vsel %vm1450, %v2720, %v2719
        %v2722 = vperm.slane %v2342, %v1452
        %v2723 = vsel %vm1454, %v2722, %v2721
        %v2724 = vperm.slane %v2344, %v1456
        %v2725 = vsel %vm1458, %v2724, %v2723
        %v2726 = vperm.slane %v2346, %v476
        %v2727 = vperm.slane %v2348, %v1400
        %v2728 = vsel %vm1402, %v2727, %v2726
        %v2729 = vperm.slane %v2350, %v1404
        %v2730 = vsel %vm1406, %v2729, %v2728
        %v2731 = vperm.slane %v2352, %v1408
        %v2732 = vsel %vm1410, %v2731, %v2730
        %v2733 = vperm.slane %v2354, %v1412
        %v2734 = vsel %vm1414, %v2733, %v2732
        %v2735 = vperm.slane %v2356, %v1416
        %v2736 = vsel %vm1418, %v2735, %v2734
        %v2737 = vperm.slane %v2358, %v1420
        %v2738 = vsel %vm1422, %v2737, %v2736
        %v2739 = vperm.slane %v2360, %v1424
        %v2740 = vsel %vm1426, %v2739, %v2738
        %v2741 = vperm.slane %v2362, %v1428
        %v2742 = vsel %vm1430, %v2741, %v2740
        %v2743 = vperm.slane %v2364, %v1432
        %v2744 = vsel %vm1434, %v2743, %v2742
        %v2745 = vperm.slane %v2366, %v1436
        %v2746 = vsel %vm1438, %v2745, %v2744
        %v2747 = vperm.slane %v2368, %v1440
        %v2748 = vsel %vm1442, %v2747, %v2746
        %v2749 = vperm.slane %v2370, %v1444
        %v2750 = vsel %vm1446, %v2749, %v2748
        %v2751 = vperm.slane %v2372, %v1448
        %v2752 = vsel %vm1450, %v2751, %v2750
        %v2753 = vperm.slane %v2374, %v1452
        %v2754 = vsel %vm1454, %v2753, %v2752
        %v2755 = vperm.slane %v2376, %v1456
        %v2756 = vsel %vm1458, %v2755, %v2754
        %v2757 = vperm.slane %v2378, %v476
        %v2758 = vperm.slane %v2380, %v1400
        %v2759 = vsel %vm1402, %v2758, %v2757
        %v2760 = vperm.slane %v2382, %v1404
        %v2761 = vsel %vm1406, %v2760, %v2759
        %v2762 = vperm.slane %v2384, %v1408
        %v2763 = vsel %vm1410, %v2762, %v2761
        %v2764 = vperm.slane %v2386, %v1412
        %v2765 = vsel %vm1414, %v2764, %v2763
        %v2766 = vperm.slane %v2388, %v1416
        %v2767 = vsel %vm1418, %v2766, %v2765
        %v2768 = vperm.slane %v2390, %v1420
        %v2769 = vsel %vm1422, %v2768, %v2767
        %v2770 = vperm.slane %v2392, %v1424
        %v2771 = vsel %vm1426, %v2770, %v2769
        %v2772 = vperm.slane %v2394, %v1428
        %v2773 = vsel %vm1430, %v2772, %v2771
        %v2774 = vperm.slane %v2396, %v1432
        %v2775 = vsel %vm1434, %v2774, %v2773
        %v2776 = vperm.slane %v2398, %v1436
        %v2777 = vsel %vm1438, %v2776, %v2775
        %v2778 = vperm.slane %v2400, %v1440
        %v2779 = vsel %vm1442, %v2778, %v2777
        %v2780 = vperm.slane %v2402, %v1444
        %v2781 = vsel %vm1446, %v2780, %v2779
        %v2782 = vperm.slane %v2404, %v1448
        %v2783 = vsel %vm1450, %v2782, %v2781
        %v2784 = vperm.slane %v2406, %v1452
        %v2785 = vsel %vm1454, %v2784, %v2783
        %v2786 = vperm.slane %v2408, %v1456
        %v2787 = vsel %vm1458, %v2786, %v2785
        %v2788 = vperm.slane %v2410, %v476
        %v2789 = vperm.slane %v2412, %v1400
        %v2790 = vsel %vm1402, %v2789, %v2788
        %v2791 = vperm.slane %v2414, %v1404
        %v2792 = vsel %vm1406, %v2791, %v2790
        %v2793 = vperm.slane %v2416, %v1408
        %v2794 = vsel %vm1410, %v2793, %v2792
        %v2795 = vperm.slane %v2418, %v1412
        %v2796 = vsel %vm1414, %v2795, %v2794
        %v2797 = vperm.slane %v2420, %v1416
        %v2798 = vsel %vm1418, %v2797, %v2796
        %v2799 = vperm.slane %v2422, %v1420
        %v2800 = vsel %vm1422, %v2799, %v2798
        %v2801 = vperm.slane %v2424, %v1424
        %v2802 = vsel %vm1426, %v2801, %v2800
        %v2803 = vperm.slane %v2426, %v1428
        %v2804 = vsel %vm1430, %v2803, %v2802
        %v2805 = vperm.slane %v2428, %v1432
        %v2806 = vsel %vm1434, %v2805, %v2804
        %v2807 = vperm.slane %v2430, %v1436
        %v2808 = vsel %vm1438, %v2807, %v2806
        %v2809 = vperm.slane %v2432, %v1440
        %v2810 = vsel %vm1442, %v2809, %v2808
        %v2811 = vperm.slane %v2434, %v1444
        %v2812 = vsel %vm1446, %v2811, %v2810
        %v2813 = vperm.slane %v2436, %v1448
        %v2814 = vsel %vm1450, %v2813, %v2812
        %v2815 = vperm.slane %v2438, %v1452
        %v2816 = vsel %vm1454, %v2815, %v2814
        %v2817 = vperm.slane %v2440, %v1456
        %v2818 = vsel %vm1458, %v2817, %v2816
        %v2819 = vperm.slane %v2442, %v476
        %v2820 = vperm.slane %v2444, %v1400
        %v2821 = vsel %vm1402, %v2820, %v2819
        %v2822 = vperm.slane %v2446, %v1404
        %v2823 = vsel %vm1406, %v2822, %v2821
        %v2824 = vperm.slane %v2448, %v1408
        %v2825 = vsel %vm1410, %v2824, %v2823
        %v2826 = vperm.slane %v2450, %v1412
        %v2827 = vsel %vm1414, %v2826, %v2825
        %v2828 = vperm.slane %v2452, %v1416
        %v2829 = vsel %vm1418, %v2828, %v2827
        %v2830 = vperm.slane %v2454, %v1420
        %v2831 = vsel %vm1422, %v2830, %v2829
        %v2832 = vperm.slane %v2456, %v1424
        %v2833 = vsel %vm1426, %v2832, %v2831
        %v2834 = vperm.slane %v2458, %v1428
        %v2835 = vsel %vm1430, %v2834, %v2833
        %v2836 = vperm.slane %v2460, %v1432
        %v2837 = vsel %vm1434, %v2836, %v2835
        %v2838 = vperm.slane %v2462, %v1436
        %v2839 = vsel %vm1438, %v2838, %v2837
        %v2840 = vperm.slane %v2464, %v1440
        %v2841 = vsel %vm1442, %v2840, %v2839
        %v2842 = vperm.slane %v2466, %v1444
        %v2843 = vsel %vm1446, %v2842, %v2841
        %v2844 = vperm.slane %v2468, %v1448
        %v2845 = vsel %vm1450, %v2844, %v2843
        %v2846 = vperm.slane %v2470, %v1452
        %v2847 = vsel %vm1454, %v2846, %v2845
        %v2848 = vperm.slane %v2472, %v1456
        %v2849 = vsel %vm1458, %v2848, %v2847
        %v2850 = vperm.slane %v2474, %v476
        %v2851 = vperm.slane %v2476, %v1400
        %v2852 = vsel %vm1402, %v2851, %v2850
        %v2853 = vperm.slane %v2478, %v1404
        %v2854 = vsel %vm1406, %v2853, %v2852
        %v2855 = vperm.slane %v2480, %v1408
        %v2856 = vsel %vm1410, %v2855, %v2854
        %v2857 = vperm.slane %v2482, %v1412
        %v2858 = vsel %vm1414, %v2857, %v2856
        %v2859 = vperm.slane %v2484, %v1416
        %v2860 = vsel %vm1418, %v2859, %v2858
        %v2861 = vperm.slane %v2486, %v1420
        %v2862 = vsel %vm1422, %v2861, %v2860
        %v2863 = vperm.slane %v2488, %v1424
        %v2864 = vsel %vm1426, %v2863, %v2862
        %v2865 = vperm.slane %v2490, %v1428
        %v2866 = vsel %vm1430, %v2865, %v2864
        %v2867 = vperm.slane %v2492, %v1432
        %v2868 = vsel %vm1434, %v2867, %v2866
        %v2869 = vperm.slane %v2494, %v1436
        %v2870 = vsel %vm1438, %v2869, %v2868
        %v2871 = vperm.slane %v2496, %v1440
        %v2872 = vsel %vm1442, %v2871, %v2870
        %v2873 = vperm.slane %v2498, %v1444
        %v2874 = vsel %vm1446, %v2873, %v2872
        %v2875 = vperm.slane %v2500, %v1448
        %v2876 = vsel %vm1450, %v2875, %v2874
        %v2877 = vperm.slane %v2502, %v1452
        %v2878 = vsel %vm1454, %v2877, %v2876
        %v2879 = vperm.slane %v2504, %v1456
        %v2880 = vsel %vm1458, %v2879, %v2878
        %v2881 = vsel %vm1677, %v2694, %v2663
        %v2882 = vsel %vm1679, %v2725, %v2881
        %v2883 = vsel %vm1681, %v2756, %v2882
        %v2884 = vsel %vm1683, %v2787, %v2883
        %v2885 = vsel %vm1685, %v2818, %v2884
        %v2886 = vsel %vm1687, %v2849, %v2885
        %v2887 = vsel %vm1689, %v2880, %v2886
        %2889 = vst [vmem:[#allocation2] sm:$0xff] %v2887
        %v2890 = vstv %s1758
        %vm2891 = vcmp.lt.s32.totalorder %v476, %v2890
        %v2892 = vld [vmem:[#allocation2] sm:$0xff]
        %v2893 = vsel %vm2891, %v2892, -1e+30
        %2894 = vmax.xlane.f32.xlu0 %v2893
        %v2895 = vpop.xlane.xlu0 %2894
        %v2896 = vsub.f32 %v2893, %v2895
        %v2897 = vmul.f32 %v2896, 1.442695
        %v2898 = vpow.pop %v2897
        %2899 = vadd.xlane.f32.xlu0 %v2898
        %v2900 = vpop.xlane.xlu0 %2899
        %v2901 = vrcp.pop %v2900
        %v2902 = vmul.f32 %v2900, %v2901
        %v2903 = vsub.f32 1.0, %v2902
        %v2904 = vmul.f32 %v2901, %v2903
        %v2905 = vadd.f32 %v2901, %v2904
        %vm2906 = vweird.f32 %v2900
        %vm2907 = vweird.f32 %v2901
        %vm2908 = vmor %vm2906, %vm2907
        %v2909 = vsel %vm2908, %v2901, %v2905
        %v2910 = vand.u32 2147483647, %v2900
        %vm2911 = vcmp.eq.f32.partialorder %v2910, 8.507059e+37
        %v2912 = vand.u32 %v2900, 2147483648
        %v2913 = vor.u32 1.1754944e-38, %v2912
        %v2914 = vsel %vm2911, %v2913, %v2909
        %v2915 = vmul.f32 %v2898, %v2914
        %2916 = vst [vmem:[%s453 + $0x8] sm:$0xff] %v2915
        %v2917 = vld [vmem:[%s390 + $0x80] sm:$0xff]
        %v2918 = vld [vmem:[%s390 + $0x88] sm:$0xff]
        %v2919 = vld [vmem:[%s390 + $0x90] sm:$0xff]
        %v2920 = vld [vmem:[%s390 + $0x98] sm:$0xff]
        %v2921 = vld [vmem:[%s390 + $0xa0] sm:$0xff]
        %v2922 = vld [vmem:[%s390 + $0xa8] sm:$0xff]
        %v2923 = vld [vmem:[%s390 + $0xb0] sm:$0xff]
        %v2924 = vld [vmem:[%s390 + $0xb8] sm:$0xff]
        %v2925 = vld [vmem:[%s390 + $0xc0] sm:$0xff]
        %v2926 = vld [vmem:[%s390 + $0xc8] sm:$0xff]
        %v2927 = vld [vmem:[%s390 + $0xd0] sm:$0xff]
        %v2928 = vld [vmem:[%s390 + $0xd8] sm:$0xff]
        %v2929 = vld [vmem:[%s390 + $0xe0] sm:$0xff]
        %v2930 = vld [vmem:[%s390 + $0xe8] sm:$0xff]
        %v2931 = vld [vmem:[%s390 + $0xf0] sm:$0xff]
        %v2932 = vld [vmem:[%s390 + $0xf8] sm:$0xff]
        %2933 = vmatpush.msra.mxu0 %v2932
        %2934 = vmatpush.msra.mxu0 %v2931
        %2935 = vmatpush.msra.mxu0 %v2930
        %2936 = vmatpush.msra.mxu0 %v2929
        %2937 = vmatpush.msra.mxu0 %v2928
        %2938 = vmatpush.msra.mxu0 %v2927
        %2939 = vmatpush.msra.mxu0 %v2926
        %2940 = vmatpush.msra.mxu0 %v2925
        %2941 = vmatpush.msra.mxu0 %v2924
        %2942 = vmatpush.msra.mxu0 %v2923
        %2943 = vmatpush.msra.mxu0 %v2922
        %2944 = vmatpush.msra.mxu0 %v2921
        %2945 = vmatpush.msra.mxu0 %v2920
        %2946 = vmatpush.msra.mxu0 %v2919
        %2947 = vmatpush.msra.mxu0 %v2918
        %2948 = vmatpush.msra.mxu0 %v2917
        %2949 = vmatmul.f32.gmra.mxu0 %v2915
        %v2950 = vpop.f32.mrf.mxu0
        %v2951 = vadd.f32 0.0, %v2950
        %2952 = vdwg.mxu0
        %2953 = vst [vmem:[#allocation3 + $0x8] sm:$0xff] %v2951
        %v2954 = vld [vmem:[#allocation3] sm:$0xff]
        %v2955 = vld [vmem:[#allocation3 + $0x8] sm:$0xff]
        %v2956 = vld [vmem:[#allocation15] sm:$0xff]
        %v2957 = vld [vmem:[#allocation15 + $0x8] sm:$0xff]
        %v2958 = vld [vmem:[#allocation15 + $0x10] sm:$0xff]
        %v2959 = vld [vmem:[#allocation15 + $0x18] sm:$0xff]
        %v2960 = vld [vmem:[#allocation15 + $0x20] sm:$0xff]
        %v2961 = vld [vmem:[#allocation15 + $0x28] sm:$0xff]
        %v2962 = vld [vmem:[#allocation15 + $0x30] sm:$0xff]
        %v2963 = vld [vmem:[#allocation15 + $0x38] sm:$0xff]
        %v2964 = vld [vmem:[#allocation15 + $0x40] sm:$0xff]
        %v2965 = vld [vmem:[#allocation15 + $0x48] sm:$0xff]
        %v2966 = vld [vmem:[#allocation15 + $0x50] sm:$0xff]
        %v2967 = vld [vmem:[#allocation15 + $0x58] sm:$0xff]
        %v2968 = vld [vmem:[#allocation15 + $0x60] sm:$0xff]
        %v2969 = vld [vmem:[#allocation15 + $0x68] sm:$0xff]
        %v2970 = vld [vmem:[#allocation15 + $0x70] sm:$0xff]
        %v2971 = vld [vmem:[#allocation15 + $0x78] sm:$0xff]
        %v2972 = vld [vmem:[%s380] sm:$0xff]
        %v2973 = vld [vmem:[%s380 + $0x8] sm:$0xff]
        %v2974 = vld [vmem:[#allocation16] sm:$0xff]
        %v2975 = vld [vmem:[#allocation16 + $0x8] sm:$0xff]
        %v2976 = vld [vmem:[#allocation16 + $0x10] sm:$0xff]
        %v2977 = vld [vmem:[#allocation16 + $0x18] sm:$0xff]
        %v2978 = vld [vmem:[#allocation16 + $0x20] sm:$0xff]
        %v2979 = vld [vmem:[#allocation16 + $0x28] sm:$0xff]
        %v2980 = vld [vmem:[#allocation16 + $0x30] sm:$0xff]
        %v2981 = vld [vmem:[#allocation16 + $0x38] sm:$0xff]
        %v2982 = vld [vmem:[#allocation16 + $0x40] sm:$0xff]
        %v2983 = vld [vmem:[#allocation16 + $0x48] sm:$0xff]
        %v2984 = vld [vmem:[#allocation16 + $0x50] sm:$0xff]
        %v2985 = vld [vmem:[#allocation16 + $0x58] sm:$0xff]
        %v2986 = vld [vmem:[#allocation16 + $0x60] sm:$0xff]
        %v2987 = vld [vmem:[#allocation16 + $0x68] sm:$0xff]
        %v2988 = vld [vmem:[#allocation16 + $0x70] sm:$0xff]
        %v2989 = vld [vmem:[#allocation16 + $0x78] sm:$0xff]
        %2990 = vmatpush.msra.mxu0 %v2989
        %2991 = vmatpush.msra.mxu0 %v2988
        %2992 = vmatpush.msra.mxu0 %v2987
        %2993 = vmatpush.msra.mxu0 %v2986
        %2994 = vmatpush.msra.mxu0 %v2985
        %2995 = vmatpush.msra.mxu0 %v2984
        %2996 = vmatpush.msra.mxu0 %v2983
        %2997 = vmatpush.msra.mxu0 %v2982
        %2998 = vmatpush.msra.mxu0 %v2981
        %2999 = vmatpush.msra.mxu0 %v2980
        %3000 = vmatpush.msra.mxu0 %v2979
        %3001 = vmatpush.msra.mxu0 %v2978
        %3002 = vmatpush.msra.mxu0 %v2977
        %3003 = vmatpush.msra.mxu0 %v2976
        %3004 = vmatpush.msra.mxu0 %v2975
        %3005 = vmatpush.msra.mxu0 %v2974
        %3006 = vmatmul.f32.gmra.mxu0 %v2972
        %v3007 = vpop.f32.mrf.mxu0
        %v3008 = vadd.f32 0.0, %v3007
        %3009 = vmatmul.f32.gmra.mxu0 %v2973
        %v3010 = vpop.f32.mrf.mxu0
        %v3011 = vadd.f32 0.0, %v3010
        %3012 = vdwg.mxu0
        %3013 = vmatpush.msra.mxu0 %v2971
        %3014 = vmatpush.msra.mxu0 %v2970
        %3015 = vmatpush.msra.mxu0 %v2969
        %3016 = vmatpush.msra.mxu0 %v2968
        %3017 = vmatpush.msra.mxu0 %v2967
        %3018 = vmatpush.msra.mxu0 %v2966
        %3019 = vmatpush.msra.mxu0 %v2965
        %3020 = vmatpush.msra.mxu0 %v2964
        %3021 = vmatpush.msra.mxu0 %v2963
        %3022 = vmatpush.msra.mxu0 %v2962
        %3023 = vmatpush.msra.mxu0 %v2961
        %3024 = vmatpush.msra.mxu0 %v2960
        %3025 = vmatpush.msra.mxu0 %v2959
        %3026 = vmatpush.msra.mxu0 %v2958
        %3027 = vmatpush.msra.mxu0 %v2957
        %3028 = vmatpush.msra.mxu0 %v2956
        %3029 = vmatmul.f32.gmra.mxu0 %v2954
        %v3030 = vpop.f32.mrf.mxu0
        %v3031 = vadd.f32 %v3008, %v3030
        %3032 = vmatmul.f32.gmra.mxu0 %v2955
        %v3033 = vpop.f32.mrf.mxu0
        %v3034 = vadd.f32 %v3011, %v3033
        %3035 = vdwg.mxu0
        %v3036 = vtanh.pop %v3031
        %v3037 = vtanh.pop %v3034
        %3038 = vst [vmem:[%s446] sm:$0xff] %v3036
        %3039 = vst [vmem:[%s446 + $0x8] sm:$0xff] %v3037
        %s3040 = sand.u32 %s208, 1
        %s3041 = scalar_lea.sflag [#allocation9], %s3040
        %s3042 = sand.u32 %s208, 1
        %s3043 = smul.addr %s3042, 16
        %s3044 = scalar_lea.vmem [#allocation18], %s3043
        %s3045 = sand.u32 %s234, 1
        %s3046 = scalar_lea.sflag [#allocation20], %s3045
        %s3047 = sand.u32 %s234, 1
        %s3048 = smul.addr %s3047, 16
        %s3049 = scalar_lea.vmem [#allocation19], %s3048
        // Predicated region
        $region73: #{tpu_custom_call.1} parent=47 // pred_check
          %p3050 = pneg %p218
        $region74: #{tpu_custom_call.1} parent=47 // pred_check_branch
          %3052 = sbr.rel (%p3050) target = $region76
        $region75: #{tpu_custom_call.1} parent=47 // pred_region
          %s3053 = smul.u32 2, %s43
          %3055 = vsyncadd %s3041, 0
          %s3056 = smul.addr %s3053, 8
          %s3057 = scalar_lea.hbm %s8, %s3056
          %s3058 = sshll.u32 %s3044, 4
          %s3059 = int_to_ptr.vmem [resolvable:$true] %s3058
          %s3060 = sshll.u32 %s3057, 4
          %s3061 = int_to_ptr.hbm [resolvable:$true] %s3060
          %3066 = dma.vmem_to_hbm [thread:$0]  %s3059, 256, %s3061, %s3041, 128, 128, 8
        $region76: #{tpu_custom_call.1} parent=47 // pred_fallthru
          _
        // Predicated region
        $region77: #{tpu_custom_call.1} parent=47 // pred_check
          %p3067 = pneg %p244
        $region78: #{tpu_custom_call.1} parent=47 // pred_check_branch
          %3069 = sbr.rel (%p3067) target = $region80
        $region79: #{tpu_custom_call.1} parent=47 // pred_region
          %s3070 = smul.u32 2, %s43
          %3072 = vsyncadd %s3046, 0
          %s3073 = smul.addr %s3070, 8
          %s3074 = scalar_lea.hbm %s9, %s3073
          %s3075 = sshll.u32 %s3049, 4
          %s3076 = int_to_ptr.vmem [resolvable:$true] %s3075
          %s3077 = sshll.u32 %s3074, 4
          %s3078 = int_to_ptr.hbm [resolvable:$true] %s3077
          %3083 = dma.vmem_to_hbm [thread:$0]  %s3076, 256, %s3078, %s3046, 128, 128, 8
        $region80: #{tpu_custom_call.1} parent=47 // pred_fallthru
          _
      $region48: #{tpu_custom_call.1} parent=5 // pred_fallthru
        _
      %p3084 = scmp.le.s32.totalorder 2, %s38
      // Predicated region
      $region81: #{tpu_custom_call.1} parent=5 // pred_check
        %p3085 = pneg %p3084
      $region82: #{tpu_custom_call.1} parent=5 // pred_check_branch
        %3087 = sbr.rel (%p3085) target = $region84
      $region83: #{tpu_custom_call.1} parent=5 // pred_region
        %s3088 = ssub.s32 %s38, 2
        // Predicated region
        $region85: #{tpu_custom_call.1} parent=83 // pred_check
          %p3089 = pneg %p224
        $region86: #{tpu_custom_call.1} parent=83 // pred_check_branch
          %3091 = sbr.rel (%p3089) target = $region88
        $region87: #{tpu_custom_call.1} parent=83 // pred_region
          %s3092 = sand.u32 %s209, 1
          %s3093 = scalar_lea.sflag [#allocation9], %s3092
          %s3094 = sand.u32 %s209, 1
          %s3095 = smul.addr %s3094, 16
          %s3096 = scalar_lea.vmem [#allocation18], %s3095
          %3098 = dma.done %s3093, 256
        $region88: #{tpu_custom_call.1} parent=83 // pred_fallthru
          _
        // Predicated region
        $region89: #{tpu_custom_call.1} parent=83 // pred_check
          %p3099 = pneg %p250
        $region90: #{tpu_custom_call.1} parent=83 // pred_check_branch
          %3101 = sbr.rel (%p3099) target = $region92
        $region91: #{tpu_custom_call.1} parent=83 // pred_region
          %s3102 = sand.u32 %s235, 1
          %s3103 = scalar_lea.sflag [#allocation20], %s3102
          %s3104 = sand.u32 %s235, 1
          %s3105 = smul.addr %s3104, 16
          %s3106 = scalar_lea.vmem [#allocation19], %s3105
          %3108 = dma.done %s3103, 256
        $region92: #{tpu_custom_call.1} parent=83 // pred_fallthru
          _
      $region84: #{tpu_custom_call.1} parent=5 // pred_fallthru
        _
    $region6: #{tpu_custom_call.1} parent=1 // loop_footer
      %s42 = sadd.s32 1, %s38
    $region7: #{tpu_custom_call.1} parent=1 // loop_footer_branch
      %37 = sbr.rel target = $region3
    $region8: #{tpu_custom_call.1} parent=1 // loop_exit
      _
    %3109 = vsyncpa [#allocation8], 1
    %s3110 = scalar_lea.sflag [#allocation8], 1
    %3111 = vsyncpa %s3110, 1
    %3112 = vsyncpa [#allocation11], 1
    %s3113 = scalar_lea.sflag [#allocation11], 1
    %3114 = vsyncpa %s3113, 1
    %3115 = vsyncpa [#allocation14], 1
    %3116 = vsyncpa [#allocation17], 1
    %3117 = vsyncpa [#allocation9], 1
    %s3118 = scalar_lea.sflag [#allocation9], 1
    %3119 = vsyncpa %s3118, 1
    %3120 = vsyncpa [#allocation20], 1
    %s3121 = scalar_lea.sflag [#allocation20], 1
    %3122 = vsyncpa %s3121, 1

</llo_original>
